<compile_context>
chip_gen: v7x
topology: tpu7x:2x2x1
jax: 0.10.0
libtpu: 0.0.40
codegen_flags: <defaults>
</compile_context>

<pallas_src>
import jax
import jax.numpy as jnp
import numpy as np
from jax.experimental import pallas as pl
from jax.experimental.pallas import tpu as pltpu

D_IN = 3          # point coordinate dim
D_IN_PAD = 8      # padded coordinate width (lane 3 carries the constant 1.0)
D_FILTER = 256    # hidden width
N_LAYERS = 8      # number of hidden Linear layers
SKIP = 4          # concat x_input after hidden layer index 4
D_OUT = 4         # rgb + sigma
D_OUT_PAD = 128   # lane-dense padded output width


def nerf_kernel(x_ref, wfirst_ref, wmid_ref, b_ref, wout_ref, bout_ref, o_ref):
    """One (tile_n, D_IN_PAD) block of points -> (tile_n, D_OUT_PAD) outputs."""
    xin = x_ref[...].astype(jnp.float32)                                  # (T, 8)

    # Merged first matmul: [layer-0 W | skip-layer x_input W], b0 folded via
    # the 1.0 in lane 3 of x_pad. Single K=8 MXU push.
    first = jnp.dot(xin, wfirst_ref[...], preferred_element_type=jnp.float32)  # (T, 512)
    h = jnp.maximum(first[:, :D_FILTER], 0.0)          # layer-0 activation
    skip_term = first[:, D_FILTER:]                    # x_input @ W_skip (no bias)

    # Hidden layers 1..7 (ModuleList indices). bf16 operands, f32 accumulate,
    # bias/ReLU in f32 (v5e VPU has no bf16).
    for j in range(N_LAYERS - 1):                      # j = 0..6 -> layer j+1
        z = jnp.dot(h.astype(jnp.bfloat16), wmid_ref[j],
                    preferred_element_type=jnp.float32)
        if j == SKIP:                                  # layer 5: + x_input part
            z = z + skip_term
        h = jnp.maximum(z + b_ref[pl.ds(j, 1), :], 0.0)

    # Output head: Linear(256, 4), zero-padded to 128 lanes (lane-dense store).
    o_ref[...] = (jnp.dot(h.astype(jnp.bfloat16), wout_ref[...],
                          preferred_element_type=jnp.float32)
                  + bout_ref[...]).astype(o_ref.dtype)


def _choose_tile(n):
    """Largest row tile that still leaves >= 2 grid steps (megacore friendly)."""
    for t in (1024, 512, 256, 128):
        if n >= 2 * t:
            return t
    return 128


def nerf_forward(x, params):
    """x: [N, D_IN] f32 point coords. Returns [N, D_OUT] f32."""
    n = x.shape[0]
    tile_n = _choose_tile(n)
    n_pad = pl.cdiv(n, tile_n) * tile_n

    # Pad feature dim to 8 lanes; lane 3 carries 1.0 so layer-0 bias is folded
    # into the merged first-layer weight.
    x_pad = jnp.zeros((n_pad, D_IN_PAD), jnp.float32)
    x_pad = x_pad.at[:n, :D_IN].set(x)
    x_pad = x_pad.at[:, D_IN].set(1.0)

    def full_spec(shape):
        return pl.BlockSpec(shape, lambda i, _s=shape: tuple(0 for _ in _s))

    wfirst, wmid, b_all, wout, bout = params

    out = pl.pallas_call(
        nerf_kernel,
        out_shape=jax.ShapeDtypeStruct((n_pad, D_OUT_PAD), jnp.float32),
        grid=(n_pad // tile_n,),
        in_specs=[
            pl.BlockSpec((tile_n, D_IN_PAD), lambda i: (i, 0)),      # x
            full_spec((D_IN_PAD, 2 * D_FILTER)),                     # [W0+b0 | W_skip_x] (f32)
            full_spec((N_LAYERS - 1, D_FILTER, D_FILTER)),           # W1..W7 h-part (bf16)
            full_spec((N_LAYERS - 1, D_FILTER)),                     # biases b1..b7 (f32)
            full_spec((D_FILTER, D_OUT_PAD)),                        # output W (bf16, padded)
            full_spec((1, D_OUT_PAD)),                               # output b (f32, padded)
        ],
        out_specs=pl.BlockSpec((tile_n, D_OUT_PAD), lambda i: (i, 0)),
        compiler_params=pltpu.CompilerParams(dimension_semantics=("parallel",)),
    )(x_pad, wfirst, wmid, b_all, wout, bout)
    return out[:n, :D_OUT]


# --------------------------- parameter construction ---------------------------

def init_nerf_params(key):
    """Deterministic nn.Linear-style init; weights stored as [in, out]."""
    ks = iter(jax.random.split(key, 2 * (N_LAYERS + 1)))

    def lin(fan_in, fan_out):
        bound = 1.0 / np.sqrt(fan_in)
        w = jax.random.uniform(next(ks), (fan_in, fan_out), jnp.float32, -bound, bound)
        b = jax.random.uniform(next(ks), (fan_out,), jnp.float32, -bound, bound)
        return w, b

    layers = [lin(D_IN, D_FILTER)]
    for i in range(N_LAYERS - 1):                      # comprehension index (as in __init__)
        d_in = D_FILTER + D_IN if i == SKIP else D_FILTER
        layers.append(lin(d_in, D_FILTER))
    out_layer = lin(D_FILTER, D_OUT)                   # Linear(d_filter, 4)
    return layers, out_layer


def pack_params(layers, out_layer):
    """Pack natural-shape params into the padded/fused arrays the kernel expects."""
    w0, b0 = layers[0]                                 # (3,256), (256,)
    w_skip = layers[SKIP + 1][0]                       # (259,256)
    w_skip_x = w_skip[D_FILTER:]                       # (3,256)  x_input rows

    # Merged first matrix (kept f32: tiny K=8 matmul, exact b0 fold).
    wfirst = jnp.zeros((D_IN_PAD, 2 * D_FILTER), jnp.float32)
    wfirst = wfirst.at[:D_IN, :D_FILTER].set(w0)
    wfirst = wfirst.at[D_IN, :D_FILTER].set(b0)        # bias via the 1.0 lane
    wfirst = wfirst.at[:D_IN, D_FILTER:].set(w_skip_x)

    wmid, biases = [], []
    for li in range(1, N_LAYERS):
        w, b = layers[li]
        if li == SKIP + 1:                             # layer with 259-dim input
            w = w[:D_FILTER]                           # h-part only
        wmid.append(w)
        biases.append(b)
    wmid = jnp.stack(wmid).astype(jnp.bfloat16)        # (7,256,256) bf16
    b_all = jnp.stack(biases)                          # (7,256) f32

    out_w, out_b = out_layer
    wout = (jnp.zeros((D_FILTER, D_OUT_PAD), jnp.float32)
            .at[:, :D_OUT].set(out_w).astype(jnp.bfloat16))
    bout = jnp.zeros((1, D_OUT_PAD), jnp.float32).at[0, :D_OUT].set(out_b)
    return (wfirst, wmid, b_all, wout, bout)


def nerf_ref(x, layers, out_layer):
    """Pure-JAX f32 reference matching the PyTorch forward exactly."""
    x_input = x
    h = x
    for i, (w, b) in enumerate(layers):
        h = jnp.maximum(h @ w + b, 0.0)
        if i == SKIP:
            h = jnp.concatenate([h, x_input], axis=-1)
    ow, ob = out_layer
    return h @ ow + ob


if __name__ == "__main__":
    key = jax.random.PRNGKey(0)
    k_param, k_x = jax.random.split(key)

    layers, out_layer = init_nerf_params(k_param)
    params = pack_params(layers, out_layer)

    N = 256
    x = jax.random.normal(k_x, (N, D_IN), jnp.float32)           # [N, 3] point coords

    y = jax.block_until_ready(nerf_forward(x, params))           # [N, 4]
    y_ref = nerf_ref(x, layers, out_layer)
    # bf16 matmul operands (f32 accumulate) -> loosened tolerance vs f32 reference.
    np.testing.assert_allclose(np.asarray(y), np.asarray(y_ref), rtol=3e-2, atol=3e-2)

    print("KERNEL_OK")
</pallas_src>

<mosaic_0001>
module attributes {stable_mosaic.version = 11 : i64} {
  func.func @nerf_kernel(%arg0: i32, %arg1: memref<128x8xf32, #tpu.memory_space<vmem>>, %arg2: memref<8x512xf32, #tpu.memory_space<vmem>>, %arg3: memref<7x256x256xbf16, #tpu.memory_space<vmem>>, %arg4: memref<7x256xf32, #tpu.memory_space<vmem>>, %arg5: memref<256x128xbf16, #tpu.memory_space<vmem>>, %arg6: memref<1x128xf32, #tpu.memory_space<vmem>>, %arg7: memref<128x128xf32, #tpu.memory_space<vmem>>) attributes {dimension_semantics = [#tpu.dimension_semantics<parallel>], iteration_bounds = array<i64: 2>, scalar_prefetch = 0 : i64, scratch_operands = 0 : i64, tpu.core_type = #tpu.core_type<tc>, window_params = [{transform_indices = @transform_0, window_bounds = array<i64: 128, 8>}, {pipeline_mode = #tpu.pipeline_mode<synchronous>, transform_indices = @transform_1, window_bounds = array<i64: 8, 512>}, {pipeline_mode = #tpu.pipeline_mode<synchronous>, transform_indices = @transform_2, window_bounds = array<i64: 7, 256, 256>}, {pipeline_mode = #tpu.pipeline_mode<synchronous>, transform_indices = @transform_3, window_bounds = array<i64: 7, 256>}, {pipeline_mode = #tpu.pipeline_mode<synchronous>, transform_indices = @transform_4, window_bounds = array<i64: 256, 128>}, {pipeline_mode = #tpu.pipeline_mode<synchronous>, transform_indices = @transform_5, window_bounds = array<i64: 1, 128>}, {transform_indices = @transform_6, window_bounds = array<i64: 128, 128>}]} {
    %c0 = arith.constant 0 : index
    %c0_0 = arith.constant 0 : index
    %0 = vector.load %arg1[%c0, %c0_0] : memref<128x8xf32, #tpu.memory_space<vmem>>, vector<128x8xf32>
    %c0_1 = arith.constant 0 : index
    %c0_2 = arith.constant 0 : index
    %1 = vector.load %arg2[%c0_1, %c0_2] : memref<8x512xf32, #tpu.memory_space<vmem>>, vector<8x512xf32>
    %cst = arith.constant dense<0.000000e+00> : vector<128x512xf32>
    %2 = tpu.matmul %0, %1, %cst {dimension_numbers = #tpu.dot_dimension_numbers<[1], [0], [0], [1], [0, 0, 1, 1], [], []>} : vector<128x8xf32>, vector<8x512xf32>, vector<128x512xf32> -> vector<128x512xf32>
    %3 = vector.extract_strided_slice %2 {offsets = [0, 0], sizes = [128, 256], strides = [1, 1]} : vector<128x512xf32> to vector<128x256xf32>
    %cst_3 = arith.constant 0.000000e+00 : f32
    %4 = vector.broadcast %cst_3 : f32 to vector<128x256xf32>
    %5 = arith.maximumf %3, %4 : vector<128x256xf32>
    %6 = vector.extract_strided_slice %2 {offsets = [0, 256], sizes = [128, 256], strides = [1, 1]} : vector<128x512xf32> to vector<128x256xf32>
    %7 = arith.truncf %5 : vector<128x256xf32> to vector<128x256xbf16>
    %c0_4 = arith.constant 0 : index
    %c0_5 = arith.constant 0 : index
    %c0_6 = arith.constant 0 : index
    %8 = vector.load %arg3[%c0_4, %c0_5, %c0_6] : memref<7x256x256xbf16, #tpu.memory_space<vmem>>, vector<1x256x256xbf16>
    %9 = vector.shape_cast %8 : vector<1x256x256xbf16> to vector<256x256xbf16>
    %cst_7 = arith.constant dense<0.000000e+00> : vector<128x256xf32>
    %10 = tpu.matmul %7, %9, %cst_7 {dimension_numbers = #tpu.dot_dimension_numbers<[1], [0], [0], [1], [0, 0, 1, 1], [], []>} : vector<128x256xbf16>, vector<256x256xbf16>, vector<128x256xf32> -> vector<128x256xf32>
    %c0_8 = arith.constant 0 : index
    %c0_9 = arith.constant 0 : index
    %11 = vector.load %arg4[%c0_8, %c0_9] : memref<7x256xf32, #tpu.memory_space<vmem>>, vector<1x256xf32>
    %12 = vector.broadcast %11 : vector<1x256xf32> to vector<128x256xf32>
    %13 = arith.addf %10, %12 : vector<128x256xf32>
    %cst_10 = arith.constant 0.000000e+00 : f32
    %14 = vector.broadcast %cst_10 : f32 to vector<128x256xf32>
    %15 = arith.maximumf %13, %14 : vector<128x256xf32>
    %16 = arith.truncf %15 : vector<128x256xf32> to vector<128x256xbf16>
    %c1 = arith.constant 1 : index
    %c0_11 = arith.constant 0 : index
    %c0_12 = arith.constant 0 : index
    %17 = vector.load %arg3[%c1, %c0_11, %c0_12] : memref<7x256x256xbf16, #tpu.memory_space<vmem>>, vector<1x256x256xbf16>
    %18 = vector.shape_cast %17 : vector<1x256x256xbf16> to vector<256x256xbf16>
    %cst_13 = arith.constant dense<0.000000e+00> : vector<128x256xf32>
    %19 = tpu.matmul %16, %18, %cst_13 {dimension_numbers = #tpu.dot_dimension_numbers<[1], [0], [0], [1], [0, 0, 1, 1], [], []>} : vector<128x256xbf16>, vector<256x256xbf16>, vector<128x256xf32> -> vector<128x256xf32>
    %c1_14 = arith.constant 1 : index
    %c0_15 = arith.constant 0 : index
    %20 = vector.load %arg4[%c1_14, %c0_15] : memref<7x256xf32, #tpu.memory_space<vmem>>, vector<1x256xf32>
    %21 = vector.broadcast %20 : vector<1x256xf32> to vector<128x256xf32>
    %22 = arith.addf %19, %21 : vector<128x256xf32>
    %cst_16 = arith.constant 0.000000e+00 : f32
    %23 = vector.broadcast %cst_16 : f32 to vector<128x256xf32>
    %24 = arith.maximumf %22, %23 : vector<128x256xf32>
    %25 = arith.truncf %24 : vector<128x256xf32> to vector<128x256xbf16>
    %c2 = arith.constant 2 : index
    %c0_17 = arith.constant 0 : index
    %c0_18 = arith.constant 0 : index
    %26 = vector.load %arg3[%c2, %c0_17, %c0_18] : memref<7x256x256xbf16, #tpu.memory_space<vmem>>, vector<1x256x256xbf16>
    %27 = vector.shape_cast %26 : vector<1x256x256xbf16> to vector<256x256xbf16>
    %cst_19 = arith.constant dense<0.000000e+00> : vector<128x256xf32>
    %28 = tpu.matmul %25, %27, %cst_19 {dimension_numbers = #tpu.dot_dimension_numbers<[1], [0], [0], [1], [0, 0, 1, 1], [], []>} : vector<128x256xbf16>, vector<256x256xbf16>, vector<128x256xf32> -> vector<128x256xf32>
    %c2_20 = arith.constant 2 : index
    %c0_21 = arith.constant 0 : index
    %29 = vector.load %arg4[%c2_20, %c0_21] : memref<7x256xf32, #tpu.memory_space<vmem>>, vector<1x256xf32>
    %30 = vector.broadcast %29 : vector<1x256xf32> to vector<128x256xf32>
    %31 = arith.addf %28, %30 : vector<128x256xf32>
    %cst_22 = arith.constant 0.000000e+00 : f32
    %32 = vector.broadcast %cst_22 : f32 to vector<128x256xf32>
    %33 = arith.maximumf %31, %32 : vector<128x256xf32>
    %34 = arith.truncf %33 : vector<128x256xf32> to vector<128x256xbf16>
    %c3 = arith.constant 3 : index
    %c0_23 = arith.constant 0 : index
    %c0_24 = arith.constant 0 : index
    %35 = vector.load %arg3[%c3, %c0_23, %c0_24] : memref<7x256x256xbf16, #tpu.memory_space<vmem>>, vector<1x256x256xbf16>
    %36 = vector.shape_cast %35 : vector<1x256x256xbf16> to vector<256x256xbf16>
    %cst_25 = arith.constant dense<0.000000e+00> : vector<128x256xf32>
    %37 = tpu.matmul %34, %36, %cst_25 {dimension_numbers = #tpu.dot_dimension_numbers<[1], [0], [0], [1], [0, 0, 1, 1], [], []>} : vector<128x256xbf16>, vector<256x256xbf16>, vector<128x256xf32> -> vector<128x256xf32>
    %c3_26 = arith.constant 3 : index
    %c0_27 = arith.constant 0 : index
    %38 = vector.load %arg4[%c3_26, %c0_27] : memref<7x256xf32, #tpu.memory_space<vmem>>, vector<1x256xf32>
    %39 = vector.broadcast %38 : vector<1x256xf32> to vector<128x256xf32>
    %40 = arith.addf %37, %39 : vector<128x256xf32>
    %cst_28 = arith.constant 0.000000e+00 : f32
    %41 = vector.broadcast %cst_28 : f32 to vector<128x256xf32>
    %42 = arith.maximumf %40, %41 : vector<128x256xf32>
    %43 = arith.truncf %42 : vector<128x256xf32> to vector<128x256xbf16>
    %c4 = arith.constant 4 : index
    %c0_29 = arith.constant 0 : index
    %c0_30 = arith.constant 0 : index
    %44 = vector.load %arg3[%c4, %c0_29, %c0_30] : memref<7x256x256xbf16, #tpu.memory_space<vmem>>, vector<1x256x256xbf16>
    %45 = vector.shape_cast %44 : vector<1x256x256xbf16> to vector<256x256xbf16>
    %cst_31 = arith.constant dense<0.000000e+00> : vector<128x256xf32>
    %46 = tpu.matmul %43, %45, %cst_31 {dimension_numbers = #tpu.dot_dimension_numbers<[1], [0], [0], [1], [0, 0, 1, 1], [], []>} : vector<128x256xbf16>, vector<256x256xbf16>, vector<128x256xf32> -> vector<128x256xf32>
    %47 = arith.addf %46, %6 : vector<128x256xf32>
    %c4_32 = arith.constant 4 : index
    %c0_33 = arith.constant 0 : index
    %48 = vector.load %arg4[%c4_32, %c0_33] : memref<7x256xf32, #tpu.memory_space<vmem>>, vector<1x256xf32>
    %49 = vector.broadcast %48 : vector<1x256xf32> to vector<128x256xf32>
    %50 = arith.addf %47, %49 : vector<128x256xf32>
    %cst_34 = arith.constant 0.000000e+00 : f32
    %51 = vector.broadcast %cst_34 : f32 to vector<128x256xf32>
    %52 = arith.maximumf %50, %51 : vector<128x256xf32>
    %53 = arith.truncf %52 : vector<128x256xf32> to vector<128x256xbf16>
    %c5 = arith.constant 5 : index
    %c0_35 = arith.constant 0 : index
    %c0_36 = arith.constant 0 : index
    %54 = vector.load %arg3[%c5, %c0_35, %c0_36] : memref<7x256x256xbf16, #tpu.memory_space<vmem>>, vector<1x256x256xbf16>
    %55 = vector.shape_cast %54 : vector<1x256x256xbf16> to vector<256x256xbf16>
    %cst_37 = arith.constant dense<0.000000e+00> : vector<128x256xf32>
    %56 = tpu.matmul %53, %55, %cst_37 {dimension_numbers = #tpu.dot_dimension_numbers<[1], [0], [0], [1], [0, 0, 1, 1], [], []>} : vector<128x256xbf16>, vector<256x256xbf16>, vector<128x256xf32> -> vector<128x256xf32>
    %c5_38 = arith.constant 5 : index
    %c0_39 = arith.constant 0 : index
    %57 = vector.load %arg4[%c5_38, %c0_39] : memref<7x256xf32, #tpu.memory_space<vmem>>, vector<1x256xf32>
    %58 = vector.broadcast %57 : vector<1x256xf32> to vector<128x256xf32>
    %59 = arith.addf %56, %58 : vector<128x256xf32>
    %cst_40 = arith.constant 0.000000e+00 : f32
    %60 = vector.broadcast %cst_40 : f32 to vector<128x256xf32>
    %61 = arith.maximumf %59, %60 : vector<128x256xf32>
    %62 = arith.truncf %61 : vector<128x256xf32> to vector<128x256xbf16>
    %c6 = arith.constant 6 : index
    %c0_41 = arith.constant 0 : index
    %c0_42 = arith.constant 0 : index
    %63 = vector.load %arg3[%c6, %c0_41, %c0_42] : memref<7x256x256xbf16, #tpu.memory_space<vmem>>, vector<1x256x256xbf16>
    %64 = vector.shape_cast %63 : vector<1x256x256xbf16> to vector<256x256xbf16>
    %cst_43 = arith.constant dense<0.000000e+00> : vector<128x256xf32>
    %65 = tpu.matmul %62, %64, %cst_43 {dimension_numbers = #tpu.dot_dimension_numbers<[1], [0], [0], [1], [0, 0, 1, 1], [], []>} : vector<128x256xbf16>, vector<256x256xbf16>, vector<128x256xf32> -> vector<128x256xf32>
    %c6_44 = arith.constant 6 : index
    %c0_45 = arith.constant 0 : index
    %66 = vector.load %arg4[%c6_44, %c0_45] : memref<7x256xf32, #tpu.memory_space<vmem>>, vector<1x256xf32>
    %67 = vector.broadcast %66 : vector<1x256xf32> to vector<128x256xf32>
    %68 = arith.addf %65, %67 : vector<128x256xf32>
    %cst_46 = arith.constant 0.000000e+00 : f32
    %69 = vector.broadcast %cst_46 : f32 to vector<128x256xf32>
    %70 = arith.maximumf %68, %69 : vector<128x256xf32>
    %71 = arith.truncf %70 : vector<128x256xf32> to vector<128x256xbf16>
    %c0_47 = arith.constant 0 : index
    %c0_48 = arith.constant 0 : index
    %72 = vector.load %arg5[%c0_47, %c0_48] : memref<256x128xbf16, #tpu.memory_space<vmem>>, vector<256x128xbf16>
    %cst_49 = arith.constant dense<0.000000e+00> : vector<128x128xf32>
    %73 = tpu.matmul %71, %72, %cst_49 {dimension_numbers = #tpu.dot_dimension_numbers<[1], [0], [0], [1], [0, 0, 1, 1], [], []>} : vector<128x256xbf16>, vector<256x128xbf16>, vector<128x128xf32> -> vector<128x128xf32>
    %c0_50 = arith.constant 0 : index
    %c0_51 = arith.constant 0 : index
    %74 = vector.load %arg6[%c0_50, %c0_51] : memref<1x128xf32, #tpu.memory_space<vmem>>, vector<1x128xf32>
    %75 = vector.broadcast %74 : vector<1x128xf32> to vector<128x128xf32>
    %76 = arith.addf %73, %75 : vector<128x128xf32>
    %c0_52 = arith.constant 0 : index
    %c0_53 = arith.constant 0 : index
    %77 = vector.load %arg7[%c0_52, %c0_53] : memref<128x128xf32, #tpu.memory_space<vmem>>, vector<128x128xf32>
    tpu.vector_store %arg7[%c0_52, %c0_53], %76 {strides = array<i32>} : memref<128x128xf32, #tpu.memory_space<vmem>>, vector<128x128xf32>,
    return
  }
  func.func @transform_0(%arg0: i32) -> (i32, i32) {
    %c0_i32 = arith.constant 0 : i32
    %c0_i32_0 = arith.constant 0 : i32
    return %arg0, %c0_i32 : i32, i32
  }
  func.func @transform_1(%arg0: i32) -> (i32, i32) {
    %c0_i32 = arith.constant 0 : i32
    %c0_i32_0 = arith.constant 0 : i32
    %c0_i32_1 = arith.constant 0 : i32
    return %c0_i32, %c0_i32_0 : i32, i32
  }
  func.func @transform_2(%arg0: i32) -> (i32, i32, i32) {
    %c0_i32 = arith.constant 0 : i32
    %c0_i32_0 = arith.constant 0 : i32
    %c0_i32_1 = arith.constant 0 : i32
    %c0_i32_2 = arith.constant 0 : i32
    return %c0_i32, %c0_i32_0, %c0_i32_1 : i32, i32, i32
  }
  func.func @transform_3(%arg0: i32) -> (i32, i32) {
    %c0_i32 = arith.constant 0 : i32
    %c0_i32_0 = arith.constant 0 : i32
    %c0_i32_1 = arith.constant 0 : i32
    return %c0_i32, %c0_i32_0 : i32, i32
  }
  func.func @transform_4(%arg0: i32) -> (i32, i32) {
    %c0_i32 = arith.constant 0 : i32
    %c0_i32_0 = arith.constant 0 : i32
    %c0_i32_1 = arith.constant 0 : i32
    return %c0_i32, %c0_i32_0 : i32, i32
  }
  func.func @transform_5(%arg0: i32) -> (i32, i32) {
    %c0_i32 = arith.constant 0 : i32
    %c0_i32_0 = arith.constant 0 : i32
    %c0_i32_1 = arith.constant 0 : i32
    return %c0_i32, %c0_i32_0 : i32, i32
  }
  func.func @transform_6(%arg0: i32) -> (i32, i32) {
    %c0_i32 = arith.constant 0 : i32
    %c0_i32_0 = arith.constant 0 : i32
    return %arg0, %c0_i32 : i32, i32
  }
}

</mosaic_0001>

<llo_original>
// kernel: tpu_custom_call.1
$region0: #{tpu_custom_call.1}
  #allocation0 [shape = 'u32[]', space=smem, size = 0x4, offset = 0x4, fixed_abs, tag = 'smem constant byte address 0x4 - core index']
  #allocation1 [shape = 'u32[144,128]{1,0:T(1,128)}', space=vmem, size = 0x12000, scoped, tag = 'internal scratch']
  %s0 = inlined_call_operand.vmem [shape: f32[256,8], index: 0, kind: input, shape index: {}]
  %s1 = inlined_call_operand.vmem [shape: f32[8,512], index: 1, kind: input, shape index: {}]
  %s2 = inlined_call_operand.hbm [shape: bf16[7,256,256], index: 2, kind: input, shape index: {}]
  %s3 = inlined_call_operand.vmem [shape: f32[7,256], index: 3, kind: input, shape index: {}]
  %s4 = inlined_call_operand.vmem [shape: bf16[256,128], index: 4, kind: input, shape index: {}]
  %s5 = inlined_call_operand.vmem [shape: f32[1,128], index: 5, kind: input, shape index: {}]
  %s6 = inlined_call_operand.hbm [shape: f32[256,128], index: 6, kind: output, shape index: {}]
  %s7 = sld [smem:[#allocation0]]
  $region61: #{tpu_custom_call.1} parent=0
    _
  %s9 = ssub.s32 1, %s7
  %s10 = scalar_select 0, %s9, %s7
  $region1: #{tpu_custom_call.1} parent=0
    #allocation2 [shape = 'u8[917504]{0}', space=vmem, size = 0xe0000, scoped, tag = 'input window, operand 2, single buffered']
    #allocation3 [shape = 's32[2]{0}', space=sflag, size = 0x8, scoped, tag = 'scoped memory for tpu_custom_call.1']
    #allocation4 [shape = 's32[2]{0}', space=sflag, size = 0x8, scoped, tag = 'scoped memory for tpu_custom_call.1']
    #allocation5 [shape = 'u8[131072]{0}', space=vmem, size = 0x20000, scoped, tag = 'output window, operand 0']
    %11 = vsyncpa [#allocation3], 0
    %12 = vsyncpa [#allocation4], 0
    %s13 = scalar_lea.sflag [#allocation4], 1
    %14 = vsyncpa %s13, 0
    loop: start=0, step=1, limit=4
    $region2: #{tpu_custom_call.1} parent=1 // loop_pre_header
      _
    $region3: #{tpu_custom_call.1} parent=1 // loop_header
      %s16 = sphi 0, %s20
      %p17 = scmp.ge.s32.totalorder %s16, 4
      %s26 = sphi 0, %s28
      %s29 = sphi 0, %s26
      %s30 = sphi 0, %s29
      %s46 = sphi 0, %s30
      %s50 = sphi 0, %s50
      %s52 = sphi 0, %s50
      %s53 = sphi 0, %s52
      %s67 = sphi 0, %s53
      %s71 = sphi 0, %s71
      %s73 = sphi 0, %s71
      %s74 = sphi 0, %s73
      %s88 = sphi 0, %s74
      %s92 = sphi 0, %s92
      %s94 = sphi 0, %s92
      %s95 = sphi 0, %s94
      %s109 = sphi 0, %s95
      %s113 = sphi 0, %s113
      %s115 = sphi 0, %s113
      %s116 = sphi 0, %s115
      %s130 = sphi 0, %s116
      %s134 = sphi 0, %s134
      %s136 = sphi 0, %s134
      %s137 = sphi 0, %s136
      %s151 = sphi 0, %s137
      %s157 = sphi 0, %s159
      %s160 = sphi 0, %s157
      %s161 = sphi 0, %s160
      %s177 = sphi 0, %s161
    $region4: #{tpu_custom_call.1} parent=1 // loop_header_branch
      %19 = sbr.rel (%p17) target = $region8
    $region5: #{tpu_custom_call.1} parent=1 // loop_body
      %s21 = ssub.s32 %s16, 1
      %s22 = ssub.s32 %s16, 2
      %s23 = sadd.s32 %s16, 1
      %s24 = ssub.s32 %s16, %s23
      %p25 = scmp.eq.s32.totalorder %s24, 0
      %s27 = sadd.s32 %s26, 1
      %s28 = scalar_select %p25, %s26, %s27
      %p31 = pneg %p25
      %p32 = scmp.eq.s32.totalorder %s16, 1
      %p33 = por %p31, %p32
      %p34 = scmp.ne.s32.totalorder %s26, %s29
      %p35 = scmp.eq.s32.totalorder %s16, 0
      %p36 = por %p34, %p35
      %p37 = scmp.ne.s32.totalorder %s26, %s29
      %p38 = scmp.eq.s32.totalorder %s21, 1
      %p39 = por %p37, %p38
      %p40 = scmp.ne.s32.totalorder %s29, %s30
      %p41 = scmp.eq.s32.totalorder %s21, 0
      %p42 = por %p40, %p41
      %p43 = scmp.ne.s32.totalorder %s29, %s30
      %p44 = scmp.eq.s32.totalorder %s22, 1
      %p45 = por %p43, %p44
      %p47 = scmp.ne.s32.totalorder %s30, %s46
      %p48 = scmp.eq.s32.totalorder %s22, 0
      %p49 = por %p47, %p48
      %s51 = sadd.s32 %s50, 1
      %p54 = scmp.eq.s32.totalorder %s16, 1
      %p55 = scmp.ne.s32.totalorder %s50, %s52
      %p56 = scmp.eq.s32.totalorder %s16, 0
      %p57 = por %p55, %p56
      %p58 = scmp.ne.s32.totalorder %s50, %s52
      %p59 = scmp.eq.s32.totalorder %s21, 1
      %p60 = por %p58, %p59
      %p61 = scmp.ne.s32.totalorder %s52, %s53
      %p62 = scmp.eq.s32.totalorder %s21, 0
      %p63 = por %p61, %p62
      %p64 = scmp.ne.s32.totalorder %s52, %s53
      %p65 = scmp.eq.s32.totalorder %s22, 1
      %p66 = por %p64, %p65
      %p68 = scmp.ne.s32.totalorder %s53, %s67
      %p69 = scmp.eq.s32.totalorder %s22, 0
      %p70 = por %p68, %p69
      %s72 = sadd.s32 %s71, 1
      %p75 = scmp.eq.s32.totalorder %s16, 1
      %p76 = scmp.ne.s32.totalorder %s71, %s73
      %p77 = scmp.eq.s32.totalorder %s16, 0
      %p78 = por %p76, %p77
      %p79 = scmp.ne.s32.totalorder %s71, %s73
      %p80 = scmp.eq.s32.totalorder %s21, 1
      %p81 = por %p79, %p80
      %p82 = scmp.ne.s32.totalorder %s73, %s74
      %p83 = scmp.eq.s32.totalorder %s21, 0
      %p84 = por %p82, %p83
      %p85 = scmp.ne.s32.totalorder %s73, %s74
      %p86 = scmp.eq.s32.totalorder %s22, 1
      %p87 = por %p85, %p86
      %p89 = scmp.ne.s32.totalorder %s74, %s88
      %p90 = scmp.eq.s32.totalorder %s22, 0
      %p91 = por %p89, %p90
      %s93 = sadd.s32 %s92, 1
      %p96 = scmp.eq.s32.totalorder %s16, 1
      %p97 = scmp.ne.s32.totalorder %s92, %s94
      %p98 = scmp.eq.s32.totalorder %s16, 0
      %p99 = por %p97, %p98
      %p100 = scmp.ne.s32.totalorder %s92, %s94
      %p101 = scmp.eq.s32.totalorder %s21, 1
      %p102 = por %p100, %p101
      %p103 = scmp.ne.s32.totalorder %s94, %s95
      %p104 = scmp.eq.s32.totalorder %s21, 0
      %p105 = por %p103, %p104
      %p106 = scmp.ne.s32.totalorder %s94, %s95
      %p107 = scmp.eq.s32.totalorder %s22, 1
      %p108 = por %p106, %p107
      %p110 = scmp.ne.s32.totalorder %s95, %s109
      %p111 = scmp.eq.s32.totalorder %s22, 0
      %p112 = por %p110, %p111
      %s114 = sadd.s32 %s113, 1
      %p117 = scmp.eq.s32.totalorder %s16, 1
      %p118 = scmp.ne.s32.totalorder %s113, %s115
      %p119 = scmp.eq.s32.totalorder %s16, 0
      %p120 = por %p118, %p119
      %p121 = scmp.ne.s32.totalorder %s113, %s115
      %p122 = scmp.eq.s32.totalorder %s21, 1
      %p123 = por %p121, %p122
      %p124 = scmp.ne.s32.totalorder %s115, %s116
      %p125 = scmp.eq.s32.totalorder %s21, 0
      %p126 = por %p124, %p125
      %p127 = scmp.ne.s32.totalorder %s115, %s116
      %p128 = scmp.eq.s32.totalorder %s22, 1
      %p129 = por %p127, %p128
      %p131 = scmp.ne.s32.totalorder %s116, %s130
      %p132 = scmp.eq.s32.totalorder %s22, 0
      %p133 = por %p131, %p132
      %s135 = sadd.s32 %s134, 1
      %p138 = scmp.eq.s32.totalorder %s16, 1
      %p139 = scmp.ne.s32.totalorder %s134, %s136
      %p140 = scmp.eq.s32.totalorder %s16, 0
      %p141 = por %p139, %p140
      %p142 = scmp.ne.s32.totalorder %s134, %s136
      %p143 = scmp.eq.s32.totalorder %s21, 1
      %p144 = por %p142, %p143
      %p145 = scmp.ne.s32.totalorder %s136, %s137
      %p146 = scmp.eq.s32.totalorder %s21, 0
      %p147 = por %p145, %p146
      %p148 = scmp.ne.s32.totalorder %s136, %s137
      %p149 = scmp.eq.s32.totalorder %s22, 1
      %p150 = por %p148, %p149
      %p152 = scmp.ne.s32.totalorder %s137, %s151
      %p153 = scmp.eq.s32.totalorder %s22, 0
      %p154 = por %p152, %p153
      %s155 = ssub.s32 %s16, %s23
      %p156 = scmp.eq.s32.totalorder %s155, 0
      %s158 = sadd.s32 %s157, 1
      %s159 = scalar_select %p156, %s157, %s158
      %p162 = pneg %p156
      %p163 = scmp.eq.s32.totalorder %s16, 1
      %p164 = por %p162, %p163
      %p165 = scmp.ne.s32.totalorder %s157, %s160
      %p166 = scmp.eq.s32.totalorder %s16, 0
      %p167 = por %p165, %p166
      %p168 = scmp.ne.s32.totalorder %s157, %s160
      %p169 = scmp.eq.s32.totalorder %s21, 1
      %p170 = por %p168, %p169
      %p171 = scmp.ne.s32.totalorder %s160, %s161
      %p172 = scmp.eq.s32.totalorder %s21, 0
      %p173 = por %p171, %p172
      %p174 = scmp.ne.s32.totalorder %s160, %s161
      %p175 = scmp.eq.s32.totalorder %s22, 1
      %p176 = por %p174, %p175
      %p178 = scmp.ne.s32.totalorder %s161, %s177
      %p179 = scmp.eq.s32.totalorder %s22, 0
      %p180 = por %p178, %p179
      %p181 = scmp.le.s32.totalorder 1, %s16
      %p182 = scmp.lt.s32.totalorder %s16, 3
      %p183 = pnand %p181, %p182
      %p184 = pneg %p183
      // Predicated region
      $region9: #{tpu_custom_call.1} parent=5 // pred_check
        _
      $region10: #{tpu_custom_call.1} parent=5 // pred_check_branch
        %186 = sbr.rel (%p183) target = $region12
      $region11: #{tpu_custom_call.1} parent=5 // pred_region
        %s187 = ssub.s32 %s16, 1
        // Predicated region
        $region13: #{tpu_custom_call.1} parent=11 // pred_check
          %p188 = pneg %p63
        $region14: #{tpu_custom_call.1} parent=11 // pred_check_branch
          %190 = sbr.rel (%p188) target = $region16
        $region15: #{tpu_custom_call.1} parent=11 // pred_region
          _
        $region16: #{tpu_custom_call.1} parent=11 // pred_fallthru
          _
        // Predicated region
        $region17: #{tpu_custom_call.1} parent=11 // pred_check
          %p191 = pneg %p84
        $region18: #{tpu_custom_call.1} parent=11 // pred_check_branch
          %193 = sbr.rel (%p191) target = $region20
        $region19: #{tpu_custom_call.1} parent=11 // pred_region
          %s195 = ssub.s32 28672, 28672
          %196 = vsyncadd [#allocation3], %s195
          %s197 = sshll.u32 [#allocation2], 4
          %s198 = int_to_ptr.vmem [resolvable:$true] %s197
          %203 = dma.hbm_to_vmem [thread:$0]  %s2, 28672, %s198, [#allocation3], 128, 128, 8
        $region20: #{tpu_custom_call.1} parent=11 // pred_fallthru
          _
        // Predicated region
        $region21: #{tpu_custom_call.1} parent=11 // pred_check
          %p204 = pneg %p105
        $region22: #{tpu_custom_call.1} parent=11 // pred_check_branch
          %206 = sbr.rel (%p204) target = $region24
        $region23: #{tpu_custom_call.1} parent=11 // pred_region
          _
        $region24: #{tpu_custom_call.1} parent=11 // pred_fallthru
          _
        // Predicated region
        $region25: #{tpu_custom_call.1} parent=11 // pred_check
          %p207 = pneg %p126
        $region26: #{tpu_custom_call.1} parent=11 // pred_check_branch
          %209 = sbr.rel (%p207) target = $region28
        $region27: #{tpu_custom_call.1} parent=11 // pred_region
          _
        $region28: #{tpu_custom_call.1} parent=11 // pred_fallthru
          _
        // Predicated region
        $region29: #{tpu_custom_call.1} parent=11 // pred_check
          %p210 = pneg %p147
        $region30: #{tpu_custom_call.1} parent=11 // pred_check_branch
          %212 = sbr.rel (%p210) target = $region32
        $region31: #{tpu_custom_call.1} parent=11 // pred_region
          _
        $region32: #{tpu_custom_call.1} parent=11 // pred_fallthru
          _
      $region12: #{tpu_custom_call.1} parent=5 // pred_fallthru
        _
      %p213 = scmp.lt.s32.totalorder %s16, 2
      // Predicated region
      $region33: #{tpu_custom_call.1} parent=5 // pred_check
        %p214 = pneg %p213
      $region34: #{tpu_custom_call.1} parent=5 // pred_check_branch
        %216 = sbr.rel (%p214) target = $region36
      $region35: #{tpu_custom_call.1} parent=5 // pred_region
        // Predicated region
        $region37: #{tpu_custom_call.1} parent=35 // pred_check
          %p217 = pneg %p36
        $region38: #{tpu_custom_call.1} parent=35 // pred_check_branch
          %219 = sbr.rel (%p217) target = $region40
        $region39: #{tpu_custom_call.1} parent=35 // pred_region
          %s220 = smul.u32 16, %s16
          %p221 = scmp.lt.s32.totalorder %s220, 31
          %s222 = scalar_select %p221, %s220, 31
          %s223 = smul.addr %s222, 8
          %s224 = scalar_lea.vmem %s0, %s223
          %s225 = smul.u32 16, %s16
        $region40: #{tpu_custom_call.1} parent=35 // pred_fallthru
          _
      $region36: #{tpu_custom_call.1} parent=5 // pred_fallthru
        _
      %p226 = scmp.le.s32.totalorder 1, %s16
      %p227 = scmp.lt.s32.totalorder %s16, 3
      %p228 = pnand %p226, %p227
      %p229 = pneg %p228
      // Predicated region
      $region41: #{tpu_custom_call.1} parent=5 // pred_check
        _
      $region42: #{tpu_custom_call.1} parent=5 // pred_check_branch
        %231 = sbr.rel (%p228) target = $region44
      $region43: #{tpu_custom_call.1} parent=5 // pred_region
        %s232 = ssub.s32 %s16, 1
        // Predicated region
        $region45: #{tpu_custom_call.1} parent=43 // pred_check
          %p233 = pneg %p84
        $region46: #{tpu_custom_call.1} parent=43 // pred_check_branch
          %235 = sbr.rel (%p233) target = $region48
        $region47: #{tpu_custom_call.1} parent=43 // pred_region
          %236 = dma.done [#allocation3], 28672
        $region48: #{tpu_custom_call.1} parent=43 // pred_fallthru
          _
        %s237 = smul.u32 16, %s21
        %p238 = scmp.lt.s32.totalorder %s237, 31
        %s239 = scalar_select %p238, %s237, 31
        %s240 = smul.addr %s239, 8
        %s241 = scalar_lea.vmem %s0, %s240
        %p242 = pneg %p42
        %p243 = pneg %p39
        %p244 = pneg %p63
        %p245 = pneg %p60
        %p246 = pneg %p84
        %p247 = pneg %p81
        %p248 = pneg %p105
        %p249 = pneg %p102
        %p250 = pneg %p126
        %p251 = pneg %p123
        %p252 = pneg %p147
        %p253 = pneg %p144
        %p254 = pneg %p173
        %p255 = pneg %p170
        %s256 = sand.u32 %s160, 1
        %s257 = scalar_lea.sflag [#allocation4], %s256
        %s258 = sand.u32 %s160, 1
        %s259 = smul.addr %s258, 128
        %s260 = scalar_lea.vmem [#allocation5], %s259
        %s261 = smul.u32 16, %s21
        %p262 = scmp.lt.s32.totalorder %s261, 31
        %s263 = scalar_select %p262, %s261, 31
        %s264 = smul.addr %s263, 8
        %s265 = scalar_lea.vmem %s0, %s264
        %s266 = smul.u32 16, %s21
        %s267 = smul.u32 16, %s21
        %v269 = vld [vmem:[%s265] sm:$0xff]
        %v270 = vld [vmem:[%s265 + $0x8] sm:$0xff]
        %v271 = vld [vmem:[%s265 + $0x10] sm:$0xff]
        %v272 = vld [vmem:[%s265 + $0x18] sm:$0xff]
        %v273 = vld [vmem:[%s265 + $0x20] sm:$0xff]
        %v274 = vld [vmem:[%s265 + $0x28] sm:$0xff]
        %v275 = vld [vmem:[%s265 + $0x30] sm:$0xff]
        %v276 = vld [vmem:[%s265 + $0x38] sm:$0xff]
        %v277 = vld [vmem:[%s265 + $0x40] sm:$0xff]
        %v278 = vld [vmem:[%s265 + $0x48] sm:$0xff]
        %v279 = vld [vmem:[%s265 + $0x50] sm:$0xff]
        %v280 = vld [vmem:[%s265 + $0x58] sm:$0xff]
        %v281 = vld [vmem:[%s265 + $0x60] sm:$0xff]
        %v282 = vld [vmem:[%s265 + $0x68] sm:$0xff]
        %v283 = vld [vmem:[%s265 + $0x70] sm:$0xff]
        %v284 = vld [vmem:[%s265 + $0x78] sm:$0xff]
        %v285 = vld [vmem:[%s1] sm:$0xff]
        %v286 = vld [vmem:[%s1 + $0x8] sm:$0xff]
        %v287 = vld [vmem:[%s1 + $0x10] sm:$0xff]
        %v288 = vld [vmem:[%s1 + $0x18] sm:$0xff]
        %vm289 = vcmask 64512
        %v291 = vsel %vm289, %v269, 0
        %v294 = vsel %vm289, %v270, 0
        %v297 = vsel %vm289, %v271, 0
        %v300 = vsel %vm289, %v272, 0
        %v303 = vsel %vm289, %v273, 0
        %v306 = vsel %vm289, %v274, 0
        %v309 = vsel %vm289, %v275, 0
        %v312 = vsel %vm289, %v276, 0
        %v315 = vsel %vm289, %v277, 0
        %v318 = vsel %vm289, %v278, 0
        %v321 = vsel %vm289, %v279, 0
        %v324 = vsel %vm289, %v280, 0
        %v327 = vsel %vm289, %v281, 0
        %v330 = vsel %vm289, %v282, 0
        %v333 = vsel %vm289, %v283, 0
        %v336 = vsel %vm289, %v284, 0
        %338 = vmatprep.subr.mxu0 %v286
        %339 = vmatpush1.msra.mxu0 %v285
        %340 = vmatprep.subr.mxu0 0.0
        %341 = vmatpush1.msra.mxu0 0.0
        %342 = vmatprep.subr.mxu0 0.0
        %343 = vmatpush1.msra.mxu0 0.0
        %344 = vmatprep.subr.mxu0 0.0
        %345 = vmatpush1.msra.mxu0 0.0
        %346 = vmatprep.subr.mxu0 0.0
        %347 = vmatpush1.msra.mxu0 0.0
        %348 = vmatprep.subr.mxu0 0.0
        %349 = vmatpush1.msra.mxu0 0.0
        %350 = vmatprep.subr.mxu0 0.0
        %351 = vmatpush1.msra.mxu0 0.0
        %352 = vmatprep.subr.mxu0 0.0
        %353 = vmatpush1.msra.mxu0 0.0
        %354 = vmatprep.subr.mxu0 0.0
        %355 = vmatpush1.msra.mxu0 0.0
        %356 = vmatprep.subr.mxu0 0.0
        %357 = vmatpush1.msra.mxu0 0.0
        %358 = vmatprep.subr.mxu0 0.0
        %359 = vmatpush1.msra.mxu0 0.0
        %360 = vmatprep.subr.mxu0 0.0
        %361 = vmatpush1.msra.mxu0 0.0
        %362 = vmatprep.subr.mxu0 0.0
        %363 = vmatpush1.msra.mxu0 0.0
        %364 = vmatprep.subr.mxu0 0.0
        %365 = vmatpush1.msra.mxu0 0.0
        %366 = vmatprep.subr.mxu0 0.0
        %367 = vmatpush1.msra.mxu0 0.0
        %368 = vmatprep.subr.mxu0 0.0
        %369 = vmatpush1.msra.mxu0 0.0
        %370 = vmatprep.subr.mxu0 0.0
        %371 = vmatpush1.msra.mxu0 0.0
        %372 = vmatprep.subr.mxu0 0.0
        %373 = vmatpush1.msra.mxu0 0.0
        %374 = vmatprep.subr.mxu0 0.0
        %375 = vmatpush1.msra.mxu0 0.0
        %376 = vmatprep.subr.mxu0 0.0
        %377 = vmatpush1.msra.mxu0 0.0
        %378 = vmatprep.subr.mxu0 0.0
        %379 = vmatpush1.msra.mxu0 0.0
        %380 = vmatprep.subr.mxu0 0.0
        %381 = vmatpush1.msra.mxu0 0.0
        %382 = vmatprep.subr.mxu0 0.0
        %383 = vmatpush1.msra.mxu0 0.0
        %384 = vmatprep.subr.mxu0 0.0
        %385 = vmatpush1.msra.mxu0 0.0
        %386 = vmatprep.subr.mxu0 0.0
        %387 = vmatpush1.msra.mxu0 0.0
        %388 = vmatprep.subr.mxu0 0.0
        %389 = vmatpush1.msra.mxu0 0.0
        %390 = vmatprep.subr.mxu0 0.0
        %391 = vmatpush1.msra.mxu0 0.0
        %392 = vmatprep.subr.mxu0 0.0
        %393 = vmatpush1.msra.mxu0 0.0
        %394 = vmatprep.subr.mxu0 0.0
        %395 = vmatpush1.msra.mxu0 0.0
        %396 = vmatprep.subr.mxu0 0.0
        %397 = vmatpush1.msra.mxu0 0.0
        %398 = vmatprep.subr.mxu0 0.0
        %399 = vmatpush1.msra.mxu0 0.0
        %400 = vmatprep.subr.mxu0 0.0
        %401 = vmatpush1.msra.mxu0 0.0
        %402 = vmatprep.mubr.f32.mxu0 0.0
        %403 = vmatmul.mubr.f32.gmra.mrb[0].mxu0 %v291
        %v404 = vpop.f32.mrb[0].mxu0
        %v405 = vadd.f32 0.0, %v404
        %v406 = vpop.f32.mrb[0].mxu0
        %v407 = vadd.f32 0.0, %v406
        %408 = vmatprep.mubr.f32.mxu0 0.0
        %409 = vmatmul.mubr.f32.gmra.mrb[0].mxu0 %v294
        %v410 = vpop.f32.mrb[0].mxu0
        %v411 = vadd.f32 0.0, %v410
        %v412 = vpop.f32.mrb[0].mxu0
        %v413 = vadd.f32 0.0, %v412
        %414 = vmatprep.mubr.f32.mxu0 0.0
        %415 = vmatmul.mubr.f32.gmra.mrb[0].mxu0 %v297
        %v416 = vpop.f32.mrb[0].mxu0
        %v417 = vadd.f32 0.0, %v416
        %v418 = vpop.f32.mrb[0].mxu0
        %v419 = vadd.f32 0.0, %v418
        %420 = vmatprep.mubr.f32.mxu0 0.0
        %421 = vmatmul.mubr.f32.gmra.mrb[0].mxu0 %v300
        %v422 = vpop.f32.mrb[0].mxu0
        %v423 = vadd.f32 0.0, %v422
        %v424 = vpop.f32.mrb[0].mxu0
        %v425 = vadd.f32 0.0, %v424
        %426 = vmatprep.mubr.f32.mxu0 0.0
        %427 = vmatmul.mubr.f32.gmra.mrb[0].mxu0 %v303
        %v428 = vpop.f32.mrb[0].mxu0
        %v429 = vadd.f32 0.0, %v428
        %v430 = vpop.f32.mrb[0].mxu0
        %v431 = vadd.f32 0.0, %v430
        %432 = vmatprep.mubr.f32.mxu0 0.0
        %433 = vmatmul.mubr.f32.gmra.mrb[0].mxu0 %v306
        %v434 = vpop.f32.mrb[0].mxu0
        %v435 = vadd.f32 0.0, %v434
        %v436 = vpop.f32.mrb[0].mxu0
        %v437 = vadd.f32 0.0, %v436
        %438 = vmatprep.mubr.f32.mxu0 0.0
        %439 = vmatmul.mubr.f32.gmra.mrb[0].mxu0 %v309
        %v440 = vpop.f32.mrb[0].mxu0
        %v441 = vadd.f32 0.0, %v440
        %v442 = vpop.f32.mrb[0].mxu0
        %v443 = vadd.f32 0.0, %v442
        %444 = vmatprep.mubr.f32.mxu0 0.0
        %445 = vmatmul.mubr.f32.gmra.mrb[0].mxu0 %v312
        %v446 = vpop.f32.mrb[0].mxu0
        %v447 = vadd.f32 0.0, %v446
        %v448 = vpop.f32.mrb[0].mxu0
        %v449 = vadd.f32 0.0, %v448
        %450 = vmatprep.mubr.f32.mxu0 0.0
        %451 = vmatmul.mubr.f32.gmra.mrb[0].mxu0 %v315
        %v452 = vpop.f32.mrb[0].mxu0
        %v453 = vadd.f32 0.0, %v452
        %v454 = vpop.f32.mrb[0].mxu0
        %v455 = vadd.f32 0.0, %v454
        %456 = vmatprep.mubr.f32.mxu0 0.0
        %457 = vmatmul.mubr.f32.gmra.mrb[0].mxu0 %v318
        %v458 = vpop.f32.mrb[0].mxu0
        %v459 = vadd.f32 0.0, %v458
        %v460 = vpop.f32.mrb[0].mxu0
        %v461 = vadd.f32 0.0, %v460
        %462 = vmatprep.mubr.f32.mxu0 0.0
        %463 = vmatmul.mubr.f32.gmra.mrb[0].mxu0 %v321
        %v464 = vpop.f32.mrb[0].mxu0
        %v465 = vadd.f32 0.0, %v464
        %v466 = vpop.f32.mrb[0].mxu0
        %v467 = vadd.f32 0.0, %v466
        %468 = vmatprep.mubr.f32.mxu0 0.0
        %469 = vmatmul.mubr.f32.gmra.mrb[0].mxu0 %v324
        %v470 = vpop.f32.mrb[0].mxu0
        %v471 = vadd.f32 0.0, %v470
        %v472 = vpop.f32.mrb[0].mxu0
        %v473 = vadd.f32 0.0, %v472
        %474 = vmatprep.mubr.f32.mxu0 0.0
        %475 = vmatmul.mubr.f32.gmra.mrb[0].mxu0 %v327
        %v476 = vpop.f32.mrb[0].mxu0
        %v477 = vadd.f32 0.0, %v476
        %v478 = vpop.f32.mrb[0].mxu0
        %v479 = vadd.f32 0.0, %v478
        %480 = vmatprep.mubr.f32.mxu0 0.0
        %481 = vmatmul.mubr.f32.gmra.mrb[0].mxu0 %v330
        %v482 = vpop.f32.mrb[0].mxu0
        %v483 = vadd.f32 0.0, %v482
        %v484 = vpop.f32.mrb[0].mxu0
        %v485 = vadd.f32 0.0, %v484
        %486 = vmatprep.mubr.f32.mxu0 0.0
        %487 = vmatmul.mubr.f32.gmra.mrb[0].mxu0 %v333
        %v488 = vpop.f32.mrb[0].mxu0
        %v489 = vadd.f32 0.0, %v488
        %v490 = vpop.f32.mrb[0].mxu0
        %v491 = vadd.f32 0.0, %v490
        %492 = vmatprep.mubr.f32.mxu0 0.0
        %493 = vmatmul.mubr.f32.gmra.mrb[0].mxu0 %v336
        %v494 = vpop.f32.mrb[0].mxu0
        %v495 = vadd.f32 0.0, %v494
        %v496 = vpop.f32.mrb[0].mxu0
        %v497 = vadd.f32 0.0, %v496
        %498 = vdwg.mxu0
        %499 = vmatprep.subr.mxu0 %v288
        %500 = vmatpush1.msra.mxu0 %v287
        %501 = vmatprep.subr.mxu0 0.0
        %502 = vmatpush1.msra.mxu0 0.0
        %503 = vmatprep.subr.mxu0 0.0
        %504 = vmatpush1.msra.mxu0 0.0
        %505 = vmatprep.subr.mxu0 0.0
        %506 = vmatpush1.msra.mxu0 0.0
        %507 = vmatprep.subr.mxu0 0.0
        %508 = vmatpush1.msra.mxu0 0.0
        %509 = vmatprep.subr.mxu0 0.0
        %510 = vmatpush1.msra.mxu0 0.0
        %511 = vmatprep.subr.mxu0 0.0
        %512 = vmatpush1.msra.mxu0 0.0
        %513 = vmatprep.subr.mxu0 0.0
        %514 = vmatpush1.msra.mxu0 0.0
        %515 = vmatprep.subr.mxu0 0.0
        %516 = vmatpush1.msra.mxu0 0.0
        %517 = vmatprep.subr.mxu0 0.0
        %518 = vmatpush1.msra.mxu0 0.0
        %519 = vmatprep.subr.mxu0 0.0
        %520 = vmatpush1.msra.mxu0 0.0
        %521 = vmatprep.subr.mxu0 0.0
        %522 = vmatpush1.msra.mxu0 0.0
        %523 = vmatprep.subr.mxu0 0.0
        %524 = vmatpush1.msra.mxu0 0.0
        %525 = vmatprep.subr.mxu0 0.0
        %526 = vmatpush1.msra.mxu0 0.0
        %527 = vmatprep.subr.mxu0 0.0
        %528 = vmatpush1.msra.mxu0 0.0
        %529 = vmatprep.subr.mxu0 0.0
        %530 = vmatpush1.msra.mxu0 0.0
        %531 = vmatprep.subr.mxu0 0.0
        %532 = vmatpush1.msra.mxu0 0.0
        %533 = vmatprep.subr.mxu0 0.0
        %534 = vmatpush1.msra.mxu0 0.0
        %535 = vmatprep.subr.mxu0 0.0
        %536 = vmatpush1.msra.mxu0 0.0
        %537 = vmatprep.subr.mxu0 0.0
        %538 = vmatpush1.msra.mxu0 0.0
        %539 = vmatprep.subr.mxu0 0.0
        %540 = vmatpush1.msra.mxu0 0.0
        %541 = vmatprep.subr.mxu0 0.0
        %542 = vmatpush1.msra.mxu0 0.0
        %543 = vmatprep.subr.mxu0 0.0
        %544 = vmatpush1.msra.mxu0 0.0
        %545 = vmatprep.subr.mxu0 0.0
        %546 = vmatpush1.msra.mxu0 0.0
        %547 = vmatprep.subr.mxu0 0.0
        %548 = vmatpush1.msra.mxu0 0.0
        %549 = vmatprep.subr.mxu0 0.0
        %550 = vmatpush1.msra.mxu0 0.0
        %551 = vmatprep.subr.mxu0 0.0
        %552 = vmatpush1.msra.mxu0 0.0
        %553 = vmatprep.subr.mxu0 0.0
        %554 = vmatpush1.msra.mxu0 0.0
        %555 = vmatprep.subr.mxu0 0.0
        %556 = vmatpush1.msra.mxu0 0.0
        %557 = vmatprep.subr.mxu0 0.0
        %558 = vmatpush1.msra.mxu0 0.0
        %559 = vmatprep.subr.mxu0 0.0
        %560 = vmatpush1.msra.mxu0 0.0
        %561 = vmatprep.subr.mxu0 0.0
        %562 = vmatpush1.msra.mxu0 0.0
        %563 = vmatprep.mubr.f32.mxu0 0.0
        %564 = vmatmul.mubr.f32.gmra.mrb[0].mxu0 %v291
        %v565 = vpop.f32.mrb[0].mxu0
        %v566 = vadd.f32 0.0, %v565
        %v567 = vpop.f32.mrb[0].mxu0
        %v568 = vadd.f32 0.0, %v567
        %569 = vmatprep.mubr.f32.mxu0 0.0
        %570 = vmatmul.mubr.f32.gmra.mrb[0].mxu0 %v294
        %v571 = vpop.f32.mrb[0].mxu0
        %v572 = vadd.f32 0.0, %v571
        %v573 = vpop.f32.mrb[0].mxu0
        %v574 = vadd.f32 0.0, %v573
        %575 = vmatprep.mubr.f32.mxu0 0.0
        %576 = vmatmul.mubr.f32.gmra.mrb[0].mxu0 %v297
        %v577 = vpop.f32.mrb[0].mxu0
        %v578 = vadd.f32 0.0, %v577
        %v579 = vpop.f32.mrb[0].mxu0
        %v580 = vadd.f32 0.0, %v579
        %581 = vmatprep.mubr.f32.mxu0 0.0
        %582 = vmatmul.mubr.f32.gmra.mrb[0].mxu0 %v300
        %v583 = vpop.f32.mrb[0].mxu0
        %v584 = vadd.f32 0.0, %v583
        %v585 = vpop.f32.mrb[0].mxu0
        %v586 = vadd.f32 0.0, %v585
        %587 = vmatprep.mubr.f32.mxu0 0.0
        %588 = vmatmul.mubr.f32.gmra.mrb[0].mxu0 %v303
        %v589 = vpop.f32.mrb[0].mxu0
        %v590 = vadd.f32 0.0, %v589
        %v591 = vpop.f32.mrb[0].mxu0
        %v592 = vadd.f32 0.0, %v591
        %593 = vmatprep.mubr.f32.mxu0 0.0
        %594 = vmatmul.mubr.f32.gmra.mrb[0].mxu0 %v306
        %v595 = vpop.f32.mrb[0].mxu0
        %v596 = vadd.f32 0.0, %v595
        %v597 = vpop.f32.mrb[0].mxu0
        %v598 = vadd.f32 0.0, %v597
        %599 = vmatprep.mubr.f32.mxu0 0.0
        %600 = vmatmul.mubr.f32.gmra.mrb[0].mxu0 %v309
        %v601 = vpop.f32.mrb[0].mxu0
        %v602 = vadd.f32 0.0, %v601
        %v603 = vpop.f32.mrb[0].mxu0
        %v604 = vadd.f32 0.0, %v603
        %605 = vmatprep.mubr.f32.mxu0 0.0
        %606 = vmatmul.mubr.f32.gmra.mrb[0].mxu0 %v312
        %v607 = vpop.f32.mrb[0].mxu0
        %v608 = vadd.f32 0.0, %v607
        %v609 = vpop.f32.mrb[0].mxu0
        %v610 = vadd.f32 0.0, %v609
        %611 = vmatprep.mubr.f32.mxu0 0.0
        %612 = vmatmul.mubr.f32.gmra.mrb[0].mxu0 %v315
        %v613 = vpop.f32.mrb[0].mxu0
        %v614 = vadd.f32 0.0, %v613
        %v615 = vpop.f32.mrb[0].mxu0
        %v616 = vadd.f32 0.0, %v615
        %617 = vmatprep.mubr.f32.mxu0 0.0
        %618 = vmatmul.mubr.f32.gmra.mrb[0].mxu0 %v318
        %v619 = vpop.f32.mrb[0].mxu0
        %v620 = vadd.f32 0.0, %v619
        %v621 = vpop.f32.mrb[0].mxu0
        %v622 = vadd.f32 0.0, %v621
        %623 = vmatprep.mubr.f32.mxu0 0.0
        %624 = vmatmul.mubr.f32.gmra.mrb[0].mxu0 %v321
        %v625 = vpop.f32.mrb[0].mxu0
        %v626 = vadd.f32 0.0, %v625
        %v627 = vpop.f32.mrb[0].mxu0
        %v628 = vadd.f32 0.0, %v627
        %629 = vmatprep.mubr.f32.mxu0 0.0
        %630 = vmatmul.mubr.f32.gmra.mrb[0].mxu0 %v324
        %v631 = vpop.f32.mrb[0].mxu0
        %v632 = vadd.f32 0.0, %v631
        %v633 = vpop.f32.mrb[0].mxu0
        %v634 = vadd.f32 0.0, %v633
        %635 = vmatprep.mubr.f32.mxu0 0.0
        %636 = vmatmul.mubr.f32.gmra.mrb[0].mxu0 %v327
        %v637 = vpop.f32.mrb[0].mxu0
        %v638 = vadd.f32 0.0, %v637
        %v639 = vpop.f32.mrb[0].mxu0
        %v640 = vadd.f32 0.0, %v639
        %641 = vmatprep.mubr.f32.mxu0 0.0
        %642 = vmatmul.mubr.f32.gmra.mrb[0].mxu0 %v330
        %v643 = vpop.f32.mrb[0].mxu0
        %v644 = vadd.f32 0.0, %v643
        %v645 = vpop.f32.mrb[0].mxu0
        %v646 = vadd.f32 0.0, %v645
        %647 = vmatprep.mubr.f32.mxu0 0.0
        %648 = vmatmul.mubr.f32.gmra.mrb[0].mxu0 %v333
        %v649 = vpop.f32.mrb[0].mxu0
        %v650 = vadd.f32 0.0, %v649
        %v651 = vpop.f32.mrb[0].mxu0
        %v652 = vadd.f32 0.0, %v651
        %653 = vmatprep.mubr.f32.mxu0 0.0
        %654 = vmatmul.mubr.f32.gmra.mrb[0].mxu0 %v336
        %v655 = vpop.f32.mrb[0].mxu0
        %v656 = vadd.f32 0.0, %v655
        %v657 = vpop.f32.mrb[0].mxu0
        %v658 = vadd.f32 0.0, %v657
        %659 = vdwg.mxu0
        %v660 = vmax.f32 %v405, 0.0
        %v661 = vmax.f32 %v407, 0.0
        %v662 = vmax.f32 %v411, 0.0
        %v663 = vmax.f32 %v413, 0.0
        %v664 = vmax.f32 %v417, 0.0
        %v665 = vmax.f32 %v419, 0.0
        %v666 = vmax.f32 %v423, 0.0
        %v667 = vmax.f32 %v425, 0.0
        %v668 = vmax.f32 %v429, 0.0
        %v669 = vmax.f32 %v431, 0.0
        %v670 = vmax.f32 %v435, 0.0
        %v671 = vmax.f32 %v437, 0.0
        %v672 = vmax.f32 %v441, 0.0
        %v673 = vmax.f32 %v443, 0.0
        %v674 = vmax.f32 %v447, 0.0
        %v675 = vmax.f32 %v449, 0.0
        %v676 = vmax.f32 %v453, 0.0
        %v677 = vmax.f32 %v455, 0.0
        %v678 = vmax.f32 %v459, 0.0
        %v679 = vmax.f32 %v461, 0.0
        %v680 = vmax.f32 %v465, 0.0
        %v681 = vmax.f32 %v467, 0.0
        %v682 = vmax.f32 %v471, 0.0
        %v683 = vmax.f32 %v473, 0.0
        %v684 = vmax.f32 %v477, 0.0
        %v685 = vmax.f32 %v479, 0.0
        %v686 = vmax.f32 %v483, 0.0
        %v687 = vmax.f32 %v485, 0.0
        %v688 = vmax.f32 %v489, 0.0
        %v689 = vmax.f32 %v491, 0.0
        %v690 = vmax.f32 %v495, 0.0
        %v691 = vmax.f32 %v497, 0.0
        %v692 = vpack.c.bf16 %v662, %v660
        %v693 = vpack.c.bf16 %v663, %v661
        %v694 = vpack.c.bf16 %v666, %v664
        %v695 = vpack.c.bf16 %v667, %v665
        %v696 = vpack.c.bf16 %v670, %v668
        %v697 = vpack.c.bf16 %v671, %v669
        %v698 = vpack.c.bf16 %v674, %v672
        %v699 = vpack.c.bf16 %v675, %v673
        %v700 = vpack.c.bf16 %v678, %v676
        %v701 = vpack.c.bf16 %v679, %v677
        %v702 = vpack.c.bf16 %v682, %v680
        %v703 = vpack.c.bf16 %v683, %v681
        %v704 = vpack.c.bf16 %v686, %v684
        %v705 = vpack.c.bf16 %v687, %v685
        %v706 = vpack.c.bf16 %v690, %v688
        %v707 = vpack.c.bf16 %v691, %v689
        %v708 = vld [vmem:[#allocation2] sm:$0xff]
        %v709 = vld [vmem:[#allocation2 + $0x8] sm:$0xff]
        %v710 = vld [vmem:[#allocation2 + $0x10] sm:$0xff]
        %v711 = vld [vmem:[#allocation2 + $0x18] sm:$0xff]
        %v712 = vld [vmem:[#allocation2 + $0x20] sm:$0xff]
        %v713 = vld [vmem:[#allocation2 + $0x28] sm:$0xff]
        %v714 = vld [vmem:[#allocation2 + $0x30] sm:$0xff]
        %v715 = vld [vmem:[#allocation2 + $0x38] sm:$0xff]
        %v716 = vld [vmem:[#allocation2 + $0x40] sm:$0xff]
        %v717 = vld [vmem:[#allocation2 + $0x48] sm:$0xff]
        %v718 = vld [vmem:[#allocation2 + $0x50] sm:$0xff]
        %v719 = vld [vmem:[#allocation2 + $0x58] sm:$0xff]
        %v720 = vld [vmem:[#allocation2 + $0x60] sm:$0xff]
        %v721 = vld [vmem:[#allocation2 + $0x68] sm:$0xff]
        %v722 = vld [vmem:[#allocation2 + $0x70] sm:$0xff]
        %v723 = vld [vmem:[#allocation2 + $0x78] sm:$0xff]
        %v724 = vld [vmem:[#allocation2 + $0x80] sm:$0xff]
        %v725 = vld [vmem:[#allocation2 + $0x88] sm:$0xff]
        %v726 = vld [vmem:[#allocation2 + $0x90] sm:$0xff]
        %v727 = vld [vmem:[#allocation2 + $0x98] sm:$0xff]
        %v728 = vld [vmem:[#allocation2 + $0xa0] sm:$0xff]
        %v729 = vld [vmem:[#allocation2 + $0xa8] sm:$0xff]
        %v730 = vld [vmem:[#allocation2 + $0xb0] sm:$0xff]
        %v731 = vld [vmem:[#allocation2 + $0xb8] sm:$0xff]
        %v732 = vld [vmem:[#allocation2 + $0xc0] sm:$0xff]
        %v733 = vld [vmem:[#allocation2 + $0xc8] sm:$0xff]
        %v734 = vld [vmem:[#allocation2 + $0xd0] sm:$0xff]
        %v735 = vld [vmem:[#allocation2 + $0xd8] sm:$0xff]
        %v736 = vld [vmem:[#allocation2 + $0xe0] sm:$0xff]
        %v737 = vld [vmem:[#allocation2 + $0xe8] sm:$0xff]
        %v738 = vld [vmem:[#allocation2 + $0xf0] sm:$0xff]
        %v739 = vld [vmem:[#allocation2 + $0xf8] sm:$0xff]
        %v740 = vld [vmem:[%s3] ss:$8 sm:$0x3]
        %v742 = vlaneseq
        %v743 = vshrl.u32 %v742, 7
        %v744 = vsub.s32 0, %v743
        %v745 = vrot.slane %v740, %v744
        %v746 = vlaneseq
        %v747 = vshrl.u32 %v746, 7
        %v748 = vsub.s32 1, %v747
        %v749 = vrot.slane %v740, %v748
        %v784 = vunpack.c.l.b16 %v708
        %v785 = vunpack.c.h.b16 %v708
        %v786 = vunpack.c.l.b16 %v709
        %v787 = vunpack.c.h.b16 %v709
        %v788 = vunpack.c.l.b16 %v710
        %v789 = vunpack.c.h.b16 %v710
        %v790 = vunpack.c.l.b16 %v711
        %v791 = vunpack.c.h.b16 %v711
        %v792 = vunpack.c.l.b16 %v712
        %v793 = vunpack.c.h.b16 %v712
        %v794 = vunpack.c.l.b16 %v713
        %v795 = vunpack.c.h.b16 %v713
        %v796 = vunpack.c.l.b16 %v714
        %v797 = vunpack.c.h.b16 %v714
        %v798 = vunpack.c.l.b16 %v715
        %v799 = vunpack.c.h.b16 %v715
        %v800 = vunpack.c.l.b16 %v716
        %v801 = vunpack.c.h.b16 %v716
        %v802 = vunpack.c.l.b16 %v717
        %v803 = vunpack.c.h.b16 %v717
        %v804 = vunpack.c.l.b16 %v718
        %v805 = vunpack.c.h.b16 %v718
        %v806 = vunpack.c.l.b16 %v719
        %v807 = vunpack.c.h.b16 %v719
        %v808 = vunpack.c.l.b16 %v720
        %v809 = vunpack.c.h.b16 %v720
        %v810 = vunpack.c.l.b16 %v721
        %v811 = vunpack.c.h.b16 %v721
        %v812 = vunpack.c.l.b16 %v722
        %v813 = vunpack.c.h.b16 %v722
        %v814 = vunpack.c.l.b16 %v723
        %v815 = vunpack.c.h.b16 %v723
        %v816 = vunpack.c.l.b16 %v724
        %v817 = vunpack.c.h.b16 %v724
        %v818 = vunpack.c.l.b16 %v725
        %v819 = vunpack.c.h.b16 %v725
        %v820 = vunpack.c.l.b16 %v726
        %v821 = vunpack.c.h.b16 %v726
        %v822 = vunpack.c.l.b16 %v727
        %v823 = vunpack.c.h.b16 %v727
        %v824 = vunpack.c.l.b16 %v728
        %v825 = vunpack.c.h.b16 %v728
        %v826 = vunpack.c.l.b16 %v729
        %v827 = vunpack.c.h.b16 %v729
        %v828 = vunpack.c.l.b16 %v730
        %v829 = vunpack.c.h.b16 %v730
        %v830 = vunpack.c.l.b16 %v731
        %v831 = vunpack.c.h.b16 %v731
        %v832 = vunpack.c.l.b16 %v732
        %v833 = vunpack.c.h.b16 %v732
        %v834 = vunpack.c.l.b16 %v733
        %v835 = vunpack.c.h.b16 %v733
        %v836 = vunpack.c.l.b16 %v734
        %v837 = vunpack.c.h.b16 %v734
        %v838 = vunpack.c.l.b16 %v735
        %v839 = vunpack.c.h.b16 %v735
        %v840 = vunpack.c.l.b16 %v736
        %v841 = vunpack.c.h.b16 %v736
        %v842 = vunpack.c.l.b16 %v737
        %v843 = vunpack.c.h.b16 %v737
        %v844 = vunpack.c.l.b16 %v738
        %v845 = vunpack.c.h.b16 %v738
        %v846 = vunpack.c.l.b16 %v739
        %v847 = vunpack.c.h.b16 %v739
        %v848 = vpack.c.b16 %v786, %v784
        %v849 = vpack.c.b16 %v787, %v785
        %v850 = vpack.c.b16 %v790, %v788
        %v851 = vpack.c.b16 %v791, %v789
        %v852 = vpack.c.b16 %v794, %v792
        %v853 = vpack.c.b16 %v795, %v793
        %v854 = vpack.c.b16 %v798, %v796
        %v855 = vpack.c.b16 %v799, %v797
        %v856 = vpack.c.b16 %v802, %v800
        %v857 = vpack.c.b16 %v803, %v801
        %v858 = vpack.c.b16 %v806, %v804
        %v859 = vpack.c.b16 %v807, %v805
        %v860 = vpack.c.b16 %v810, %v808
        %v861 = vpack.c.b16 %v811, %v809
        %v862 = vpack.c.b16 %v814, %v812
        %v863 = vpack.c.b16 %v815, %v813
        %v864 = vpack.c.b16 %v818, %v816
        %v865 = vpack.c.b16 %v819, %v817
        %v866 = vpack.c.b16 %v822, %v820
        %v867 = vpack.c.b16 %v823, %v821
        %v868 = vpack.c.b16 %v826, %v824
        %v869 = vpack.c.b16 %v827, %v825
        %v870 = vpack.c.b16 %v830, %v828
        %v871 = vpack.c.b16 %v831, %v829
        %v872 = vpack.c.b16 %v834, %v832
        %v873 = vpack.c.b16 %v835, %v833
        %v874 = vpack.c.b16 %v838, %v836
        %v875 = vpack.c.b16 %v839, %v837
        %v876 = vpack.c.b16 %v842, %v840
        %v877 = vpack.c.b16 %v843, %v841
        %v878 = vpack.c.b16 %v846, %v844
        %v879 = vpack.c.b16 %v847, %v845
        %912 = vmatprep.subr.bf16.mxu0 %v849
        %913 = vmatpush1.bf16.msra.mxu0 %v848
        %914 = vmatprep.subr.bf16.mxu0 %v851
        %915 = vmatpush1.bf16.msra.mxu0 %v850
        %916 = vmatprep.subr.bf16.mxu0 %v853
        %917 = vmatpush1.bf16.msra.mxu0 %v852
        %918 = vmatprep.subr.bf16.mxu0 %v855
        %919 = vmatpush1.bf16.msra.mxu0 %v854
        %920 = vmatprep.subr.bf16.mxu0 %v857
        %921 = vmatpush1.bf16.msra.mxu0 %v856
        %922 = vmatprep.subr.bf16.mxu0 %v859
        %923 = vmatpush1.bf16.msra.mxu0 %v858
        %924 = vmatprep.subr.bf16.mxu0 %v861
        %925 = vmatpush1.bf16.msra.mxu0 %v860
        %926 = vmatprep.subr.bf16.mxu0 %v863
        %927 = vmatpush1.bf16.msra.mxu0 %v862
        %928 = vmatprep.subr.bf16.mxu0 %v865
        %929 = vmatpush1.bf16.msra.mxu0 %v864
        %930 = vmatprep.subr.bf16.mxu0 %v867
        %931 = vmatpush1.bf16.msra.mxu0 %v866
        %932 = vmatprep.subr.bf16.mxu0 %v869
        %933 = vmatpush1.bf16.msra.mxu0 %v868
        %934 = vmatprep.subr.bf16.mxu0 %v871
        %935 = vmatpush1.bf16.msra.mxu0 %v870
        %936 = vmatprep.subr.bf16.mxu0 %v873
        %937 = vmatpush1.bf16.msra.mxu0 %v872
        %938 = vmatprep.subr.bf16.mxu0 %v875
        %939 = vmatpush1.bf16.msra.mxu0 %v874
        %940 = vmatprep.subr.bf16.mxu0 %v877
        %941 = vmatpush1.bf16.msra.mxu0 %v876
        %942 = vmatprep.subr.bf16.mxu0 %v879
        %943 = vmatpush1.bf16.msra.mxu0 %v878
        %944 = vmatprep.mubr.bf16.mxu0 %v693
        %945 = vmatmul.mubr.bf16.gmra.mrb[0].mxu0 %v692
        %v946 = vpop.f32.mrb[0].mxu0
        %v947 = vadd.f32 %v745, %v946
        %v948 = vpop.f32.mrb[0].mxu0
        %v949 = vadd.f32 %v749, %v948
        %v950 = vpop.f32.mrb[0].mxu0
        %v951 = vadd.f32 %v745, %v950
        %v952 = vpop.f32.mrb[0].mxu0
        %v953 = vadd.f32 %v749, %v952
        %954 = vmatprep.mubr.bf16.mxu0 %v695
        %955 = vmatmul.mubr.bf16.gmra.mrb[0].mxu0 %v694
        %v956 = vpop.f32.mrb[0].mxu0
        %v957 = vadd.f32 %v745, %v956
        %v958 = vpop.f32.mrb[0].mxu0
        %v959 = vadd.f32 %v749, %v958
        %v960 = vpop.f32.mrb[0].mxu0
        %v961 = vadd.f32 %v745, %v960
        %v962 = vpop.f32.mrb[0].mxu0
        %v963 = vadd.f32 %v749, %v962
        %964 = vmatprep.mubr.bf16.mxu0 %v697
        %965 = vmatmul.mubr.bf16.gmra.mrb[0].mxu0 %v696
        %v966 = vpop.f32.mrb[0].mxu0
        %v967 = vadd.f32 %v745, %v966
        %v968 = vpop.f32.mrb[0].mxu0
        %v969 = vadd.f32 %v749, %v968
        %v970 = vpop.f32.mrb[0].mxu0
        %v971 = vadd.f32 %v745, %v970
        %v972 = vpop.f32.mrb[0].mxu0
        %v973 = vadd.f32 %v749, %v972
        %974 = vmatprep.mubr.bf16.mxu0 %v699
        %975 = vmatmul.mubr.bf16.gmra.mrb[0].mxu0 %v698
        %v976 = vpop.f32.mrb[0].mxu0
        %v977 = vadd.f32 %v745, %v976
        %v978 = vpop.f32.mrb[0].mxu0
        %v979 = vadd.f32 %v749, %v978
        %v980 = vpop.f32.mrb[0].mxu0
        %v981 = vadd.f32 %v745, %v980
        %v982 = vpop.f32.mrb[0].mxu0
        %v983 = vadd.f32 %v749, %v982
        %984 = vmatprep.mubr.bf16.mxu0 %v701
        %985 = vmatmul.mubr.bf16.gmra.mrb[0].mxu0 %v700
        %v986 = vpop.f32.mrb[0].mxu0
        %v987 = vadd.f32 %v745, %v986
        %v988 = vpop.f32.mrb[0].mxu0
        %v989 = vadd.f32 %v749, %v988
        %v990 = vpop.f32.mrb[0].mxu0
        %v991 = vadd.f32 %v745, %v990
        %v992 = vpop.f32.mrb[0].mxu0
        %v993 = vadd.f32 %v749, %v992
        %994 = vmatprep.mubr.bf16.mxu0 %v703
        %995 = vmatmul.mubr.bf16.gmra.mrb[0].mxu0 %v702
        %v996 = vpop.f32.mrb[0].mxu0
        %v997 = vadd.f32 %v745, %v996
        %v998 = vpop.f32.mrb[0].mxu0
        %v999 = vadd.f32 %v749, %v998
        %v1000 = vpop.f32.mrb[0].mxu0
        %v1001 = vadd.f32 %v745, %v1000
        %v1002 = vpop.f32.mrb[0].mxu0
        %v1003 = vadd.f32 %v749, %v1002
        %1004 = vmatprep.mubr.bf16.mxu0 %v705
        %1005 = vmatmul.mubr.bf16.gmra.mrb[0].mxu0 %v704
        %v1006 = vpop.f32.mrb[0].mxu0
        %v1007 = vadd.f32 %v745, %v1006
        %v1008 = vpop.f32.mrb[0].mxu0
        %v1009 = vadd.f32 %v749, %v1008
        %v1010 = vpop.f32.mrb[0].mxu0
        %v1011 = vadd.f32 %v745, %v1010
        %v1012 = vpop.f32.mrb[0].mxu0
        %v1013 = vadd.f32 %v749, %v1012
        %1014 = vmatprep.mubr.bf16.mxu0 %v707
        %1015 = vmatmul.mubr.bf16.gmra.mrb[0].mxu0 %v706
        %v1016 = vpop.f32.mrb[0].mxu0
        %v1017 = vadd.f32 %v745, %v1016
        %v1018 = vpop.f32.mrb[0].mxu0
        %v1019 = vadd.f32 %v749, %v1018
        %v1020 = vpop.f32.mrb[0].mxu0
        %v1021 = vadd.f32 %v745, %v1020
        %v1022 = vpop.f32.mrb[0].mxu0
        %v1023 = vadd.f32 %v749, %v1022
        %1024 = vdwg.mxu0
        %v1025 = vmax.f32 %v947, 0.0
        %v1026 = vmax.f32 %v949, 0.0
        %v1027 = vmax.f32 %v951, 0.0
        %v1028 = vmax.f32 %v953, 0.0
        %v1029 = vmax.f32 %v957, 0.0
        %v1030 = vmax.f32 %v959, 0.0
        %v1031 = vmax.f32 %v961, 0.0
        %v1032 = vmax.f32 %v963, 0.0
        %v1033 = vmax.f32 %v967, 0.0
        %v1034 = vmax.f32 %v969, 0.0
        %v1035 = vmax.f32 %v971, 0.0
        %v1036 = vmax.f32 %v973, 0.0
        %v1037 = vmax.f32 %v977, 0.0
        %v1038 = vmax.f32 %v979, 0.0
        %v1039 = vmax.f32 %v981, 0.0
        %v1040 = vmax.f32 %v983, 0.0
        %v1041 = vmax.f32 %v987, 0.0
        %v1042 = vmax.f32 %v989, 0.0
        %v1043 = vmax.f32 %v991, 0.0
        %v1044 = vmax.f32 %v993, 0.0
        %v1045 = vmax.f32 %v997, 0.0
        %v1046 = vmax.f32 %v999, 0.0
        %v1047 = vmax.f32 %v1001, 0.0
        %v1048 = vmax.f32 %v1003, 0.0
        %v1049 = vmax.f32 %v1007, 0.0
        %v1050 = vmax.f32 %v1009, 0.0
        %v1051 = vmax.f32 %v1011, 0.0
        %v1052 = vmax.f32 %v1013, 0.0
        %v1053 = vmax.f32 %v1017, 0.0
        %v1054 = vmax.f32 %v1019, 0.0
        %v1055 = vmax.f32 %v1021, 0.0
        %v1056 = vmax.f32 %v1023, 0.0
        %v1057 = vpack.c.bf16 %v1027, %v1025
        %v1058 = vpack.c.bf16 %v1028, %v1026
        %v1059 = vpack.c.bf16 %v1031, %v1029
        %v1060 = vpack.c.bf16 %v1032, %v1030
        %v1061 = vpack.c.bf16 %v1035, %v1033
        %v1062 = vpack.c.bf16 %v1036, %v1034
        %v1063 = vpack.c.bf16 %v1039, %v1037
        %v1064 = vpack.c.bf16 %v1040, %v1038
        %v1065 = vpack.c.bf16 %v1043, %v1041
        %v1066 = vpack.c.bf16 %v1044, %v1042
        %v1067 = vpack.c.bf16 %v1047, %v1045
        %v1068 = vpack.c.bf16 %v1048, %v1046
        %v1069 = vpack.c.bf16 %v1051, %v1049
        %v1070 = vpack.c.bf16 %v1052, %v1050
        %v1071 = vpack.c.bf16 %v1055, %v1053
        %v1072 = vpack.c.bf16 %v1056, %v1054
        %s1073 = scalar_lea.vmem [#allocation2], 256
        %v1074 = vld [vmem:[%s1073] sm:$0xff]
        %v1075 = vld [vmem:[%s1073 + $0x8] sm:$0xff]
        %v1076 = vld [vmem:[%s1073 + $0x10] sm:$0xff]
        %v1077 = vld [vmem:[%s1073 + $0x18] sm:$0xff]
        %v1078 = vld [vmem:[%s1073 + $0x20] sm:$0xff]
        %v1079 = vld [vmem:[%s1073 + $0x28] sm:$0xff]
        %v1080 = vld [vmem:[%s1073 + $0x30] sm:$0xff]
        %v1081 = vld [vmem:[%s1073 + $0x38] sm:$0xff]
        %v1082 = vld [vmem:[%s1073 + $0x40] sm:$0xff]
        %v1083 = vld [vmem:[%s1073 + $0x48] sm:$0xff]
        %v1084 = vld [vmem:[%s1073 + $0x50] sm:$0xff]
        %v1085 = vld [vmem:[%s1073 + $0x58] sm:$0xff]
        %v1086 = vld [vmem:[%s1073 + $0x60] sm:$0xff]
        %v1087 = vld [vmem:[%s1073 + $0x68] sm:$0xff]
        %v1088 = vld [vmem:[%s1073 + $0x70] sm:$0xff]
        %v1089 = vld [vmem:[%s1073 + $0x78] sm:$0xff]
        %v1090 = vld [vmem:[%s1073 + $0x80] sm:$0xff]
        %v1091 = vld [vmem:[%s1073 + $0x88] sm:$0xff]
        %v1092 = vld [vmem:[%s1073 + $0x90] sm:$0xff]
        %v1093 = vld [vmem:[%s1073 + $0x98] sm:$0xff]
        %v1094 = vld [vmem:[%s1073 + $0xa0] sm:$0xff]
        %v1095 = vld [vmem:[%s1073 + $0xa8] sm:$0xff]
        %v1096 = vld [vmem:[%s1073 + $0xb0] sm:$0xff]
        %v1097 = vld [vmem:[%s1073 + $0xb8] sm:$0xff]
        %v1098 = vld [vmem:[%s1073 + $0xc0] sm:$0xff]
        %v1099 = vld [vmem:[%s1073 + $0xc8] sm:$0xff]
        %v1100 = vld [vmem:[%s1073 + $0xd0] sm:$0xff]
        %v1101 = vld [vmem:[%s1073 + $0xd8] sm:$0xff]
        %v1102 = vld [vmem:[%s1073 + $0xe0] sm:$0xff]
        %v1103 = vld [vmem:[%s1073 + $0xe8] sm:$0xff]
        %v1104 = vld [vmem:[%s1073 + $0xf0] sm:$0xff]
        %v1105 = vld [vmem:[%s1073 + $0xf8] sm:$0xff]
        %s1106 = scalar_lea.vmem %s3, 1
        %v1107 = vld [vmem:[%s1106] ss:$8 sm:$0x3]
        %v1109 = vlaneseq
        %v1110 = vshrl.u32 %v1109, 7
        %v1111 = vsub.s32 0, %v1110
        %v1112 = vrot.slane %v1107, %v1111
        %v1113 = vlaneseq
        %v1114 = vshrl.u32 %v1113, 7
        %v1115 = vsub.s32 1, %v1114
        %v1116 = vrot.slane %v1107, %v1115
        %v1151 = vunpack.c.l.b16 %v1074
        %v1152 = vunpack.c.h.b16 %v1074
        %v1153 = vunpack.c.l.b16 %v1075
        %v1154 = vunpack.c.h.b16 %v1075
        %v1155 = vunpack.c.l.b16 %v1076
        %v1156 = vunpack.c.h.b16 %v1076
        %v1157 = vunpack.c.l.b16 %v1077
        %v1158 = vunpack.c.h.b16 %v1077
        %v1159 = vunpack.c.l.b16 %v1078
        %v1160 = vunpack.c.h.b16 %v1078
        %v1161 = vunpack.c.l.b16 %v1079
        %v1162 = vunpack.c.h.b16 %v1079
        %v1163 = vunpack.c.l.b16 %v1080
        %v1164 = vunpack.c.h.b16 %v1080
        %v1165 = vunpack.c.l.b16 %v1081
        %v1166 = vunpack.c.h.b16 %v1081
        %v1167 = vunpack.c.l.b16 %v1082
        %v1168 = vunpack.c.h.b16 %v1082
        %v1169 = vunpack.c.l.b16 %v1083
        %v1170 = vunpack.c.h.b16 %v1083
        %v1171 = vunpack.c.l.b16 %v1084
        %v1172 = vunpack.c.h.b16 %v1084
        %v1173 = vunpack.c.l.b16 %v1085
        %v1174 = vunpack.c.h.b16 %v1085
        %v1175 = vunpack.c.l.b16 %v1086
        %v1176 = vunpack.c.h.b16 %v1086
        %v1177 = vunpack.c.l.b16 %v1087
        %v1178 = vunpack.c.h.b16 %v1087
        %v1179 = vunpack.c.l.b16 %v1088
        %v1180 = vunpack.c.h.b16 %v1088
        %v1181 = vunpack.c.l.b16 %v1089
        %v1182 = vunpack.c.h.b16 %v1089
        %v1183 = vunpack.c.l.b16 %v1090
        %v1184 = vunpack.c.h.b16 %v1090
        %v1185 = vunpack.c.l.b16 %v1091
        %v1186 = vunpack.c.h.b16 %v1091
        %v1187 = vunpack.c.l.b16 %v1092
        %v1188 = vunpack.c.h.b16 %v1092
        %v1189 = vunpack.c.l.b16 %v1093
        %v1190 = vunpack.c.h.b16 %v1093
        %v1191 = vunpack.c.l.b16 %v1094
        %v1192 = vunpack.c.h.b16 %v1094
        %v1193 = vunpack.c.l.b16 %v1095
        %v1194 = vunpack.c.h.b16 %v1095
        %v1195 = vunpack.c.l.b16 %v1096
        %v1196 = vunpack.c.h.b16 %v1096
        %v1197 = vunpack.c.l.b16 %v1097
        %v1198 = vunpack.c.h.b16 %v1097
        %v1199 = vunpack.c.l.b16 %v1098
        %v1200 = vunpack.c.h.b16 %v1098
        %v1201 = vunpack.c.l.b16 %v1099
        %v1202 = vunpack.c.h.b16 %v1099
        %v1203 = vunpack.c.l.b16 %v1100
        %v1204 = vunpack.c.h.b16 %v1100
        %v1205 = vunpack.c.l.b16 %v1101
        %v1206 = vunpack.c.h.b16 %v1101
        %v1207 = vunpack.c.l.b16 %v1102
        %v1208 = vunpack.c.h.b16 %v1102
        %v1209 = vunpack.c.l.b16 %v1103
        %v1210 = vunpack.c.h.b16 %v1103
        %v1211 = vunpack.c.l.b16 %v1104
        %v1212 = vunpack.c.h.b16 %v1104
        %v1213 = vunpack.c.l.b16 %v1105
        %v1214 = vunpack.c.h.b16 %v1105
        %v1215 = vpack.c.b16 %v1153, %v1151
        %v1216 = vpack.c.b16 %v1154, %v1152
        %v1217 = vpack.c.b16 %v1157, %v1155
        %v1218 = vpack.c.b16 %v1158, %v1156
        %v1219 = vpack.c.b16 %v1161, %v1159
        %v1220 = vpack.c.b16 %v1162, %v1160
        %v1221 = vpack.c.b16 %v1165, %v1163
        %v1222 = vpack.c.b16 %v1166, %v1164
        %v1223 = vpack.c.b16 %v1169, %v1167
        %v1224 = vpack.c.b16 %v1170, %v1168
        %v1225 = vpack.c.b16 %v1173, %v1171
        %v1226 = vpack.c.b16 %v1174, %v1172
        %v1227 = vpack.c.b16 %v1177, %v1175
        %v1228 = vpack.c.b16 %v1178, %v1176
        %v1229 = vpack.c.b16 %v1181, %v1179
        %v1230 = vpack.c.b16 %v1182, %v1180
        %v1231 = vpack.c.b16 %v1185, %v1183
        %v1232 = vpack.c.b16 %v1186, %v1184
        %v1233 = vpack.c.b16 %v1189, %v1187
        %v1234 = vpack.c.b16 %v1190, %v1188
        %v1235 = vpack.c.b16 %v1193, %v1191
        %v1236 = vpack.c.b16 %v1194, %v1192
        %v1237 = vpack.c.b16 %v1197, %v1195
        %v1238 = vpack.c.b16 %v1198, %v1196
        %v1239 = vpack.c.b16 %v1201, %v1199
        %v1240 = vpack.c.b16 %v1202, %v1200
        %v1241 = vpack.c.b16 %v1205, %v1203
        %v1242 = vpack.c.b16 %v1206, %v1204
        %v1243 = vpack.c.b16 %v1209, %v1207
        %v1244 = vpack.c.b16 %v1210, %v1208
        %v1245 = vpack.c.b16 %v1213, %v1211
        %v1246 = vpack.c.b16 %v1214, %v1212
        %1279 = vmatprep.subr.bf16.mxu0 %v1216
        %1280 = vmatpush1.bf16.msra.mxu0 %v1215
        %1281 = vmatprep.subr.bf16.mxu0 %v1218
        %1282 = vmatpush1.bf16.msra.mxu0 %v1217
        %1283 = vmatprep.subr.bf16.mxu0 %v1220
        %1284 = vmatpush1.bf16.msra.mxu0 %v1219
        %1285 = vmatprep.subr.bf16.mxu0 %v1222
        %1286 = vmatpush1.bf16.msra.mxu0 %v1221
        %1287 = vmatprep.subr.bf16.mxu0 %v1224
        %1288 = vmatpush1.bf16.msra.mxu0 %v1223
        %1289 = vmatprep.subr.bf16.mxu0 %v1226
        %1290 = vmatpush1.bf16.msra.mxu0 %v1225
        %1291 = vmatprep.subr.bf16.mxu0 %v1228
        %1292 = vmatpush1.bf16.msra.mxu0 %v1227
        %1293 = vmatprep.subr.bf16.mxu0 %v1230
        %1294 = vmatpush1.bf16.msra.mxu0 %v1229
        %1295 = vmatprep.subr.bf16.mxu0 %v1232
        %1296 = vmatpush1.bf16.msra.mxu0 %v1231
        %1297 = vmatprep.subr.bf16.mxu0 %v1234
        %1298 = vmatpush1.bf16.msra.mxu0 %v1233
        %1299 = vmatprep.subr.bf16.mxu0 %v1236
        %1300 = vmatpush1.bf16.msra.mxu0 %v1235
        %1301 = vmatprep.subr.bf16.mxu0 %v1238
        %1302 = vmatpush1.bf16.msra.mxu0 %v1237
        %1303 = vmatprep.subr.bf16.mxu0 %v1240
        %1304 = vmatpush1.bf16.msra.mxu0 %v1239
        %1305 = vmatprep.subr.bf16.mxu0 %v1242
        %1306 = vmatpush1.bf16.msra.mxu0 %v1241
        %1307 = vmatprep.subr.bf16.mxu0 %v1244
        %1308 = vmatpush1.bf16.msra.mxu0 %v1243
        %1309 = vmatprep.subr.bf16.mxu0 %v1246
        %1310 = vmatpush1.bf16.msra.mxu0 %v1245
        %1311 = vmatprep.mubr.bf16.mxu0 %v1058
        %1312 = vmatmul.mubr.bf16.gmra.mrb[0].mxu0 %v1057
        %v1313 = vpop.f32.mrb[0].mxu0
        %v1314 = vadd.f32 %v1112, %v1313
        %v1315 = vpop.f32.mrb[0].mxu0
        %v1316 = vadd.f32 %v1116, %v1315
        %v1317 = vpop.f32.mrb[0].mxu0
        %v1318 = vadd.f32 %v1112, %v1317
        %v1319 = vpop.f32.mrb[0].mxu0
        %v1320 = vadd.f32 %v1116, %v1319
        %1321 = vmatprep.mubr.bf16.mxu0 %v1060
        %1322 = vmatmul.mubr.bf16.gmra.mrb[0].mxu0 %v1059
        %v1323 = vpop.f32.mrb[0].mxu0
        %v1324 = vadd.f32 %v1112, %v1323
        %v1325 = vpop.f32.mrb[0].mxu0
        %v1326 = vadd.f32 %v1116, %v1325
        %v1327 = vpop.f32.mrb[0].mxu0
        %v1328 = vadd.f32 %v1112, %v1327
        %v1329 = vpop.f32.mrb[0].mxu0
        %v1330 = vadd.f32 %v1116, %v1329
        %1331 = vmatprep.mubr.bf16.mxu0 %v1062
        %1332 = vmatmul.mubr.bf16.gmra.mrb[0].mxu0 %v1061
        %v1333 = vpop.f32.mrb[0].mxu0
        %v1334 = vadd.f32 %v1112, %v1333
        %v1335 = vpop.f32.mrb[0].mxu0
        %v1336 = vadd.f32 %v1116, %v1335
        %v1337 = vpop.f32.mrb[0].mxu0
        %v1338 = vadd.f32 %v1112, %v1337
        %v1339 = vpop.f32.mrb[0].mxu0
        %v1340 = vadd.f32 %v1116, %v1339
        %1341 = vmatprep.mubr.bf16.mxu0 %v1064
        %1342 = vmatmul.mubr.bf16.gmra.mrb[0].mxu0 %v1063
        %v1343 = vpop.f32.mrb[0].mxu0
        %v1344 = vadd.f32 %v1112, %v1343
        %v1345 = vpop.f32.mrb[0].mxu0
        %v1346 = vadd.f32 %v1116, %v1345
        %v1347 = vpop.f32.mrb[0].mxu0
        %v1348 = vadd.f32 %v1112, %v1347
        %v1349 = vpop.f32.mrb[0].mxu0
        %v1350 = vadd.f32 %v1116, %v1349
        %1351 = vmatprep.mubr.bf16.mxu0 %v1066
        %1352 = vmatmul.mubr.bf16.gmra.mrb[0].mxu0 %v1065
        %v1353 = vpop.f32.mrb[0].mxu0
        %v1354 = vadd.f32 %v1112, %v1353
        %v1355 = vpop.f32.mrb[0].mxu0
        %v1356 = vadd.f32 %v1116, %v1355
        %v1357 = vpop.f32.mrb[0].mxu0
        %v1358 = vadd.f32 %v1112, %v1357
        %v1359 = vpop.f32.mrb[0].mxu0
        %v1360 = vadd.f32 %v1116, %v1359
        %1361 = vmatprep.mubr.bf16.mxu0 %v1068
        %1362 = vmatmul.mubr.bf16.gmra.mrb[0].mxu0 %v1067
        %v1363 = vpop.f32.mrb[0].mxu0
        %v1364 = vadd.f32 %v1112, %v1363
        %v1365 = vpop.f32.mrb[0].mxu0
        %v1366 = vadd.f32 %v1116, %v1365
        %v1367 = vpop.f32.mrb[0].mxu0
        %v1368 = vadd.f32 %v1112, %v1367
        %v1369 = vpop.f32.mrb[0].mxu0
        %v1370 = vadd.f32 %v1116, %v1369
        %1371 = vmatprep.mubr.bf16.mxu0 %v1070
        %1372 = vmatmul.mubr.bf16.gmra.mrb[0].mxu0 %v1069
        %v1373 = vpop.f32.mrb[0].mxu0
        %v1374 = vadd.f32 %v1112, %v1373
        %v1375 = vpop.f32.mrb[0].mxu0
        %v1376 = vadd.f32 %v1116, %v1375
        %v1377 = vpop.f32.mrb[0].mxu0
        %v1378 = vadd.f32 %v1112, %v1377
        %v1379 = vpop.f32.mrb[0].mxu0
        %v1380 = vadd.f32 %v1116, %v1379
        %1381 = vmatprep.mubr.bf16.mxu0 %v1072
        %1382 = vmatmul.mubr.bf16.gmra.mrb[0].mxu0 %v1071
        %v1383 = vpop.f32.mrb[0].mxu0
        %v1384 = vadd.f32 %v1112, %v1383
        %v1385 = vpop.f32.mrb[0].mxu0
        %v1386 = vadd.f32 %v1116, %v1385
        %v1387 = vpop.f32.mrb[0].mxu0
        %v1388 = vadd.f32 %v1112, %v1387
        %v1389 = vpop.f32.mrb[0].mxu0
        %v1390 = vadd.f32 %v1116, %v1389
        %1391 = vdwg.mxu0
        %v1392 = vmax.f32 %v1314, 0.0
        %v1393 = vmax.f32 %v1316, 0.0
        %v1394 = vmax.f32 %v1318, 0.0
        %v1395 = vmax.f32 %v1320, 0.0
        %v1396 = vmax.f32 %v1324, 0.0
        %v1397 = vmax.f32 %v1326, 0.0
        %v1398 = vmax.f32 %v1328, 0.0
        %v1399 = vmax.f32 %v1330, 0.0
        %v1400 = vmax.f32 %v1334, 0.0
        %v1401 = vmax.f32 %v1336, 0.0
        %v1402 = vmax.f32 %v1338, 0.0
        %v1403 = vmax.f32 %v1340, 0.0
        %v1404 = vmax.f32 %v1344, 0.0
        %v1405 = vmax.f32 %v1346, 0.0
        %v1406 = vmax.f32 %v1348, 0.0
        %v1407 = vmax.f32 %v1350, 0.0
        %v1408 = vmax.f32 %v1354, 0.0
        %v1409 = vmax.f32 %v1356, 0.0
        %v1410 = vmax.f32 %v1358, 0.0
        %v1411 = vmax.f32 %v1360, 0.0
        %v1412 = vmax.f32 %v1364, 0.0
        %v1413 = vmax.f32 %v1366, 0.0
        %v1414 = vmax.f32 %v1368, 0.0
        %v1415 = vmax.f32 %v1370, 0.0
        %v1416 = vmax.f32 %v1374, 0.0
        %v1417 = vmax.f32 %v1376, 0.0
        %v1418 = vmax.f32 %v1378, 0.0
        %v1419 = vmax.f32 %v1380, 0.0
        %v1420 = vmax.f32 %v1384, 0.0
        %v1421 = vmax.f32 %v1386, 0.0
        %v1422 = vmax.f32 %v1388, 0.0
        %v1423 = vmax.f32 %v1390, 0.0
        %v1424 = vpack.c.bf16 %v1394, %v1392
        %v1425 = vpack.c.bf16 %v1395, %v1393
        %v1426 = vpack.c.bf16 %v1398, %v1396
        %v1427 = vpack.c.bf16 %v1399, %v1397
        %v1428 = vpack.c.bf16 %v1402, %v1400
        %v1429 = vpack.c.bf16 %v1403, %v1401
        %v1430 = vpack.c.bf16 %v1406, %v1404
        %v1431 = vpack.c.bf16 %v1407, %v1405
        %v1432 = vpack.c.bf16 %v1410, %v1408
        %v1433 = vpack.c.bf16 %v1411, %v1409
        %v1434 = vpack.c.bf16 %v1414, %v1412
        %v1435 = vpack.c.bf16 %v1415, %v1413
        %v1436 = vpack.c.bf16 %v1418, %v1416
        %v1437 = vpack.c.bf16 %v1419, %v1417
        %v1438 = vpack.c.bf16 %v1422, %v1420
        %v1439 = vpack.c.bf16 %v1423, %v1421
        %s1440 = scalar_lea.vmem [#allocation2], 512
        %v1441 = vld [vmem:[%s1440] sm:$0xff]
        %v1442 = vld [vmem:[%s1440 + $0x8] sm:$0xff]
        %v1443 = vld [vmem:[%s1440 + $0x10] sm:$0xff]
        %v1444 = vld [vmem:[%s1440 + $0x18] sm:$0xff]
        %v1445 = vld [vmem:[%s1440 + $0x20] sm:$0xff]
        %v1446 = vld [vmem:[%s1440 + $0x28] sm:$0xff]
        %v1447 = vld [vmem:[%s1440 + $0x30] sm:$0xff]
        %v1448 = vld [vmem:[%s1440 + $0x38] sm:$0xff]
        %v1449 = vld [vmem:[%s1440 + $0x40] sm:$0xff]
        %v1450 = vld [vmem:[%s1440 + $0x48] sm:$0xff]
        %v1451 = vld [vmem:[%s1440 + $0x50] sm:$0xff]
        %v1452 = vld [vmem:[%s1440 + $0x58] sm:$0xff]
        %v1453 = vld [vmem:[%s1440 + $0x60] sm:$0xff]
        %v1454 = vld [vmem:[%s1440 + $0x68] sm:$0xff]
        %v1455 = vld [vmem:[%s1440 + $0x70] sm:$0xff]
        %v1456 = vld [vmem:[%s1440 + $0x78] sm:$0xff]
        %v1457 = vld [vmem:[%s1440 + $0x80] sm:$0xff]
        %v1458 = vld [vmem:[%s1440 + $0x88] sm:$0xff]
        %v1459 = vld [vmem:[%s1440 + $0x90] sm:$0xff]
        %v1460 = vld [vmem:[%s1440 + $0x98] sm:$0xff]
        %v1461 = vld [vmem:[%s1440 + $0xa0] sm:$0xff]
        %v1462 = vld [vmem:[%s1440 + $0xa8] sm:$0xff]
        %v1463 = vld [vmem:[%s1440 + $0xb0] sm:$0xff]
        %v1464 = vld [vmem:[%s1440 + $0xb8] sm:$0xff]
        %v1465 = vld [vmem:[%s1440 + $0xc0] sm:$0xff]
        %v1466 = vld [vmem:[%s1440 + $0xc8] sm:$0xff]
        %v1467 = vld [vmem:[%s1440 + $0xd0] sm:$0xff]
        %v1468 = vld [vmem:[%s1440 + $0xd8] sm:$0xff]
        %v1469 = vld [vmem:[%s1440 + $0xe0] sm:$0xff]
        %v1470 = vld [vmem:[%s1440 + $0xe8] sm:$0xff]
        %v1471 = vld [vmem:[%s1440 + $0xf0] sm:$0xff]
        %v1472 = vld [vmem:[%s1440 + $0xf8] sm:$0xff]
        %s1473 = scalar_lea.vmem %s3, 2
        %v1474 = vld [vmem:[%s1473] ss:$8 sm:$0x3]
        %v1476 = vlaneseq
        %v1477 = vshrl.u32 %v1476, 7
        %v1478 = vsub.s32 0, %v1477
        %v1479 = vrot.slane %v1474, %v1478
        %v1480 = vlaneseq
        %v1481 = vshrl.u32 %v1480, 7
        %v1482 = vsub.s32 1, %v1481
        %v1483 = vrot.slane %v1474, %v1482
        %v1518 = vunpack.c.l.b16 %v1441
        %v1519 = vunpack.c.h.b16 %v1441
        %v1520 = vunpack.c.l.b16 %v1442
        %v1521 = vunpack.c.h.b16 %v1442
        %v1522 = vunpack.c.l.b16 %v1443
        %v1523 = vunpack.c.h.b16 %v1443
        %v1524 = vunpack.c.l.b16 %v1444
        %v1525 = vunpack.c.h.b16 %v1444
        %v1526 = vunpack.c.l.b16 %v1445
        %v1527 = vunpack.c.h.b16 %v1445
        %v1528 = vunpack.c.l.b16 %v1446
        %v1529 = vunpack.c.h.b16 %v1446
        %v1530 = vunpack.c.l.b16 %v1447
        %v1531 = vunpack.c.h.b16 %v1447
        %v1532 = vunpack.c.l.b16 %v1448
        %v1533 = vunpack.c.h.b16 %v1448
        %v1534 = vunpack.c.l.b16 %v1449
        %v1535 = vunpack.c.h.b16 %v1449
        %v1536 = vunpack.c.l.b16 %v1450
        %v1537 = vunpack.c.h.b16 %v1450
        %v1538 = vunpack.c.l.b16 %v1451
        %v1539 = vunpack.c.h.b16 %v1451
        %v1540 = vunpack.c.l.b16 %v1452
        %v1541 = vunpack.c.h.b16 %v1452
        %v1542 = vunpack.c.l.b16 %v1453
        %v1543 = vunpack.c.h.b16 %v1453
        %v1544 = vunpack.c.l.b16 %v1454
        %v1545 = vunpack.c.h.b16 %v1454
        %v1546 = vunpack.c.l.b16 %v1455
        %v1547 = vunpack.c.h.b16 %v1455
        %v1548 = vunpack.c.l.b16 %v1456
        %v1549 = vunpack.c.h.b16 %v1456
        %v1550 = vunpack.c.l.b16 %v1457
        %v1551 = vunpack.c.h.b16 %v1457
        %v1552 = vunpack.c.l.b16 %v1458
        %v1553 = vunpack.c.h.b16 %v1458
        %v1554 = vunpack.c.l.b16 %v1459
        %v1555 = vunpack.c.h.b16 %v1459
        %v1556 = vunpack.c.l.b16 %v1460
        %v1557 = vunpack.c.h.b16 %v1460
        %v1558 = vunpack.c.l.b16 %v1461
        %v1559 = vunpack.c.h.b16 %v1461
        %v1560 = vunpack.c.l.b16 %v1462
        %v1561 = vunpack.c.h.b16 %v1462
        %v1562 = vunpack.c.l.b16 %v1463
        %v1563 = vunpack.c.h.b16 %v1463
        %v1564 = vunpack.c.l.b16 %v1464
        %v1565 = vunpack.c.h.b16 %v1464
        %v1566 = vunpack.c.l.b16 %v1465
        %v1567 = vunpack.c.h.b16 %v1465
        %v1568 = vunpack.c.l.b16 %v1466
        %v1569 = vunpack.c.h.b16 %v1466
        %v1570 = vunpack.c.l.b16 %v1467
        %v1571 = vunpack.c.h.b16 %v1467
        %v1572 = vunpack.c.l.b16 %v1468
        %v1573 = vunpack.c.h.b16 %v1468
        %v1574 = vunpack.c.l.b16 %v1469
        %v1575 = vunpack.c.h.b16 %v1469
        %v1576 = vunpack.c.l.b16 %v1470
        %v1577 = vunpack.c.h.b16 %v1470
        %v1578 = vunpack.c.l.b16 %v1471
        %v1579 = vunpack.c.h.b16 %v1471
        %v1580 = vunpack.c.l.b16 %v1472
        %v1581 = vunpack.c.h.b16 %v1472
        %v1582 = vpack.c.b16 %v1520, %v1518
        %v1583 = vpack.c.b16 %v1521, %v1519
        %v1584 = vpack.c.b16 %v1524, %v1522
        %v1585 = vpack.c.b16 %v1525, %v1523
        %v1586 = vpack.c.b16 %v1528, %v1526
        %v1587 = vpack.c.b16 %v1529, %v1527
        %v1588 = vpack.c.b16 %v1532, %v1530
        %v1589 = vpack.c.b16 %v1533, %v1531
        %v1590 = vpack.c.b16 %v1536, %v1534
        %v1591 = vpack.c.b16 %v1537, %v1535
        %v1592 = vpack.c.b16 %v1540, %v1538
        %v1593 = vpack.c.b16 %v1541, %v1539
        %v1594 = vpack.c.b16 %v1544, %v1542
        %v1595 = vpack.c.b16 %v1545, %v1543
        %v1596 = vpack.c.b16 %v1548, %v1546
        %v1597 = vpack.c.b16 %v1549, %v1547
        %v1598 = vpack.c.b16 %v1552, %v1550
        %v1599 = vpack.c.b16 %v1553, %v1551
        %v1600 = vpack.c.b16 %v1556, %v1554
        %v1601 = vpack.c.b16 %v1557, %v1555
        %v1602 = vpack.c.b16 %v1560, %v1558
        %v1603 = vpack.c.b16 %v1561, %v1559
        %v1604 = vpack.c.b16 %v1564, %v1562
        %v1605 = vpack.c.b16 %v1565, %v1563
        %v1606 = vpack.c.b16 %v1568, %v1566
        %v1607 = vpack.c.b16 %v1569, %v1567
        %v1608 = vpack.c.b16 %v1572, %v1570
        %v1609 = vpack.c.b16 %v1573, %v1571
        %v1610 = vpack.c.b16 %v1576, %v1574
        %v1611 = vpack.c.b16 %v1577, %v1575
        %v1612 = vpack.c.b16 %v1580, %v1578
        %v1613 = vpack.c.b16 %v1581, %v1579
        %1646 = vmatprep.subr.bf16.mxu0 %v1583
        %1647 = vmatpush1.bf16.msra.mxu0 %v1582
        %1648 = vmatprep.subr.bf16.mxu0 %v1585
        %1649 = vmatpush1.bf16.msra.mxu0 %v1584
        %1650 = vmatprep.subr.bf16.mxu0 %v1587
        %1651 = vmatpush1.bf16.msra.mxu0 %v1586
        %1652 = vmatprep.subr.bf16.mxu0 %v1589
        %1653 = vmatpush1.bf16.msra.mxu0 %v1588
        %1654 = vmatprep.subr.bf16.mxu0 %v1591
        %1655 = vmatpush1.bf16.msra.mxu0 %v1590
        %1656 = vmatprep.subr.bf16.mxu0 %v1593
        %1657 = vmatpush1.bf16.msra.mxu0 %v1592
        %1658 = vmatprep.subr.bf16.mxu0 %v1595
        %1659 = vmatpush1.bf16.msra.mxu0 %v1594
        %1660 = vmatprep.subr.bf16.mxu0 %v1597
        %1661 = vmatpush1.bf16.msra.mxu0 %v1596
        %1662 = vmatprep.subr.bf16.mxu0 %v1599
        %1663 = vmatpush1.bf16.msra.mxu0 %v1598
        %1664 = vmatprep.subr.bf16.mxu0 %v1601
        %1665 = vmatpush1.bf16.msra.mxu0 %v1600
        %1666 = vmatprep.subr.bf16.mxu0 %v1603
        %1667 = vmatpush1.bf16.msra.mxu0 %v1602
        %1668 = vmatprep.subr.bf16.mxu0 %v1605
        %1669 = vmatpush1.bf16.msra.mxu0 %v1604
        %1670 = vmatprep.subr.bf16.mxu0 %v1607
        %1671 = vmatpush1.bf16.msra.mxu0 %v1606
        %1672 = vmatprep.subr.bf16.mxu0 %v1609
        %1673 = vmatpush1.bf16.msra.mxu0 %v1608
        %1674 = vmatprep.subr.bf16.mxu0 %v1611
        %1675 = vmatpush1.bf16.msra.mxu0 %v1610
        %1676 = vmatprep.subr.bf16.mxu0 %v1613
        %1677 = vmatpush1.bf16.msra.mxu0 %v1612
        %1678 = vmatprep.mubr.bf16.mxu0 %v1425
        %1679 = vmatmul.mubr.bf16.gmra.mrb[0].mxu0 %v1424
        %v1680 = vpop.f32.mrb[0].mxu0
        %v1681 = vadd.f32 %v1479, %v1680
        %v1682 = vpop.f32.mrb[0].mxu0
        %v1683 = vadd.f32 %v1483, %v1682
        %v1684 = vpop.f32.mrb[0].mxu0
        %v1685 = vadd.f32 %v1479, %v1684
        %v1686 = vpop.f32.mrb[0].mxu0
        %v1687 = vadd.f32 %v1483, %v1686
        %1688 = vmatprep.mubr.bf16.mxu0 %v1427
        %1689 = vmatmul.mubr.bf16.gmra.mrb[0].mxu0 %v1426
        %v1690 = vpop.f32.mrb[0].mxu0
        %v1691 = vadd.f32 %v1479, %v1690
        %v1692 = vpop.f32.mrb[0].mxu0
        %v1693 = vadd.f32 %v1483, %v1692
        %v1694 = vpop.f32.mrb[0].mxu0
        %v1695 = vadd.f32 %v1479, %v1694
        %v1696 = vpop.f32.mrb[0].mxu0
        %v1697 = vadd.f32 %v1483, %v1696
        %1698 = vmatprep.mubr.bf16.mxu0 %v1429
        %1699 = vmatmul.mubr.bf16.gmra.mrb[0].mxu0 %v1428
        %v1700 = vpop.f32.mrb[0].mxu0
        %v1701 = vadd.f32 %v1479, %v1700
        %v1702 = vpop.f32.mrb[0].mxu0
        %v1703 = vadd.f32 %v1483, %v1702
        %v1704 = vpop.f32.mrb[0].mxu0
        %v1705 = vadd.f32 %v1479, %v1704
        %v1706 = vpop.f32.mrb[0].mxu0
        %v1707 = vadd.f32 %v1483, %v1706
        %1708 = vmatprep.mubr.bf16.mxu0 %v1431
        %1709 = vmatmul.mubr.bf16.gmra.mrb[0].mxu0 %v1430
        %v1710 = vpop.f32.mrb[0].mxu0
        %v1711 = vadd.f32 %v1479, %v1710
        %v1712 = vpop.f32.mrb[0].mxu0
        %v1713 = vadd.f32 %v1483, %v1712
        %v1714 = vpop.f32.mrb[0].mxu0
        %v1715 = vadd.f32 %v1479, %v1714
        %v1716 = vpop.f32.mrb[0].mxu0
        %v1717 = vadd.f32 %v1483, %v1716
        %1718 = vmatprep.mubr.bf16.mxu0 %v1433
        %1719 = vmatmul.mubr.bf16.gmra.mrb[0].mxu0 %v1432
        %v1720 = vpop.f32.mrb[0].mxu0
        %v1721 = vadd.f32 %v1479, %v1720
        %v1722 = vpop.f32.mrb[0].mxu0
        %v1723 = vadd.f32 %v1483, %v1722
        %v1724 = vpop.f32.mrb[0].mxu0
        %v1725 = vadd.f32 %v1479, %v1724
        %v1726 = vpop.f32.mrb[0].mxu0
        %v1727 = vadd.f32 %v1483, %v1726
        %1728 = vmatprep.mubr.bf16.mxu0 %v1435
        %1729 = vmatmul.mubr.bf16.gmra.mrb[0].mxu0 %v1434
        %v1730 = vpop.f32.mrb[0].mxu0
        %v1731 = vadd.f32 %v1479, %v1730
        %v1732 = vpop.f32.mrb[0].mxu0
        %v1733 = vadd.f32 %v1483, %v1732
        %v1734 = vpop.f32.mrb[0].mxu0
        %v1735 = vadd.f32 %v1479, %v1734
        %v1736 = vpop.f32.mrb[0].mxu0
        %v1737 = vadd.f32 %v1483, %v1736
        %1738 = vmatprep.mubr.bf16.mxu0 %v1437
        %1739 = vmatmul.mubr.bf16.gmra.mrb[0].mxu0 %v1436
        %v1740 = vpop.f32.mrb[0].mxu0
        %v1741 = vadd.f32 %v1479, %v1740
        %v1742 = vpop.f32.mrb[0].mxu0
        %v1743 = vadd.f32 %v1483, %v1742
        %v1744 = vpop.f32.mrb[0].mxu0
        %v1745 = vadd.f32 %v1479, %v1744
        %v1746 = vpop.f32.mrb[0].mxu0
        %v1747 = vadd.f32 %v1483, %v1746
        %1748 = vmatprep.mubr.bf16.mxu0 %v1439
        %1749 = vmatmul.mubr.bf16.gmra.mrb[0].mxu0 %v1438
        %v1750 = vpop.f32.mrb[0].mxu0
        %v1751 = vadd.f32 %v1479, %v1750
        %v1752 = vpop.f32.mrb[0].mxu0
        %v1753 = vadd.f32 %v1483, %v1752
        %v1754 = vpop.f32.mrb[0].mxu0
        %v1755 = vadd.f32 %v1479, %v1754
        %v1756 = vpop.f32.mrb[0].mxu0
        %v1757 = vadd.f32 %v1483, %v1756
        %1758 = vdwg.mxu0
        %v1759 = vmax.f32 %v1681, 0.0
        %v1760 = vmax.f32 %v1683, 0.0
        %v1761 = vmax.f32 %v1685, 0.0
        %v1762 = vmax.f32 %v1687, 0.0
        %v1763 = vmax.f32 %v1691, 0.0
        %v1764 = vmax.f32 %v1693, 0.0
        %v1765 = vmax.f32 %v1695, 0.0
        %v1766 = vmax.f32 %v1697, 0.0
        %v1767 = vmax.f32 %v1701, 0.0
        %v1768 = vmax.f32 %v1703, 0.0
        %v1769 = vmax.f32 %v1705, 0.0
        %v1770 = vmax.f32 %v1707, 0.0
        %v1771 = vmax.f32 %v1711, 0.0
        %v1772 = vmax.f32 %v1713, 0.0
        %v1773 = vmax.f32 %v1715, 0.0
        %v1774 = vmax.f32 %v1717, 0.0
        %v1775 = vmax.f32 %v1721, 0.0
        %v1776 = vmax.f32 %v1723, 0.0
        %v1777 = vmax.f32 %v1725, 0.0
        %v1778 = vmax.f32 %v1727, 0.0
        %v1779 = vmax.f32 %v1731, 0.0
        %v1780 = vmax.f32 %v1733, 0.0
        %v1781 = vmax.f32 %v1735, 0.0
        %v1782 = vmax.f32 %v1737, 0.0
        %v1783 = vmax.f32 %v1741, 0.0
        %v1784 = vmax.f32 %v1743, 0.0
        %v1785 = vmax.f32 %v1745, 0.0
        %v1786 = vmax.f32 %v1747, 0.0
        %v1787 = vmax.f32 %v1751, 0.0
        %v1788 = vmax.f32 %v1753, 0.0
        %v1789 = vmax.f32 %v1755, 0.0
        %v1790 = vmax.f32 %v1757, 0.0
        %v1791 = vpack.c.bf16 %v1761, %v1759
        %v1792 = vpack.c.bf16 %v1762, %v1760
        %v1793 = vpack.c.bf16 %v1765, %v1763
        %v1794 = vpack.c.bf16 %v1766, %v1764
        %v1795 = vpack.c.bf16 %v1769, %v1767
        %v1796 = vpack.c.bf16 %v1770, %v1768
        %v1797 = vpack.c.bf16 %v1773, %v1771
        %v1798 = vpack.c.bf16 %v1774, %v1772
        %v1799 = vpack.c.bf16 %v1777, %v1775
        %v1800 = vpack.c.bf16 %v1778, %v1776
        %v1801 = vpack.c.bf16 %v1781, %v1779
        %v1802 = vpack.c.bf16 %v1782, %v1780
        %v1803 = vpack.c.bf16 %v1785, %v1783
        %v1804 = vpack.c.bf16 %v1786, %v1784
        %v1805 = vpack.c.bf16 %v1789, %v1787
        %v1806 = vpack.c.bf16 %v1790, %v1788
        %s1807 = scalar_lea.vmem [#allocation2], 768
        %v1808 = vld [vmem:[%s1807] sm:$0xff]
        %v1809 = vld [vmem:[%s1807 + $0x8] sm:$0xff]
        %v1810 = vld [vmem:[%s1807 + $0x10] sm:$0xff]
        %v1811 = vld [vmem:[%s1807 + $0x18] sm:$0xff]
        %v1812 = vld [vmem:[%s1807 + $0x20] sm:$0xff]
        %v1813 = vld [vmem:[%s1807 + $0x28] sm:$0xff]
        %v1814 = vld [vmem:[%s1807 + $0x30] sm:$0xff]
        %v1815 = vld [vmem:[%s1807 + $0x38] sm:$0xff]
        %v1816 = vld [vmem:[%s1807 + $0x40] sm:$0xff]
        %v1817 = vld [vmem:[%s1807 + $0x48] sm:$0xff]
        %v1818 = vld [vmem:[%s1807 + $0x50] sm:$0xff]
        %v1819 = vld [vmem:[%s1807 + $0x58] sm:$0xff]
        %v1820 = vld [vmem:[%s1807 + $0x60] sm:$0xff]
        %v1821 = vld [vmem:[%s1807 + $0x68] sm:$0xff]
        %v1822 = vld [vmem:[%s1807 + $0x70] sm:$0xff]
        %v1823 = vld [vmem:[%s1807 + $0x78] sm:$0xff]
        %v1824 = vld [vmem:[%s1807 + $0x80] sm:$0xff]
        %v1825 = vld [vmem:[%s1807 + $0x88] sm:$0xff]
        %v1826 = vld [vmem:[%s1807 + $0x90] sm:$0xff]
        %v1827 = vld [vmem:[%s1807 + $0x98] sm:$0xff]
        %v1828 = vld [vmem:[%s1807 + $0xa0] sm:$0xff]
        %v1829 = vld [vmem:[%s1807 + $0xa8] sm:$0xff]
        %v1830 = vld [vmem:[%s1807 + $0xb0] sm:$0xff]
        %v1831 = vld [vmem:[%s1807 + $0xb8] sm:$0xff]
        %v1832 = vld [vmem:[%s1807 + $0xc0] sm:$0xff]
        %v1833 = vld [vmem:[%s1807 + $0xc8] sm:$0xff]
        %v1834 = vld [vmem:[%s1807 + $0xd0] sm:$0xff]
        %v1835 = vld [vmem:[%s1807 + $0xd8] sm:$0xff]
        %v1836 = vld [vmem:[%s1807 + $0xe0] sm:$0xff]
        %v1837 = vld [vmem:[%s1807 + $0xe8] sm:$0xff]
        %v1838 = vld [vmem:[%s1807 + $0xf0] sm:$0xff]
        %v1839 = vld [vmem:[%s1807 + $0xf8] sm:$0xff]
        %s1840 = scalar_lea.vmem %s3, 3
        %v1841 = vld [vmem:[%s1840] ss:$8 sm:$0x3]
        %v1843 = vlaneseq
        %v1844 = vshrl.u32 %v1843, 7
        %v1845 = vsub.s32 0, %v1844
        %v1846 = vrot.slane %v1841, %v1845
        %v1847 = vlaneseq
        %v1848 = vshrl.u32 %v1847, 7
        %v1849 = vsub.s32 1, %v1848
        %v1850 = vrot.slane %v1841, %v1849
        %v1885 = vunpack.c.l.b16 %v1808
        %v1886 = vunpack.c.h.b16 %v1808
        %v1887 = vunpack.c.l.b16 %v1809
        %v1888 = vunpack.c.h.b16 %v1809
        %v1889 = vunpack.c.l.b16 %v1810
        %v1890 = vunpack.c.h.b16 %v1810
        %v1891 = vunpack.c.l.b16 %v1811
        %v1892 = vunpack.c.h.b16 %v1811
        %v1893 = vunpack.c.l.b16 %v1812
        %v1894 = vunpack.c.h.b16 %v1812
        %v1895 = vunpack.c.l.b16 %v1813
        %v1896 = vunpack.c.h.b16 %v1813
        %v1897 = vunpack.c.l.b16 %v1814
        %v1898 = vunpack.c.h.b16 %v1814
        %v1899 = vunpack.c.l.b16 %v1815
        %v1900 = vunpack.c.h.b16 %v1815
        %v1901 = vunpack.c.l.b16 %v1816
        %v1902 = vunpack.c.h.b16 %v1816
        %v1903 = vunpack.c.l.b16 %v1817
        %v1904 = vunpack.c.h.b16 %v1817
        %v1905 = vunpack.c.l.b16 %v1818
        %v1906 = vunpack.c.h.b16 %v1818
        %v1907 = vunpack.c.l.b16 %v1819
        %v1908 = vunpack.c.h.b16 %v1819
        %v1909 = vunpack.c.l.b16 %v1820
        %v1910 = vunpack.c.h.b16 %v1820
        %v1911 = vunpack.c.l.b16 %v1821
        %v1912 = vunpack.c.h.b16 %v1821
        %v1913 = vunpack.c.l.b16 %v1822
        %v1914 = vunpack.c.h.b16 %v1822
        %v1915 = vunpack.c.l.b16 %v1823
        %v1916 = vunpack.c.h.b16 %v1823
        %v1917 = vunpack.c.l.b16 %v1824
        %v1918 = vunpack.c.h.b16 %v1824
        %v1919 = vunpack.c.l.b16 %v1825
        %v1920 = vunpack.c.h.b16 %v1825
        %v1921 = vunpack.c.l.b16 %v1826
        %v1922 = vunpack.c.h.b16 %v1826
        %v1923 = vunpack.c.l.b16 %v1827
        %v1924 = vunpack.c.h.b16 %v1827
        %v1925 = vunpack.c.l.b16 %v1828
        %v1926 = vunpack.c.h.b16 %v1828
        %v1927 = vunpack.c.l.b16 %v1829
        %v1928 = vunpack.c.h.b16 %v1829
        %v1929 = vunpack.c.l.b16 %v1830
        %v1930 = vunpack.c.h.b16 %v1830
        %v1931 = vunpack.c.l.b16 %v1831
        %v1932 = vunpack.c.h.b16 %v1831
        %v1933 = vunpack.c.l.b16 %v1832
        %v1934 = vunpack.c.h.b16 %v1832
        %v1935 = vunpack.c.l.b16 %v1833
        %v1936 = vunpack.c.h.b16 %v1833
        %v1937 = vunpack.c.l.b16 %v1834
        %v1938 = vunpack.c.h.b16 %v1834
        %v1939 = vunpack.c.l.b16 %v1835
        %v1940 = vunpack.c.h.b16 %v1835
        %v1941 = vunpack.c.l.b16 %v1836
        %v1942 = vunpack.c.h.b16 %v1836
        %v1943 = vunpack.c.l.b16 %v1837
        %v1944 = vunpack.c.h.b16 %v1837
        %v1945 = vunpack.c.l.b16 %v1838
        %v1946 = vunpack.c.h.b16 %v1838
        %v1947 = vunpack.c.l.b16 %v1839
        %v1948 = vunpack.c.h.b16 %v1839
        %v1949 = vpack.c.b16 %v1887, %v1885
        %v1950 = vpack.c.b16 %v1888, %v1886
        %v1951 = vpack.c.b16 %v1891, %v1889
        %v1952 = vpack.c.b16 %v1892, %v1890
        %v1953 = vpack.c.b16 %v1895, %v1893
        %v1954 = vpack.c.b16 %v1896, %v1894
        %v1955 = vpack.c.b16 %v1899, %v1897
        %v1956 = vpack.c.b16 %v1900, %v1898
        %v1957 = vpack.c.b16 %v1903, %v1901
        %v1958 = vpack.c.b16 %v1904, %v1902
        %v1959 = vpack.c.b16 %v1907, %v1905
        %v1960 = vpack.c.b16 %v1908, %v1906
        %v1961 = vpack.c.b16 %v1911, %v1909
        %v1962 = vpack.c.b16 %v1912, %v1910
        %v1963 = vpack.c.b16 %v1915, %v1913
        %v1964 = vpack.c.b16 %v1916, %v1914
        %v1965 = vpack.c.b16 %v1919, %v1917
        %v1966 = vpack.c.b16 %v1920, %v1918
        %v1967 = vpack.c.b16 %v1923, %v1921
        %v1968 = vpack.c.b16 %v1924, %v1922
        %v1969 = vpack.c.b16 %v1927, %v1925
        %v1970 = vpack.c.b16 %v1928, %v1926
        %v1971 = vpack.c.b16 %v1931, %v1929
        %v1972 = vpack.c.b16 %v1932, %v1930
        %v1973 = vpack.c.b16 %v1935, %v1933
        %v1974 = vpack.c.b16 %v1936, %v1934
        %v1975 = vpack.c.b16 %v1939, %v1937
        %v1976 = vpack.c.b16 %v1940, %v1938
        %v1977 = vpack.c.b16 %v1943, %v1941
        %v1978 = vpack.c.b16 %v1944, %v1942
        %v1979 = vpack.c.b16 %v1947, %v1945
        %v1980 = vpack.c.b16 %v1948, %v1946
        %2013 = vmatprep.subr.bf16.mxu0 %v1950
        %2014 = vmatpush1.bf16.msra.mxu0 %v1949
        %2015 = vmatprep.subr.bf16.mxu0 %v1952
        %2016 = vmatpush1.bf16.msra.mxu0 %v1951
        %2017 = vmatprep.subr.bf16.mxu0 %v1954
        %2018 = vmatpush1.bf16.msra.mxu0 %v1953
        %2019 = vmatprep.subr.bf16.mxu0 %v1956
        %2020 = vmatpush1.bf16.msra.mxu0 %v1955
        %2021 = vmatprep.subr.bf16.mxu0 %v1958
        %2022 = vmatpush1.bf16.msra.mxu0 %v1957
        %2023 = vmatprep.subr.bf16.mxu0 %v1960
        %2024 = vmatpush1.bf16.msra.mxu0 %v1959
        %2025 = vmatprep.subr.bf16.mxu0 %v1962
        %2026 = vmatpush1.bf16.msra.mxu0 %v1961
        %2027 = vmatprep.subr.bf16.mxu0 %v1964
        %2028 = vmatpush1.bf16.msra.mxu0 %v1963
        %2029 = vmatprep.subr.bf16.mxu0 %v1966
        %2030 = vmatpush1.bf16.msra.mxu0 %v1965
        %2031 = vmatprep.subr.bf16.mxu0 %v1968
        %2032 = vmatpush1.bf16.msra.mxu0 %v1967
        %2033 = vmatprep.subr.bf16.mxu0 %v1970
        %2034 = vmatpush1.bf16.msra.mxu0 %v1969
        %2035 = vmatprep.subr.bf16.mxu0 %v1972
        %2036 = vmatpush1.bf16.msra.mxu0 %v1971
        %2037 = vmatprep.subr.bf16.mxu0 %v1974
        %2038 = vmatpush1.bf16.msra.mxu0 %v1973
        %2039 = vmatprep.subr.bf16.mxu0 %v1976
        %2040 = vmatpush1.bf16.msra.mxu0 %v1975
        %2041 = vmatprep.subr.bf16.mxu0 %v1978
        %2042 = vmatpush1.bf16.msra.mxu0 %v1977
        %2043 = vmatprep.subr.bf16.mxu0 %v1980
        %2044 = vmatpush1.bf16.msra.mxu0 %v1979
        %2045 = vmatprep.mubr.bf16.mxu0 %v1792
        %2046 = vmatmul.mubr.bf16.gmra.mrb[0].mxu0 %v1791
        %v2047 = vpop.f32.mrb[0].mxu0
        %v2048 = vadd.f32 %v1846, %v2047
        %v2049 = vpop.f32.mrb[0].mxu0
        %v2050 = vadd.f32 %v1850, %v2049
        %v2051 = vpop.f32.mrb[0].mxu0
        %v2052 = vadd.f32 %v1846, %v2051
        %v2053 = vpop.f32.mrb[0].mxu0
        %v2054 = vadd.f32 %v1850, %v2053
        %2055 = vmatprep.mubr.bf16.mxu0 %v1794
        %2056 = vmatmul.mubr.bf16.gmra.mrb[0].mxu0 %v1793
        %v2057 = vpop.f32.mrb[0].mxu0
        %v2058 = vadd.f32 %v1846, %v2057
        %v2059 = vpop.f32.mrb[0].mxu0
        %v2060 = vadd.f32 %v1850, %v2059
        %v2061 = vpop.f32.mrb[0].mxu0
        %v2062 = vadd.f32 %v1846, %v2061
        %v2063 = vpop.f32.mrb[0].mxu0
        %v2064 = vadd.f32 %v1850, %v2063
        %2065 = vmatprep.mubr.bf16.mxu0 %v1796
        %2066 = vmatmul.mubr.bf16.gmra.mrb[0].mxu0 %v1795
        %v2067 = vpop.f32.mrb[0].mxu0
        %v2068 = vadd.f32 %v1846, %v2067
        %v2069 = vpop.f32.mrb[0].mxu0
        %v2070 = vadd.f32 %v1850, %v2069
        %v2071 = vpop.f32.mrb[0].mxu0
        %v2072 = vadd.f32 %v1846, %v2071
        %v2073 = vpop.f32.mrb[0].mxu0
        %v2074 = vadd.f32 %v1850, %v2073
        %2075 = vmatprep.mubr.bf16.mxu0 %v1798
        %2076 = vmatmul.mubr.bf16.gmra.mrb[0].mxu0 %v1797
        %v2077 = vpop.f32.mrb[0].mxu0
        %v2078 = vadd.f32 %v1846, %v2077
        %v2079 = vpop.f32.mrb[0].mxu0
        %v2080 = vadd.f32 %v1850, %v2079
        %v2081 = vpop.f32.mrb[0].mxu0
        %v2082 = vadd.f32 %v1846, %v2081
        %v2083 = vpop.f32.mrb[0].mxu0
        %v2084 = vadd.f32 %v1850, %v2083
        %2085 = vmatprep.mubr.bf16.mxu0 %v1800
        %2086 = vmatmul.mubr.bf16.gmra.mrb[0].mxu0 %v1799
        %v2087 = vpop.f32.mrb[0].mxu0
        %v2088 = vadd.f32 %v1846, %v2087
        %v2089 = vpop.f32.mrb[0].mxu0
        %v2090 = vadd.f32 %v1850, %v2089
        %v2091 = vpop.f32.mrb[0].mxu0
        %v2092 = vadd.f32 %v1846, %v2091
        %v2093 = vpop.f32.mrb[0].mxu0
        %v2094 = vadd.f32 %v1850, %v2093
        %2095 = vmatprep.mubr.bf16.mxu0 %v1802
        %2096 = vmatmul.mubr.bf16.gmra.mrb[0].mxu0 %v1801
        %v2097 = vpop.f32.mrb[0].mxu0
        %v2098 = vadd.f32 %v1846, %v2097
        %v2099 = vpop.f32.mrb[0].mxu0
        %v2100 = vadd.f32 %v1850, %v2099
        %v2101 = vpop.f32.mrb[0].mxu0
        %v2102 = vadd.f32 %v1846, %v2101
        %v2103 = vpop.f32.mrb[0].mxu0
        %v2104 = vadd.f32 %v1850, %v2103
        %2105 = vmatprep.mubr.bf16.mxu0 %v1804
        %2106 = vmatmul.mubr.bf16.gmra.mrb[0].mxu0 %v1803
        %v2107 = vpop.f32.mrb[0].mxu0
        %v2108 = vadd.f32 %v1846, %v2107
        %v2109 = vpop.f32.mrb[0].mxu0
        %v2110 = vadd.f32 %v1850, %v2109
        %v2111 = vpop.f32.mrb[0].mxu0
        %v2112 = vadd.f32 %v1846, %v2111
        %v2113 = vpop.f32.mrb[0].mxu0
        %v2114 = vadd.f32 %v1850, %v2113
        %2115 = vmatprep.mubr.bf16.mxu0 %v1806
        %2116 = vmatmul.mubr.bf16.gmra.mrb[0].mxu0 %v1805
        %v2117 = vpop.f32.mrb[0].mxu0
        %v2118 = vadd.f32 %v1846, %v2117
        %v2119 = vpop.f32.mrb[0].mxu0
        %v2120 = vadd.f32 %v1850, %v2119
        %v2121 = vpop.f32.mrb[0].mxu0
        %v2122 = vadd.f32 %v1846, %v2121
        %v2123 = vpop.f32.mrb[0].mxu0
        %v2124 = vadd.f32 %v1850, %v2123
        %2125 = vdwg.mxu0
        %v2126 = vmax.f32 %v2048, 0.0
        %v2127 = vmax.f32 %v2050, 0.0
        %v2128 = vmax.f32 %v2052, 0.0
        %v2129 = vmax.f32 %v2054, 0.0
        %v2130 = vmax.f32 %v2058, 0.0
        %v2131 = vmax.f32 %v2060, 0.0
        %v2132 = vmax.f32 %v2062, 0.0
        %v2133 = vmax.f32 %v2064, 0.0
        %v2134 = vmax.f32 %v2068, 0.0
        %v2135 = vmax.f32 %v2070, 0.0
        %v2136 = vmax.f32 %v2072, 0.0
        %v2137 = vmax.f32 %v2074, 0.0
        %v2138 = vmax.f32 %v2078, 0.0
        %v2139 = vmax.f32 %v2080, 0.0
        %v2140 = vmax.f32 %v2082, 0.0
        %v2141 = vmax.f32 %v2084, 0.0
        %v2142 = vmax.f32 %v2088, 0.0
        %v2143 = vmax.f32 %v2090, 0.0
        %v2144 = vmax.f32 %v2092, 0.0
        %v2145 = vmax.f32 %v2094, 0.0
        %v2146 = vmax.f32 %v2098, 0.0
        %v2147 = vmax.f32 %v2100, 0.0
        %v2148 = vmax.f32 %v2102, 0.0
        %v2149 = vmax.f32 %v2104, 0.0
        %v2150 = vmax.f32 %v2108, 0.0
        %v2151 = vmax.f32 %v2110, 0.0
        %v2152 = vmax.f32 %v2112, 0.0
        %v2153 = vmax.f32 %v2114, 0.0
        %v2154 = vmax.f32 %v2118, 0.0
        %v2155 = vmax.f32 %v2120, 0.0
        %v2156 = vmax.f32 %v2122, 0.0
        %v2157 = vmax.f32 %v2124, 0.0
        %v2158 = vpack.c.bf16 %v2128, %v2126
        %v2159 = vpack.c.bf16 %v2129, %v2127
        %v2160 = vpack.c.bf16 %v2132, %v2130
        %v2161 = vpack.c.bf16 %v2133, %v2131
        %v2162 = vpack.c.bf16 %v2136, %v2134
        %v2163 = vpack.c.bf16 %v2137, %v2135
        %v2164 = vpack.c.bf16 %v2140, %v2138
        %v2165 = vpack.c.bf16 %v2141, %v2139
        %v2166 = vpack.c.bf16 %v2144, %v2142
        %v2167 = vpack.c.bf16 %v2145, %v2143
        %v2168 = vpack.c.bf16 %v2148, %v2146
        %v2169 = vpack.c.bf16 %v2149, %v2147
        %v2170 = vpack.c.bf16 %v2152, %v2150
        %v2171 = vpack.c.bf16 %v2153, %v2151
        %v2172 = vpack.c.bf16 %v2156, %v2154
        %v2173 = vpack.c.bf16 %v2157, %v2155
        %s2174 = scalar_lea.vmem [#allocation2], 1024
        %v2175 = vld [vmem:[%s2174] sm:$0xff]
        %v2176 = vld [vmem:[%s2174 + $0x8] sm:$0xff]
        %v2177 = vld [vmem:[%s2174 + $0x10] sm:$0xff]
        %v2178 = vld [vmem:[%s2174 + $0x18] sm:$0xff]
        %v2179 = vld [vmem:[%s2174 + $0x20] sm:$0xff]
        %v2180 = vld [vmem:[%s2174 + $0x28] sm:$0xff]
        %v2181 = vld [vmem:[%s2174 + $0x30] sm:$0xff]
        %v2182 = vld [vmem:[%s2174 + $0x38] sm:$0xff]
        %v2183 = vld [vmem:[%s2174 + $0x40] sm:$0xff]
        %v2184 = vld [vmem:[%s2174 + $0x48] sm:$0xff]
        %v2185 = vld [vmem:[%s2174 + $0x50] sm:$0xff]
        %v2186 = vld [vmem:[%s2174 + $0x58] sm:$0xff]
        %v2187 = vld [vmem:[%s2174 + $0x60] sm:$0xff]
        %v2188 = vld [vmem:[%s2174 + $0x68] sm:$0xff]
        %v2189 = vld [vmem:[%s2174 + $0x70] sm:$0xff]
        %v2190 = vld [vmem:[%s2174 + $0x78] sm:$0xff]
        %v2191 = vld [vmem:[%s2174 + $0x80] sm:$0xff]
        %v2192 = vld [vmem:[%s2174 + $0x88] sm:$0xff]
        %v2193 = vld [vmem:[%s2174 + $0x90] sm:$0xff]
        %v2194 = vld [vmem:[%s2174 + $0x98] sm:$0xff]
        %v2195 = vld [vmem:[%s2174 + $0xa0] sm:$0xff]
        %v2196 = vld [vmem:[%s2174 + $0xa8] sm:$0xff]
        %v2197 = vld [vmem:[%s2174 + $0xb0] sm:$0xff]
        %v2198 = vld [vmem:[%s2174 + $0xb8] sm:$0xff]
        %v2199 = vld [vmem:[%s2174 + $0xc0] sm:$0xff]
        %v2200 = vld [vmem:[%s2174 + $0xc8] sm:$0xff]
        %v2201 = vld [vmem:[%s2174 + $0xd0] sm:$0xff]
        %v2202 = vld [vmem:[%s2174 + $0xd8] sm:$0xff]
        %v2203 = vld [vmem:[%s2174 + $0xe0] sm:$0xff]
        %v2204 = vld [vmem:[%s2174 + $0xe8] sm:$0xff]
        %v2205 = vld [vmem:[%s2174 + $0xf0] sm:$0xff]
        %v2206 = vld [vmem:[%s2174 + $0xf8] sm:$0xff]
        %v2239 = vunpack.c.l.b16 %v2175
        %v2240 = vunpack.c.h.b16 %v2175
        %v2241 = vunpack.c.l.b16 %v2176
        %v2242 = vunpack.c.h.b16 %v2176
        %v2243 = vunpack.c.l.b16 %v2177
        %v2244 = vunpack.c.h.b16 %v2177
        %v2245 = vunpack.c.l.b16 %v2178
        %v2246 = vunpack.c.h.b16 %v2178
        %v2247 = vunpack.c.l.b16 %v2179
        %v2248 = vunpack.c.h.b16 %v2179
        %v2249 = vunpack.c.l.b16 %v2180
        %v2250 = vunpack.c.h.b16 %v2180
        %v2251 = vunpack.c.l.b16 %v2181
        %v2252 = vunpack.c.h.b16 %v2181
        %v2253 = vunpack.c.l.b16 %v2182
        %v2254 = vunpack.c.h.b16 %v2182
        %v2255 = vunpack.c.l.b16 %v2183
        %v2256 = vunpack.c.h.b16 %v2183
        %v2257 = vunpack.c.l.b16 %v2184
        %v2258 = vunpack.c.h.b16 %v2184
        %v2259 = vunpack.c.l.b16 %v2185
        %v2260 = vunpack.c.h.b16 %v2185
        %v2261 = vunpack.c.l.b16 %v2186
        %v2262 = vunpack.c.h.b16 %v2186
        %v2263 = vunpack.c.l.b16 %v2187
        %v2264 = vunpack.c.h.b16 %v2187
        %v2265 = vunpack.c.l.b16 %v2188
        %v2266 = vunpack.c.h.b16 %v2188
        %v2267 = vunpack.c.l.b16 %v2189
        %v2268 = vunpack.c.h.b16 %v2189
        %v2269 = vunpack.c.l.b16 %v2190
        %v2270 = vunpack.c.h.b16 %v2190
        %v2271 = vunpack.c.l.b16 %v2191
        %v2272 = vunpack.c.h.b16 %v2191
        %v2273 = vunpack.c.l.b16 %v2192
        %v2274 = vunpack.c.h.b16 %v2192
        %v2275 = vunpack.c.l.b16 %v2193
        %v2276 = vunpack.c.h.b16 %v2193
        %v2277 = vunpack.c.l.b16 %v2194
        %v2278 = vunpack.c.h.b16 %v2194
        %v2279 = vunpack.c.l.b16 %v2195
        %v2280 = vunpack.c.h.b16 %v2195
        %v2281 = vunpack.c.l.b16 %v2196
        %v2282 = vunpack.c.h.b16 %v2196
        %v2283 = vunpack.c.l.b16 %v2197
        %v2284 = vunpack.c.h.b16 %v2197
        %v2285 = vunpack.c.l.b16 %v2198
        %v2286 = vunpack.c.h.b16 %v2198
        %v2287 = vunpack.c.l.b16 %v2199
        %v2288 = vunpack.c.h.b16 %v2199
        %v2289 = vunpack.c.l.b16 %v2200
        %v2290 = vunpack.c.h.b16 %v2200
        %v2291 = vunpack.c.l.b16 %v2201
        %v2292 = vunpack.c.h.b16 %v2201
        %v2293 = vunpack.c.l.b16 %v2202
        %v2294 = vunpack.c.h.b16 %v2202
        %v2295 = vunpack.c.l.b16 %v2203
        %v2296 = vunpack.c.h.b16 %v2203
        %v2297 = vunpack.c.l.b16 %v2204
        %v2298 = vunpack.c.h.b16 %v2204
        %v2299 = vunpack.c.l.b16 %v2205
        %v2300 = vunpack.c.h.b16 %v2205
        %v2301 = vunpack.c.l.b16 %v2206
        %v2302 = vunpack.c.h.b16 %v2206
        %v2303 = vpack.c.b16 %v2241, %v2239
        %v2304 = vpack.c.b16 %v2242, %v2240
        %v2305 = vpack.c.b16 %v2245, %v2243
        %v2306 = vpack.c.b16 %v2246, %v2244
        %v2307 = vpack.c.b16 %v2249, %v2247
        %v2308 = vpack.c.b16 %v2250, %v2248
        %v2309 = vpack.c.b16 %v2253, %v2251
        %v2310 = vpack.c.b16 %v2254, %v2252
        %v2311 = vpack.c.b16 %v2257, %v2255
        %v2312 = vpack.c.b16 %v2258, %v2256
        %v2313 = vpack.c.b16 %v2261, %v2259
        %v2314 = vpack.c.b16 %v2262, %v2260
        %v2315 = vpack.c.b16 %v2265, %v2263
        %v2316 = vpack.c.b16 %v2266, %v2264
        %v2317 = vpack.c.b16 %v2269, %v2267
        %v2318 = vpack.c.b16 %v2270, %v2268
        %v2319 = vpack.c.b16 %v2273, %v2271
        %v2320 = vpack.c.b16 %v2274, %v2272
        %v2321 = vpack.c.b16 %v2277, %v2275
        %v2322 = vpack.c.b16 %v2278, %v2276
        %v2323 = vpack.c.b16 %v2281, %v2279
        %v2324 = vpack.c.b16 %v2282, %v2280
        %v2325 = vpack.c.b16 %v2285, %v2283
        %v2326 = vpack.c.b16 %v2286, %v2284
        %v2327 = vpack.c.b16 %v2289, %v2287
        %v2328 = vpack.c.b16 %v2290, %v2288
        %v2329 = vpack.c.b16 %v2293, %v2291
        %v2330 = vpack.c.b16 %v2294, %v2292
        %v2331 = vpack.c.b16 %v2297, %v2295
        %v2332 = vpack.c.b16 %v2298, %v2296
        %v2333 = vpack.c.b16 %v2301, %v2299
        %v2334 = vpack.c.b16 %v2302, %v2300
        %2367 = vmatprep.subr.bf16.mxu0 %v2304
        %2368 = vmatpush1.bf16.msra.mxu0 %v2303
        %2369 = vmatprep.subr.bf16.mxu0 %v2306
        %2370 = vmatpush1.bf16.msra.mxu0 %v2305
        %2371 = vmatprep.subr.bf16.mxu0 %v2308
        %2372 = vmatpush1.bf16.msra.mxu0 %v2307
        %2373 = vmatprep.subr.bf16.mxu0 %v2310
        %2374 = vmatpush1.bf16.msra.mxu0 %v2309
        %2375 = vmatprep.subr.bf16.mxu0 %v2312
        %2376 = vmatpush1.bf16.msra.mxu0 %v2311
        %2377 = vmatprep.subr.bf16.mxu0 %v2314
        %2378 = vmatpush1.bf16.msra.mxu0 %v2313
        %2379 = vmatprep.subr.bf16.mxu0 %v2316
        %2380 = vmatpush1.bf16.msra.mxu0 %v2315
        %2381 = vmatprep.subr.bf16.mxu0 %v2318
        %2382 = vmatpush1.bf16.msra.mxu0 %v2317
        %2383 = vmatprep.subr.bf16.mxu0 %v2320
        %2384 = vmatpush1.bf16.msra.mxu0 %v2319
        %2385 = vmatprep.subr.bf16.mxu0 %v2322
        %2386 = vmatpush1.bf16.msra.mxu0 %v2321
        %2387 = vmatprep.subr.bf16.mxu0 %v2324
        %2388 = vmatpush1.bf16.msra.mxu0 %v2323
        %2389 = vmatprep.subr.bf16.mxu0 %v2326
        %2390 = vmatpush1.bf16.msra.mxu0 %v2325
        %2391 = vmatprep.subr.bf16.mxu0 %v2328
        %2392 = vmatpush1.bf16.msra.mxu0 %v2327
        %2393 = vmatprep.subr.bf16.mxu0 %v2330
        %2394 = vmatpush1.bf16.msra.mxu0 %v2329
        %2395 = vmatprep.subr.bf16.mxu0 %v2332
        %2396 = vmatpush1.bf16.msra.mxu0 %v2331
        %2397 = vmatprep.subr.bf16.mxu0 %v2334
        %2398 = vmatpush1.bf16.msra.mxu0 %v2333
        %2399 = vmatprep.mubr.bf16.mxu0 %v2159
        %2400 = vmatmul.mubr.bf16.gmra.mrb[0].mxu0 %v2158
        %v2401 = vpop.f32.mrb[0].mxu0
        %v2402 = vadd.f32 %v566, %v2401
        %v2403 = vpop.f32.mrb[0].mxu0
        %v2404 = vadd.f32 %v568, %v2403
        %v2405 = vpop.f32.mrb[0].mxu0
        %v2406 = vadd.f32 %v572, %v2405
        %v2407 = vpop.f32.mrb[0].mxu0
        %v2408 = vadd.f32 %v574, %v2407
        %2409 = vmatprep.mubr.bf16.mxu0 %v2161
        %2410 = vmatmul.mubr.bf16.gmra.mrb[0].mxu0 %v2160
        %v2411 = vpop.f32.mrb[0].mxu0
        %v2412 = vadd.f32 %v578, %v2411
        %v2413 = vpop.f32.mrb[0].mxu0
        %v2414 = vadd.f32 %v580, %v2413
        %v2415 = vpop.f32.mrb[0].mxu0
        %v2416 = vadd.f32 %v584, %v2415
        %v2417 = vpop.f32.mrb[0].mxu0
        %v2418 = vadd.f32 %v586, %v2417
        %2419 = vmatprep.mubr.bf16.mxu0 %v2163
        %2420 = vmatmul.mubr.bf16.gmra.mrb[0].mxu0 %v2162
        %v2421 = vpop.f32.mrb[0].mxu0
        %v2422 = vadd.f32 %v590, %v2421
        %v2423 = vpop.f32.mrb[0].mxu0
        %v2424 = vadd.f32 %v592, %v2423
        %v2425 = vpop.f32.mrb[0].mxu0
        %v2426 = vadd.f32 %v596, %v2425
        %v2427 = vpop.f32.mrb[0].mxu0
        %v2428 = vadd.f32 %v598, %v2427
        %2429 = vmatprep.mubr.bf16.mxu0 %v2165
        %2430 = vmatmul.mubr.bf16.gmra.mrb[0].mxu0 %v2164
        %v2431 = vpop.f32.mrb[0].mxu0
        %v2432 = vadd.f32 %v602, %v2431
        %v2433 = vpop.f32.mrb[0].mxu0
        %v2434 = vadd.f32 %v604, %v2433
        %v2435 = vpop.f32.mrb[0].mxu0
        %v2436 = vadd.f32 %v608, %v2435
        %v2437 = vpop.f32.mrb[0].mxu0
        %v2438 = vadd.f32 %v610, %v2437
        %2439 = vmatprep.mubr.bf16.mxu0 %v2167
        %2440 = vmatmul.mubr.bf16.gmra.mrb[0].mxu0 %v2166
        %v2441 = vpop.f32.mrb[0].mxu0
        %v2442 = vadd.f32 %v614, %v2441
        %v2443 = vpop.f32.mrb[0].mxu0
        %v2444 = vadd.f32 %v616, %v2443
        %v2445 = vpop.f32.mrb[0].mxu0
        %v2446 = vadd.f32 %v620, %v2445
        %v2447 = vpop.f32.mrb[0].mxu0
        %v2448 = vadd.f32 %v622, %v2447
        %2449 = vmatprep.mubr.bf16.mxu0 %v2169
        %2450 = vmatmul.mubr.bf16.gmra.mrb[0].mxu0 %v2168
        %v2451 = vpop.f32.mrb[0].mxu0
        %v2452 = vadd.f32 %v626, %v2451
        %v2453 = vpop.f32.mrb[0].mxu0
        %v2454 = vadd.f32 %v628, %v2453
        %v2455 = vpop.f32.mrb[0].mxu0
        %v2456 = vadd.f32 %v632, %v2455
        %v2457 = vpop.f32.mrb[0].mxu0
        %v2458 = vadd.f32 %v634, %v2457
        %2459 = vmatprep.mubr.bf16.mxu0 %v2171
        %2460 = vmatmul.mubr.bf16.gmra.mrb[0].mxu0 %v2170
        %v2461 = vpop.f32.mrb[0].mxu0
        %v2462 = vadd.f32 %v638, %v2461
        %v2463 = vpop.f32.mrb[0].mxu0
        %v2464 = vadd.f32 %v640, %v2463
        %v2465 = vpop.f32.mrb[0].mxu0
        %v2466 = vadd.f32 %v644, %v2465
        %v2467 = vpop.f32.mrb[0].mxu0
        %v2468 = vadd.f32 %v646, %v2467
        %2469 = vmatprep.mubr.bf16.mxu0 %v2173
        %2470 = vmatmul.mubr.bf16.gmra.mrb[0].mxu0 %v2172
        %v2471 = vpop.f32.mrb[0].mxu0
        %v2472 = vadd.f32 %v650, %v2471
        %v2473 = vpop.f32.mrb[0].mxu0
        %v2474 = vadd.f32 %v652, %v2473
        %v2475 = vpop.f32.mrb[0].mxu0
        %v2476 = vadd.f32 %v656, %v2475
        %v2477 = vpop.f32.mrb[0].mxu0
        %v2478 = vadd.f32 %v658, %v2477
        %2479 = vdwg.mxu0
        %s2480 = scalar_lea.vmem %s3, 4
        %v2481 = vld [vmem:[%s2480] ss:$8 sm:$0x3]
        %v2483 = vlaneseq
        %v2484 = vshrl.u32 %v2483, 7
        %v2485 = vsub.s32 0, %v2484
        %v2486 = vrot.slane %v2481, %v2485
        %v2487 = vlaneseq
        %v2488 = vshrl.u32 %v2487, 7
        %v2489 = vsub.s32 1, %v2488
        %v2490 = vrot.slane %v2481, %v2489
        %v2493 = vadd.f32 %v2402, %v2486
        %v2494 = vadd.f32 %v2404, %v2490
        %v2495 = vadd.f32 %v2406, %v2486
        %v2496 = vadd.f32 %v2408, %v2490
        %v2497 = vadd.f32 %v2412, %v2486
        %v2498 = vadd.f32 %v2414, %v2490
        %v2499 = vadd.f32 %v2416, %v2486
        %v2500 = vadd.f32 %v2418, %v2490
        %v2501 = vadd.f32 %v2422, %v2486
        %v2502 = vadd.f32 %v2424, %v2490
        %v2503 = vadd.f32 %v2426, %v2486
        %v2504 = vadd.f32 %v2428, %v2490
        %v2505 = vadd.f32 %v2432, %v2486
        %v2506 = vadd.f32 %v2434, %v2490
        %v2507 = vadd.f32 %v2436, %v2486
        %v2508 = vadd.f32 %v2438, %v2490
        %v2509 = vadd.f32 %v2442, %v2486
        %v2510 = vadd.f32 %v2444, %v2490
        %v2511 = vadd.f32 %v2446, %v2486
        %v2512 = vadd.f32 %v2448, %v2490
        %v2513 = vadd.f32 %v2452, %v2486
        %v2514 = vadd.f32 %v2454, %v2490
        %v2515 = vadd.f32 %v2456, %v2486
        %v2516 = vadd.f32 %v2458, %v2490
        %v2517 = vadd.f32 %v2462, %v2486
        %v2518 = vadd.f32 %v2464, %v2490
        %v2519 = vadd.f32 %v2466, %v2486
        %v2520 = vadd.f32 %v2468, %v2490
        %v2521 = vadd.f32 %v2472, %v2486
        %v2522 = vadd.f32 %v2474, %v2490
        %v2523 = vadd.f32 %v2476, %v2486
        %v2524 = vadd.f32 %v2478, %v2490
        %v2525 = vmax.f32 %v2493, 0.0
        %v2526 = vmax.f32 %v2494, 0.0
        %v2527 = vmax.f32 %v2495, 0.0
        %v2528 = vmax.f32 %v2496, 0.0
        %v2529 = vmax.f32 %v2497, 0.0
        %v2530 = vmax.f32 %v2498, 0.0
        %v2531 = vmax.f32 %v2499, 0.0
        %v2532 = vmax.f32 %v2500, 0.0
        %v2533 = vmax.f32 %v2501, 0.0
        %v2534 = vmax.f32 %v2502, 0.0
        %v2535 = vmax.f32 %v2503, 0.0
        %v2536 = vmax.f32 %v2504, 0.0
        %v2537 = vmax.f32 %v2505, 0.0
        %v2538 = vmax.f32 %v2506, 0.0
        %v2539 = vmax.f32 %v2507, 0.0
        %v2540 = vmax.f32 %v2508, 0.0
        %v2541 = vmax.f32 %v2509, 0.0
        %v2542 = vmax.f32 %v2510, 0.0
        %v2543 = vmax.f32 %v2511, 0.0
        %v2544 = vmax.f32 %v2512, 0.0
        %v2545 = vmax.f32 %v2513, 0.0
        %v2546 = vmax.f32 %v2514, 0.0
        %v2547 = vmax.f32 %v2515, 0.0
        %v2548 = vmax.f32 %v2516, 0.0
        %v2549 = vmax.f32 %v2517, 0.0
        %v2550 = vmax.f32 %v2518, 0.0
        %v2551 = vmax.f32 %v2519, 0.0
        %v2552 = vmax.f32 %v2520, 0.0
        %v2553 = vmax.f32 %v2521, 0.0
        %v2554 = vmax.f32 %v2522, 0.0
        %v2555 = vmax.f32 %v2523, 0.0
        %v2556 = vmax.f32 %v2524, 0.0
        %v2557 = vpack.c.bf16 %v2527, %v2525
        %v2558 = vpack.c.bf16 %v2528, %v2526
        %v2559 = vpack.c.bf16 %v2531, %v2529
        %v2560 = vpack.c.bf16 %v2532, %v2530
        %v2561 = vpack.c.bf16 %v2535, %v2533
        %v2562 = vpack.c.bf16 %v2536, %v2534
        %v2563 = vpack.c.bf16 %v2539, %v2537
        %v2564 = vpack.c.bf16 %v2540, %v2538
        %v2565 = vpack.c.bf16 %v2543, %v2541
        %v2566 = vpack.c.bf16 %v2544, %v2542
        %v2567 = vpack.c.bf16 %v2547, %v2545
        %v2568 = vpack.c.bf16 %v2548, %v2546
        %v2569 = vpack.c.bf16 %v2551, %v2549
        %v2570 = vpack.c.bf16 %v2552, %v2550
        %v2571 = vpack.c.bf16 %v2555, %v2553
        %v2572 = vpack.c.bf16 %v2556, %v2554
        %s2573 = scalar_lea.vmem [#allocation2], 1280
        %v2574 = vld [vmem:[%s2573] sm:$0xff]
        %v2575 = vld [vmem:[%s2573 + $0x8] sm:$0xff]
        %v2576 = vld [vmem:[%s2573 + $0x10] sm:$0xff]
        %v2577 = vld [vmem:[%s2573 + $0x18] sm:$0xff]
        %v2578 = vld [vmem:[%s2573 + $0x20] sm:$0xff]
        %v2579 = vld [vmem:[%s2573 + $0x28] sm:$0xff]
        %v2580 = vld [vmem:[%s2573 + $0x30] sm:$0xff]
        %v2581 = vld [vmem:[%s2573 + $0x38] sm:$0xff]
        %v2582 = vld [vmem:[%s2573 + $0x40] sm:$0xff]
        %v2583 = vld [vmem:[%s2573 + $0x48] sm:$0xff]
        %v2584 = vld [vmem:[%s2573 + $0x50] sm:$0xff]
        %v2585 = vld [vmem:[%s2573 + $0x58] sm:$0xff]
        %v2586 = vld [vmem:[%s2573 + $0x60] sm:$0xff]
        %v2587 = vld [vmem:[%s2573 + $0x68] sm:$0xff]
        %v2588 = vld [vmem:[%s2573 + $0x70] sm:$0xff]
        %v2589 = vld [vmem:[%s2573 + $0x78] sm:$0xff]
        %v2590 = vld [vmem:[%s2573 + $0x80] sm:$0xff]
        %v2591 = vld [vmem:[%s2573 + $0x88] sm:$0xff]
        %v2592 = vld [vmem:[%s2573 + $0x90] sm:$0xff]
        %v2593 = vld [vmem:[%s2573 + $0x98] sm:$0xff]
        %v2594 = vld [vmem:[%s2573 + $0xa0] sm:$0xff]
        %v2595 = vld [vmem:[%s2573 + $0xa8] sm:$0xff]
        %v2596 = vld [vmem:[%s2573 + $0xb0] sm:$0xff]
        %v2597 = vld [vmem:[%s2573 + $0xb8] sm:$0xff]
        %v2598 = vld [vmem:[%s2573 + $0xc0] sm:$0xff]
        %v2599 = vld [vmem:[%s2573 + $0xc8] sm:$0xff]
        %v2600 = vld [vmem:[%s2573 + $0xd0] sm:$0xff]
        %v2601 = vld [vmem:[%s2573 + $0xd8] sm:$0xff]
        %v2602 = vld [vmem:[%s2573 + $0xe0] sm:$0xff]
        %v2603 = vld [vmem:[%s2573 + $0xe8] sm:$0xff]
        %v2604 = vld [vmem:[%s2573 + $0xf0] sm:$0xff]
        %v2605 = vld [vmem:[%s2573 + $0xf8] sm:$0xff]
        %s2606 = scalar_lea.vmem %s3, 5
        %v2607 = vld [vmem:[%s2606] ss:$8 sm:$0x3]
        %v2609 = vlaneseq
        %v2610 = vshrl.u32 %v2609, 7
        %v2611 = vsub.s32 0, %v2610
        %v2612 = vrot.slane %v2607, %v2611
        %v2613 = vlaneseq
        %v2614 = vshrl.u32 %v2613, 7
        %v2615 = vsub.s32 1, %v2614
        %v2616 = vrot.slane %v2607, %v2615
        %v2651 = vunpack.c.l.b16 %v2574
        %v2652 = vunpack.c.h.b16 %v2574
        %v2653 = vunpack.c.l.b16 %v2575
        %v2654 = vunpack.c.h.b16 %v2575
        %v2655 = vunpack.c.l.b16 %v2576
        %v2656 = vunpack.c.h.b16 %v2576
        %v2657 = vunpack.c.l.b16 %v2577
        %v2658 = vunpack.c.h.b16 %v2577
        %v2659 = vunpack.c.l.b16 %v2578
        %v2660 = vunpack.c.h.b16 %v2578
        %v2661 = vunpack.c.l.b16 %v2579
        %v2662 = vunpack.c.h.b16 %v2579
        %v2663 = vunpack.c.l.b16 %v2580
        %v2664 = vunpack.c.h.b16 %v2580
        %v2665 = vunpack.c.l.b16 %v2581
        %v2666 = vunpack.c.h.b16 %v2581
        %v2667 = vunpack.c.l.b16 %v2582
        %v2668 = vunpack.c.h.b16 %v2582
        %v2669 = vunpack.c.l.b16 %v2583
        %v2670 = vunpack.c.h.b16 %v2583
        %v2671 = vunpack.c.l.b16 %v2584
        %v2672 = vunpack.c.h.b16 %v2584
        %v2673 = vunpack.c.l.b16 %v2585
        %v2674 = vunpack.c.h.b16 %v2585
        %v2675 = vunpack.c.l.b16 %v2586
        %v2676 = vunpack.c.h.b16 %v2586
        %v2677 = vunpack.c.l.b16 %v2587
        %v2678 = vunpack.c.h.b16 %v2587
        %v2679 = vunpack.c.l.b16 %v2588
        %v2680 = vunpack.c.h.b16 %v2588
        %v2681 = vunpack.c.l.b16 %v2589
        %v2682 = vunpack.c.h.b16 %v2589
        %v2683 = vunpack.c.l.b16 %v2590
        %v2684 = vunpack.c.h.b16 %v2590
        %v2685 = vunpack.c.l.b16 %v2591
        %v2686 = vunpack.c.h.b16 %v2591
        %v2687 = vunpack.c.l.b16 %v2592
        %v2688 = vunpack.c.h.b16 %v2592
        %v2689 = vunpack.c.l.b16 %v2593
        %v2690 = vunpack.c.h.b16 %v2593
        %v2691 = vunpack.c.l.b16 %v2594
        %v2692 = vunpack.c.h.b16 %v2594
        %v2693 = vunpack.c.l.b16 %v2595
        %v2694 = vunpack.c.h.b16 %v2595
        %v2695 = vunpack.c.l.b16 %v2596
        %v2696 = vunpack.c.h.b16 %v2596
        %v2697 = vunpack.c.l.b16 %v2597
        %v2698 = vunpack.c.h.b16 %v2597
        %v2699 = vunpack.c.l.b16 %v2598
        %v2700 = vunpack.c.h.b16 %v2598
        %v2701 = vunpack.c.l.b16 %v2599
        %v2702 = vunpack.c.h.b16 %v2599
        %v2703 = vunpack.c.l.b16 %v2600
        %v2704 = vunpack.c.h.b16 %v2600
        %v2705 = vunpack.c.l.b16 %v2601
        %v2706 = vunpack.c.h.b16 %v2601
        %v2707 = vunpack.c.l.b16 %v2602
        %v2708 = vunpack.c.h.b16 %v2602
        %v2709 = vunpack.c.l.b16 %v2603
        %v2710 = vunpack.c.h.b16 %v2603
        %v2711 = vunpack.c.l.b16 %v2604
        %v2712 = vunpack.c.h.b16 %v2604
        %v2713 = vunpack.c.l.b16 %v2605
        %v2714 = vunpack.c.h.b16 %v2605
        %v2715 = vpack.c.b16 %v2653, %v2651
        %v2716 = vpack.c.b16 %v2654, %v2652
        %v2717 = vpack.c.b16 %v2657, %v2655
        %v2718 = vpack.c.b16 %v2658, %v2656
        %v2719 = vpack.c.b16 %v2661, %v2659
        %v2720 = vpack.c.b16 %v2662, %v2660
        %v2721 = vpack.c.b16 %v2665, %v2663
        %v2722 = vpack.c.b16 %v2666, %v2664
        %v2723 = vpack.c.b16 %v2669, %v2667
        %v2724 = vpack.c.b16 %v2670, %v2668
        %v2725 = vpack.c.b16 %v2673, %v2671
        %v2726 = vpack.c.b16 %v2674, %v2672
        %v2727 = vpack.c.b16 %v2677, %v2675
        %v2728 = vpack.c.b16 %v2678, %v2676
        %v2729 = vpack.c.b16 %v2681, %v2679
        %v2730 = vpack.c.b16 %v2682, %v2680
        %v2731 = vpack.c.b16 %v2685, %v2683
        %v2732 = vpack.c.b16 %v2686, %v2684
        %v2733 = vpack.c.b16 %v2689, %v2687
        %v2734 = vpack.c.b16 %v2690, %v2688
        %v2735 = vpack.c.b16 %v2693, %v2691
        %v2736 = vpack.c.b16 %v2694, %v2692
        %v2737 = vpack.c.b16 %v2697, %v2695
        %v2738 = vpack.c.b16 %v2698, %v2696
        %v2739 = vpack.c.b16 %v2701, %v2699
        %v2740 = vpack.c.b16 %v2702, %v2700
        %v2741 = vpack.c.b16 %v2705, %v2703
        %v2742 = vpack.c.b16 %v2706, %v2704
        %v2743 = vpack.c.b16 %v2709, %v2707
        %v2744 = vpack.c.b16 %v2710, %v2708
        %v2745 = vpack.c.b16 %v2713, %v2711
        %v2746 = vpack.c.b16 %v2714, %v2712
        %2779 = vmatprep.subr.bf16.mxu0 %v2716
        %2780 = vmatpush1.bf16.msra.mxu0 %v2715
        %2781 = vmatprep.subr.bf16.mxu0 %v2718
        %2782 = vmatpush1.bf16.msra.mxu0 %v2717
        %2783 = vmatprep.subr.bf16.mxu0 %v2720
        %2784 = vmatpush1.bf16.msra.mxu0 %v2719
        %2785 = vmatprep.subr.bf16.mxu0 %v2722
        %2786 = vmatpush1.bf16.msra.mxu0 %v2721
        %2787 = vmatprep.subr.bf16.mxu0 %v2724
        %2788 = vmatpush1.bf16.msra.mxu0 %v2723
        %2789 = vmatprep.subr.bf16.mxu0 %v2726
        %2790 = vmatpush1.bf16.msra.mxu0 %v2725
        %2791 = vmatprep.subr.bf16.mxu0 %v2728
        %2792 = vmatpush1.bf16.msra.mxu0 %v2727
        %2793 = vmatprep.subr.bf16.mxu0 %v2730
        %2794 = vmatpush1.bf16.msra.mxu0 %v2729
        %2795 = vmatprep.subr.bf16.mxu0 %v2732
        %2796 = vmatpush1.bf16.msra.mxu0 %v2731
        %2797 = vmatprep.subr.bf16.mxu0 %v2734
        %2798 = vmatpush1.bf16.msra.mxu0 %v2733
        %2799 = vmatprep.subr.bf16.mxu0 %v2736
        %2800 = vmatpush1.bf16.msra.mxu0 %v2735
        %2801 = vmatprep.subr.bf16.mxu0 %v2738
        %2802 = vmatpush1.bf16.msra.mxu0 %v2737
        %2803 = vmatprep.subr.bf16.mxu0 %v2740
        %2804 = vmatpush1.bf16.msra.mxu0 %v2739
        %2805 = vmatprep.subr.bf16.mxu0 %v2742
        %2806 = vmatpush1.bf16.msra.mxu0 %v2741
        %2807 = vmatprep.subr.bf16.mxu0 %v2744
        %2808 = vmatpush1.bf16.msra.mxu0 %v2743
        %2809 = vmatprep.subr.bf16.mxu0 %v2746
        %2810 = vmatpush1.bf16.msra.mxu0 %v2745
        %2811 = vmatprep.mubr.bf16.mxu0 %v2558
        %2812 = vmatmul.mubr.bf16.gmra.mrb[0].mxu0 %v2557
        %v2813 = vpop.f32.mrb[0].mxu0
        %v2814 = vadd.f32 %v2612, %v2813
        %v2815 = vpop.f32.mrb[0].mxu0
        %v2816 = vadd.f32 %v2616, %v2815
        %v2817 = vpop.f32.mrb[0].mxu0
        %v2818 = vadd.f32 %v2612, %v2817
        %v2819 = vpop.f32.mrb[0].mxu0
        %v2820 = vadd.f32 %v2616, %v2819
        %2821 = vmatprep.mubr.bf16.mxu0 %v2560
        %2822 = vmatmul.mubr.bf16.gmra.mrb[0].mxu0 %v2559
        %v2823 = vpop.f32.mrb[0].mxu0
        %v2824 = vadd.f32 %v2612, %v2823
        %v2825 = vpop.f32.mrb[0].mxu0
        %v2826 = vadd.f32 %v2616, %v2825
        %v2827 = vpop.f32.mrb[0].mxu0
        %v2828 = vadd.f32 %v2612, %v2827
        %v2829 = vpop.f32.mrb[0].mxu0
        %v2830 = vadd.f32 %v2616, %v2829
        %2831 = vmatprep.mubr.bf16.mxu0 %v2562
        %2832 = vmatmul.mubr.bf16.gmra.mrb[0].mxu0 %v2561
        %v2833 = vpop.f32.mrb[0].mxu0
        %v2834 = vadd.f32 %v2612, %v2833
        %v2835 = vpop.f32.mrb[0].mxu0
        %v2836 = vadd.f32 %v2616, %v2835
        %v2837 = vpop.f32.mrb[0].mxu0
        %v2838 = vadd.f32 %v2612, %v2837
        %v2839 = vpop.f32.mrb[0].mxu0
        %v2840 = vadd.f32 %v2616, %v2839
        %2841 = vmatprep.mubr.bf16.mxu0 %v2564
        %2842 = vmatmul.mubr.bf16.gmra.mrb[0].mxu0 %v2563
        %v2843 = vpop.f32.mrb[0].mxu0
        %v2844 = vadd.f32 %v2612, %v2843
        %v2845 = vpop.f32.mrb[0].mxu0
        %v2846 = vadd.f32 %v2616, %v2845
        %v2847 = vpop.f32.mrb[0].mxu0
        %v2848 = vadd.f32 %v2612, %v2847
        %v2849 = vpop.f32.mrb[0].mxu0
        %v2850 = vadd.f32 %v2616, %v2849
        %2851 = vmatprep.mubr.bf16.mxu0 %v2566
        %2852 = vmatmul.mubr.bf16.gmra.mrb[0].mxu0 %v2565
        %v2853 = vpop.f32.mrb[0].mxu0
        %v2854 = vadd.f32 %v2612, %v2853
        %v2855 = vpop.f32.mrb[0].mxu0
        %v2856 = vadd.f32 %v2616, %v2855
        %v2857 = vpop.f32.mrb[0].mxu0
        %v2858 = vadd.f32 %v2612, %v2857
        %v2859 = vpop.f32.mrb[0].mxu0
        %v2860 = vadd.f32 %v2616, %v2859
        %2861 = vmatprep.mubr.bf16.mxu0 %v2568
        %2862 = vmatmul.mubr.bf16.gmra.mrb[0].mxu0 %v2567
        %v2863 = vpop.f32.mrb[0].mxu0
        %v2864 = vadd.f32 %v2612, %v2863
        %v2865 = vpop.f32.mrb[0].mxu0
        %v2866 = vadd.f32 %v2616, %v2865
        %v2867 = vpop.f32.mrb[0].mxu0
        %v2868 = vadd.f32 %v2612, %v2867
        %v2869 = vpop.f32.mrb[0].mxu0
        %v2870 = vadd.f32 %v2616, %v2869
        %2871 = vmatprep.mubr.bf16.mxu0 %v2570
        %2872 = vmatmul.mubr.bf16.gmra.mrb[0].mxu0 %v2569
        %v2873 = vpop.f32.mrb[0].mxu0
        %v2874 = vadd.f32 %v2612, %v2873
        %v2875 = vpop.f32.mrb[0].mxu0
        %v2876 = vadd.f32 %v2616, %v2875
        %v2877 = vpop.f32.mrb[0].mxu0
        %v2878 = vadd.f32 %v2612, %v2877
        %v2879 = vpop.f32.mrb[0].mxu0
        %v2880 = vadd.f32 %v2616, %v2879
        %2881 = vmatprep.mubr.bf16.mxu0 %v2572
        %2882 = vmatmul.mubr.bf16.gmra.mrb[0].mxu0 %v2571
        %v2883 = vpop.f32.mrb[0].mxu0
        %v2884 = vadd.f32 %v2612, %v2883
        %v2885 = vpop.f32.mrb[0].mxu0
        %v2886 = vadd.f32 %v2616, %v2885
        %v2887 = vpop.f32.mrb[0].mxu0
        %v2888 = vadd.f32 %v2612, %v2887
        %v2889 = vpop.f32.mrb[0].mxu0
        %v2890 = vadd.f32 %v2616, %v2889
        %2891 = vdwg.mxu0
        %v2892 = vmax.f32 %v2814, 0.0
        %v2893 = vmax.f32 %v2816, 0.0
        %v2894 = vmax.f32 %v2818, 0.0
        %v2895 = vmax.f32 %v2820, 0.0
        %v2896 = vmax.f32 %v2824, 0.0
        %v2897 = vmax.f32 %v2826, 0.0
        %v2898 = vmax.f32 %v2828, 0.0
        %v2899 = vmax.f32 %v2830, 0.0
        %v2900 = vmax.f32 %v2834, 0.0
        %v2901 = vmax.f32 %v2836, 0.0
        %v2902 = vmax.f32 %v2838, 0.0
        %v2903 = vmax.f32 %v2840, 0.0
        %v2904 = vmax.f32 %v2844, 0.0
        %v2905 = vmax.f32 %v2846, 0.0
        %v2906 = vmax.f32 %v2848, 0.0
        %v2907 = vmax.f32 %v2850, 0.0
        %v2908 = vmax.f32 %v2854, 0.0
        %v2909 = vmax.f32 %v2856, 0.0
        %v2910 = vmax.f32 %v2858, 0.0
        %v2911 = vmax.f32 %v2860, 0.0
        %v2912 = vmax.f32 %v2864, 0.0
        %v2913 = vmax.f32 %v2866, 0.0
        %v2914 = vmax.f32 %v2868, 0.0
        %v2915 = vmax.f32 %v2870, 0.0
        %v2916 = vmax.f32 %v2874, 0.0
        %v2917 = vmax.f32 %v2876, 0.0
        %v2918 = vmax.f32 %v2878, 0.0
        %v2919 = vmax.f32 %v2880, 0.0
        %v2920 = vmax.f32 %v2884, 0.0
        %v2921 = vmax.f32 %v2886, 0.0
        %v2922 = vmax.f32 %v2888, 0.0
        %v2923 = vmax.f32 %v2890, 0.0
        %v2924 = vpack.c.bf16 %v2894, %v2892
        %v2925 = vpack.c.bf16 %v2895, %v2893
        %v2926 = vpack.c.bf16 %v2898, %v2896
        %v2927 = vpack.c.bf16 %v2899, %v2897
        %v2928 = vpack.c.bf16 %v2902, %v2900
        %v2929 = vpack.c.bf16 %v2903, %v2901
        %v2930 = vpack.c.bf16 %v2906, %v2904
        %v2931 = vpack.c.bf16 %v2907, %v2905
        %v2932 = vpack.c.bf16 %v2910, %v2908
        %v2933 = vpack.c.bf16 %v2911, %v2909
        %v2934 = vpack.c.bf16 %v2914, %v2912
        %v2935 = vpack.c.bf16 %v2915, %v2913
        %v2936 = vpack.c.bf16 %v2918, %v2916
        %v2937 = vpack.c.bf16 %v2919, %v2917
        %v2938 = vpack.c.bf16 %v2922, %v2920
        %v2939 = vpack.c.bf16 %v2923, %v2921
        %s2940 = scalar_lea.vmem [#allocation2], 1536
        %v2941 = vld [vmem:[%s2940] sm:$0xff]
        %v2942 = vld [vmem:[%s2940 + $0x8] sm:$0xff]
        %v2943 = vld [vmem:[%s2940 + $0x10] sm:$0xff]
        %v2944 = vld [vmem:[%s2940 + $0x18] sm:$0xff]
        %v2945 = vld [vmem:[%s2940 + $0x20] sm:$0xff]
        %v2946 = vld [vmem:[%s2940 + $0x28] sm:$0xff]
        %v2947 = vld [vmem:[%s2940 + $0x30] sm:$0xff]
        %v2948 = vld [vmem:[%s2940 + $0x38] sm:$0xff]
        %v2949 = vld [vmem:[%s2940 + $0x40] sm:$0xff]
        %v2950 = vld [vmem:[%s2940 + $0x48] sm:$0xff]
        %v2951 = vld [vmem:[%s2940 + $0x50] sm:$0xff]
        %v2952 = vld [vmem:[%s2940 + $0x58] sm:$0xff]
        %v2953 = vld [vmem:[%s2940 + $0x60] sm:$0xff]
        %v2954 = vld [vmem:[%s2940 + $0x68] sm:$0xff]
        %v2955 = vld [vmem:[%s2940 + $0x70] sm:$0xff]
        %v2956 = vld [vmem:[%s2940 + $0x78] sm:$0xff]
        %v2957 = vld [vmem:[%s2940 + $0x80] sm:$0xff]
        %v2958 = vld [vmem:[%s2940 + $0x88] sm:$0xff]
        %v2959 = vld [vmem:[%s2940 + $0x90] sm:$0xff]
        %v2960 = vld [vmem:[%s2940 + $0x98] sm:$0xff]
        %v2961 = vld [vmem:[%s2940 + $0xa0] sm:$0xff]
        %v2962 = vld [vmem:[%s2940 + $0xa8] sm:$0xff]
        %v2963 = vld [vmem:[%s2940 + $0xb0] sm:$0xff]
        %v2964 = vld [vmem:[%s2940 + $0xb8] sm:$0xff]
        %v2965 = vld [vmem:[%s2940 + $0xc0] sm:$0xff]
        %v2966 = vld [vmem:[%s2940 + $0xc8] sm:$0xff]
        %v2967 = vld [vmem:[%s2940 + $0xd0] sm:$0xff]
        %v2968 = vld [vmem:[%s2940 + $0xd8] sm:$0xff]
        %v2969 = vld [vmem:[%s2940 + $0xe0] sm:$0xff]
        %v2970 = vld [vmem:[%s2940 + $0xe8] sm:$0xff]
        %v2971 = vld [vmem:[%s2940 + $0xf0] sm:$0xff]
        %v2972 = vld [vmem:[%s2940 + $0xf8] sm:$0xff]
        %s2973 = scalar_lea.vmem %s3, 6
        %v2974 = vld [vmem:[%s2973] ss:$8 sm:$0x3]
        %v2976 = vlaneseq
        %v2977 = vshrl.u32 %v2976, 7
        %v2978 = vsub.s32 0, %v2977
        %v2979 = vrot.slane %v2974, %v2978
        %v2980 = vlaneseq
        %v2981 = vshrl.u32 %v2980, 7
        %v2982 = vsub.s32 1, %v2981
        %v2983 = vrot.slane %v2974, %v2982
        %v3018 = vunpack.c.l.b16 %v2941
        %v3019 = vunpack.c.h.b16 %v2941
        %v3020 = vunpack.c.l.b16 %v2942
        %v3021 = vunpack.c.h.b16 %v2942
        %v3022 = vunpack.c.l.b16 %v2943
        %v3023 = vunpack.c.h.b16 %v2943
        %v3024 = vunpack.c.l.b16 %v2944
        %v3025 = vunpack.c.h.b16 %v2944
        %v3026 = vunpack.c.l.b16 %v2945
        %v3027 = vunpack.c.h.b16 %v2945
        %v3028 = vunpack.c.l.b16 %v2946
        %v3029 = vunpack.c.h.b16 %v2946
        %v3030 = vunpack.c.l.b16 %v2947
        %v3031 = vunpack.c.h.b16 %v2947
        %v3032 = vunpack.c.l.b16 %v2948
        %v3033 = vunpack.c.h.b16 %v2948
        %v3034 = vunpack.c.l.b16 %v2949
        %v3035 = vunpack.c.h.b16 %v2949
        %v3036 = vunpack.c.l.b16 %v2950
        %v3037 = vunpack.c.h.b16 %v2950
        %v3038 = vunpack.c.l.b16 %v2951
        %v3039 = vunpack.c.h.b16 %v2951
        %v3040 = vunpack.c.l.b16 %v2952
        %v3041 = vunpack.c.h.b16 %v2952
        %v3042 = vunpack.c.l.b16 %v2953
        %v3043 = vunpack.c.h.b16 %v2953
        %v3044 = vunpack.c.l.b16 %v2954
        %v3045 = vunpack.c.h.b16 %v2954
        %v3046 = vunpack.c.l.b16 %v2955
        %v3047 = vunpack.c.h.b16 %v2955
        %v3048 = vunpack.c.l.b16 %v2956
        %v3049 = vunpack.c.h.b16 %v2956
        %v3050 = vunpack.c.l.b16 %v2957
        %v3051 = vunpack.c.h.b16 %v2957
        %v3052 = vunpack.c.l.b16 %v2958
        %v3053 = vunpack.c.h.b16 %v2958
        %v3054 = vunpack.c.l.b16 %v2959
        %v3055 = vunpack.c.h.b16 %v2959
        %v3056 = vunpack.c.l.b16 %v2960
        %v3057 = vunpack.c.h.b16 %v2960
        %v3058 = vunpack.c.l.b16 %v2961
        %v3059 = vunpack.c.h.b16 %v2961
        %v3060 = vunpack.c.l.b16 %v2962
        %v3061 = vunpack.c.h.b16 %v2962
        %v3062 = vunpack.c.l.b16 %v2963
        %v3063 = vunpack.c.h.b16 %v2963
        %v3064 = vunpack.c.l.b16 %v2964
        %v3065 = vunpack.c.h.b16 %v2964
        %v3066 = vunpack.c.l.b16 %v2965
        %v3067 = vunpack.c.h.b16 %v2965
        %v3068 = vunpack.c.l.b16 %v2966
        %v3069 = vunpack.c.h.b16 %v2966
        %v3070 = vunpack.c.l.b16 %v2967
        %v3071 = vunpack.c.h.b16 %v2967
        %v3072 = vunpack.c.l.b16 %v2968
        %v3073 = vunpack.c.h.b16 %v2968
        %v3074 = vunpack.c.l.b16 %v2969
        %v3075 = vunpack.c.h.b16 %v2969
        %v3076 = vunpack.c.l.b16 %v2970
        %v3077 = vunpack.c.h.b16 %v2970
        %v3078 = vunpack.c.l.b16 %v2971
        %v3079 = vunpack.c.h.b16 %v2971
        %v3080 = vunpack.c.l.b16 %v2972
        %v3081 = vunpack.c.h.b16 %v2972
        %v3082 = vpack.c.b16 %v3020, %v3018
        %v3083 = vpack.c.b16 %v3021, %v3019
        %v3084 = vpack.c.b16 %v3024, %v3022
        %v3085 = vpack.c.b16 %v3025, %v3023
        %v3086 = vpack.c.b16 %v3028, %v3026
        %v3087 = vpack.c.b16 %v3029, %v3027
        %v3088 = vpack.c.b16 %v3032, %v3030
        %v3089 = vpack.c.b16 %v3033, %v3031
        %v3090 = vpack.c.b16 %v3036, %v3034
        %v3091 = vpack.c.b16 %v3037, %v3035
        %v3092 = vpack.c.b16 %v3040, %v3038
        %v3093 = vpack.c.b16 %v3041, %v3039
        %v3094 = vpack.c.b16 %v3044, %v3042
        %v3095 = vpack.c.b16 %v3045, %v3043
        %v3096 = vpack.c.b16 %v3048, %v3046
        %v3097 = vpack.c.b16 %v3049, %v3047
        %v3098 = vpack.c.b16 %v3052, %v3050
        %v3099 = vpack.c.b16 %v3053, %v3051
        %v3100 = vpack.c.b16 %v3056, %v3054
        %v3101 = vpack.c.b16 %v3057, %v3055
        %v3102 = vpack.c.b16 %v3060, %v3058
        %v3103 = vpack.c.b16 %v3061, %v3059
        %v3104 = vpack.c.b16 %v3064, %v3062
        %v3105 = vpack.c.b16 %v3065, %v3063
        %v3106 = vpack.c.b16 %v3068, %v3066
        %v3107 = vpack.c.b16 %v3069, %v3067
        %v3108 = vpack.c.b16 %v3072, %v3070
        %v3109 = vpack.c.b16 %v3073, %v3071
        %v3110 = vpack.c.b16 %v3076, %v3074
        %v3111 = vpack.c.b16 %v3077, %v3075
        %v3112 = vpack.c.b16 %v3080, %v3078
        %v3113 = vpack.c.b16 %v3081, %v3079
        %3146 = vmatprep.subr.bf16.mxu0 %v3083
        %3147 = vmatpush1.bf16.msra.mxu0 %v3082
        %3148 = vmatprep.subr.bf16.mxu0 %v3085
        %3149 = vmatpush1.bf16.msra.mxu0 %v3084
        %3150 = vmatprep.subr.bf16.mxu0 %v3087
        %3151 = vmatpush1.bf16.msra.mxu0 %v3086
        %3152 = vmatprep.subr.bf16.mxu0 %v3089
        %3153 = vmatpush1.bf16.msra.mxu0 %v3088
        %3154 = vmatprep.subr.bf16.mxu0 %v3091
        %3155 = vmatpush1.bf16.msra.mxu0 %v3090
        %3156 = vmatprep.subr.bf16.mxu0 %v3093
        %3157 = vmatpush1.bf16.msra.mxu0 %v3092
        %3158 = vmatprep.subr.bf16.mxu0 %v3095
        %3159 = vmatpush1.bf16.msra.mxu0 %v3094
        %3160 = vmatprep.subr.bf16.mxu0 %v3097
        %3161 = vmatpush1.bf16.msra.mxu0 %v3096
        %3162 = vmatprep.subr.bf16.mxu0 %v3099
        %3163 = vmatpush1.bf16.msra.mxu0 %v3098
        %3164 = vmatprep.subr.bf16.mxu0 %v3101
        %3165 = vmatpush1.bf16.msra.mxu0 %v3100
        %3166 = vmatprep.subr.bf16.mxu0 %v3103
        %3167 = vmatpush1.bf16.msra.mxu0 %v3102
        %3168 = vmatprep.subr.bf16.mxu0 %v3105
        %3169 = vmatpush1.bf16.msra.mxu0 %v3104
        %3170 = vmatprep.subr.bf16.mxu0 %v3107
        %3171 = vmatpush1.bf16.msra.mxu0 %v3106
        %3172 = vmatprep.subr.bf16.mxu0 %v3109
        %3173 = vmatpush1.bf16.msra.mxu0 %v3108
        %3174 = vmatprep.subr.bf16.mxu0 %v3111
        %3175 = vmatpush1.bf16.msra.mxu0 %v3110
        %3176 = vmatprep.subr.bf16.mxu0 %v3113
        %3177 = vmatpush1.bf16.msra.mxu0 %v3112
        %3178 = vmatprep.mubr.bf16.mxu0 %v2925
        %3179 = vmatmul.mubr.bf16.gmra.mrb[0].mxu0 %v2924
        %v3180 = vpop.f32.mrb[0].mxu0
        %v3181 = vadd.f32 %v2979, %v3180
        %v3182 = vpop.f32.mrb[0].mxu0
        %v3183 = vadd.f32 %v2983, %v3182
        %v3184 = vpop.f32.mrb[0].mxu0
        %v3185 = vadd.f32 %v2979, %v3184
        %v3186 = vpop.f32.mrb[0].mxu0
        %v3187 = vadd.f32 %v2983, %v3186
        %3188 = vmatprep.mubr.bf16.mxu0 %v2927
        %3189 = vmatmul.mubr.bf16.gmra.mrb[0].mxu0 %v2926
        %v3190 = vpop.f32.mrb[0].mxu0
        %v3191 = vadd.f32 %v2979, %v3190
        %v3192 = vpop.f32.mrb[0].mxu0
        %v3193 = vadd.f32 %v2983, %v3192
        %v3194 = vpop.f32.mrb[0].mxu0
        %v3195 = vadd.f32 %v2979, %v3194
        %v3196 = vpop.f32.mrb[0].mxu0
        %v3197 = vadd.f32 %v2983, %v3196
        %3198 = vmatprep.mubr.bf16.mxu0 %v2929
        %3199 = vmatmul.mubr.bf16.gmra.mrb[0].mxu0 %v2928
        %v3200 = vpop.f32.mrb[0].mxu0
        %v3201 = vadd.f32 %v2979, %v3200
        %v3202 = vpop.f32.mrb[0].mxu0
        %v3203 = vadd.f32 %v2983, %v3202
        %v3204 = vpop.f32.mrb[0].mxu0
        %v3205 = vadd.f32 %v2979, %v3204
        %v3206 = vpop.f32.mrb[0].mxu0
        %v3207 = vadd.f32 %v2983, %v3206
        %3208 = vmatprep.mubr.bf16.mxu0 %v2931
        %3209 = vmatmul.mubr.bf16.gmra.mrb[0].mxu0 %v2930
        %v3210 = vpop.f32.mrb[0].mxu0
        %v3211 = vadd.f32 %v2979, %v3210
        %v3212 = vpop.f32.mrb[0].mxu0
        %v3213 = vadd.f32 %v2983, %v3212
        %v3214 = vpop.f32.mrb[0].mxu0
        %v3215 = vadd.f32 %v2979, %v3214
        %v3216 = vpop.f32.mrb[0].mxu0
        %v3217 = vadd.f32 %v2983, %v3216
        %3218 = vmatprep.mubr.bf16.mxu0 %v2933
        %3219 = vmatmul.mubr.bf16.gmra.mrb[0].mxu0 %v2932
        %v3220 = vpop.f32.mrb[0].mxu0
        %v3221 = vadd.f32 %v2979, %v3220
        %v3222 = vpop.f32.mrb[0].mxu0
        %v3223 = vadd.f32 %v2983, %v3222
        %v3224 = vpop.f32.mrb[0].mxu0
        %v3225 = vadd.f32 %v2979, %v3224
        %v3226 = vpop.f32.mrb[0].mxu0
        %v3227 = vadd.f32 %v2983, %v3226
        %3228 = vmatprep.mubr.bf16.mxu0 %v2935
        %3229 = vmatmul.mubr.bf16.gmra.mrb[0].mxu0 %v2934
        %v3230 = vpop.f32.mrb[0].mxu0
        %v3231 = vadd.f32 %v2979, %v3230
        %v3232 = vpop.f32.mrb[0].mxu0
        %v3233 = vadd.f32 %v2983, %v3232
        %v3234 = vpop.f32.mrb[0].mxu0
        %v3235 = vadd.f32 %v2979, %v3234
        %v3236 = vpop.f32.mrb[0].mxu0
        %v3237 = vadd.f32 %v2983, %v3236
        %3238 = vmatprep.mubr.bf16.mxu0 %v2937
        %3239 = vmatmul.mubr.bf16.gmra.mrb[0].mxu0 %v2936
        %v3240 = vpop.f32.mrb[0].mxu0
        %v3241 = vadd.f32 %v2979, %v3240
        %v3242 = vpop.f32.mrb[0].mxu0
        %v3243 = vadd.f32 %v2983, %v3242
        %v3244 = vpop.f32.mrb[0].mxu0
        %v3245 = vadd.f32 %v2979, %v3244
        %v3246 = vpop.f32.mrb[0].mxu0
        %v3247 = vadd.f32 %v2983, %v3246
        %3248 = vmatprep.mubr.bf16.mxu0 %v2939
        %3249 = vmatmul.mubr.bf16.gmra.mrb[0].mxu0 %v2938
        %v3250 = vpop.f32.mrb[0].mxu0
        %v3251 = vadd.f32 %v2979, %v3250
        %v3252 = vpop.f32.mrb[0].mxu0
        %v3253 = vadd.f32 %v2983, %v3252
        %v3254 = vpop.f32.mrb[0].mxu0
        %v3255 = vadd.f32 %v2979, %v3254
        %v3256 = vpop.f32.mrb[0].mxu0
        %v3257 = vadd.f32 %v2983, %v3256
        %3258 = vdwg.mxu0
        %v3259 = vmax.f32 %v3181, 0.0
        %v3260 = vmax.f32 %v3183, 0.0
        %v3261 = vmax.f32 %v3185, 0.0
        %v3262 = vmax.f32 %v3187, 0.0
        %v3263 = vmax.f32 %v3191, 0.0
        %v3264 = vmax.f32 %v3193, 0.0
        %v3265 = vmax.f32 %v3195, 0.0
        %v3266 = vmax.f32 %v3197, 0.0
        %v3267 = vmax.f32 %v3201, 0.0
        %v3268 = vmax.f32 %v3203, 0.0
        %v3269 = vmax.f32 %v3205, 0.0
        %v3270 = vmax.f32 %v3207, 0.0
        %v3271 = vmax.f32 %v3211, 0.0
        %v3272 = vmax.f32 %v3213, 0.0
        %v3273 = vmax.f32 %v3215, 0.0
        %v3274 = vmax.f32 %v3217, 0.0
        %v3275 = vmax.f32 %v3221, 0.0
        %v3276 = vmax.f32 %v3223, 0.0
        %v3277 = vmax.f32 %v3225, 0.0
        %v3278 = vmax.f32 %v3227, 0.0
        %v3279 = vmax.f32 %v3231, 0.0
        %v3280 = vmax.f32 %v3233, 0.0
        %v3281 = vmax.f32 %v3235, 0.0
        %v3282 = vmax.f32 %v3237, 0.0
        %v3283 = vmax.f32 %v3241, 0.0
        %v3284 = vmax.f32 %v3243, 0.0
        %v3285 = vmax.f32 %v3245, 0.0
        %v3286 = vmax.f32 %v3247, 0.0
        %v3287 = vmax.f32 %v3251, 0.0
        %v3288 = vmax.f32 %v3253, 0.0
        %v3289 = vmax.f32 %v3255, 0.0
        %v3290 = vmax.f32 %v3257, 0.0
        %v3291 = vpack.c.bf16 %v3261, %v3259
        %v3292 = vpack.c.bf16 %v3262, %v3260
        %v3293 = vpack.c.bf16 %v3265, %v3263
        %v3294 = vpack.c.bf16 %v3266, %v3264
        %v3295 = vpack.c.bf16 %v3269, %v3267
        %v3296 = vpack.c.bf16 %v3270, %v3268
        %v3297 = vpack.c.bf16 %v3273, %v3271
        %v3298 = vpack.c.bf16 %v3274, %v3272
        %v3299 = vpack.c.bf16 %v3277, %v3275
        %v3300 = vpack.c.bf16 %v3278, %v3276
        %v3301 = vpack.c.bf16 %v3281, %v3279
        %v3302 = vpack.c.bf16 %v3282, %v3280
        %v3303 = vpack.c.bf16 %v3285, %v3283
        %v3304 = vpack.c.bf16 %v3286, %v3284
        %v3305 = vpack.c.bf16 %v3289, %v3287
        %v3306 = vpack.c.bf16 %v3290, %v3288
        %v3307 = vld [vmem:[%s4] sm:$0xf]
        %v3308 = vld [vmem:[%s4 + $0x4] sm:$0xf]
        %v3309 = vld [vmem:[%s4 + $0x8] sm:$0xf]
        %v3310 = vld [vmem:[%s4 + $0xc] sm:$0xf]
        %v3311 = vld [vmem:[%s4 + $0x10] sm:$0xf]
        %v3312 = vld [vmem:[%s4 + $0x14] sm:$0xf]
        %v3313 = vld [vmem:[%s4 + $0x18] sm:$0xf]
        %v3314 = vld [vmem:[%s4 + $0x1c] sm:$0xf]
        %v3315 = vld [vmem:[%s4 + $0x20] sm:$0xf]
        %v3316 = vld [vmem:[%s4 + $0x24] sm:$0xf]
        %v3317 = vld [vmem:[%s4 + $0x28] sm:$0xf]
        %v3318 = vld [vmem:[%s4 + $0x2c] sm:$0xf]
        %v3319 = vld [vmem:[%s4 + $0x30] sm:$0xf]
        %v3320 = vld [vmem:[%s4 + $0x34] sm:$0xf]
        %v3321 = vld [vmem:[%s4 + $0x38] sm:$0xf]
        %v3322 = vld [vmem:[%s4 + $0x3c] sm:$0xf]
        %v3323 = vld [vmem:[%s4 + $0x40] sm:$0xf]
        %v3324 = vld [vmem:[%s4 + $0x44] sm:$0xf]
        %v3325 = vld [vmem:[%s4 + $0x48] sm:$0xf]
        %v3326 = vld [vmem:[%s4 + $0x4c] sm:$0xf]
        %v3327 = vld [vmem:[%s4 + $0x50] sm:$0xf]
        %v3328 = vld [vmem:[%s4 + $0x54] sm:$0xf]
        %v3329 = vld [vmem:[%s4 + $0x58] sm:$0xf]
        %v3330 = vld [vmem:[%s4 + $0x5c] sm:$0xf]
        %v3331 = vld [vmem:[%s4 + $0x60] sm:$0xf]
        %v3332 = vld [vmem:[%s4 + $0x64] sm:$0xf]
        %v3333 = vld [vmem:[%s4 + $0x68] sm:$0xf]
        %v3334 = vld [vmem:[%s4 + $0x6c] sm:$0xf]
        %v3335 = vld [vmem:[%s4 + $0x70] sm:$0xf]
        %v3336 = vld [vmem:[%s4 + $0x74] sm:$0xf]
        %v3337 = vld [vmem:[%s4 + $0x78] sm:$0xf]
        %v3338 = vld [vmem:[%s4 + $0x7c] sm:$0xf]
        %v3339 = vld [vmem:[%s5] sm:$0x1]
        %v3341 = vlaneseq
        %v3342 = vshrl.u32 %v3341, 7
        %v3343 = vsub.s32 0, %v3342
        %v3344 = vrot.slane %v3339, %v3343
        %v3378 = vunpack.c.l.b16 %v3307
        %v3379 = vunpack.c.l.b16 %v3308
        %v3380 = vunpack.c.l.b16 %v3309
        %v3381 = vunpack.c.l.b16 %v3310
        %v3382 = vunpack.c.l.b16 %v3311
        %v3383 = vunpack.c.l.b16 %v3312
        %v3384 = vunpack.c.l.b16 %v3313
        %v3385 = vunpack.c.l.b16 %v3314
        %v3386 = vunpack.c.l.b16 %v3315
        %v3387 = vunpack.c.l.b16 %v3316
        %v3388 = vunpack.c.l.b16 %v3317
        %v3389 = vunpack.c.l.b16 %v3318
        %v3390 = vunpack.c.l.b16 %v3319
        %v3391 = vunpack.c.l.b16 %v3320
        %v3392 = vunpack.c.l.b16 %v3321
        %v3393 = vunpack.c.l.b16 %v3322
        %v3394 = vunpack.c.l.b16 %v3323
        %v3395 = vunpack.c.l.b16 %v3324
        %v3396 = vunpack.c.l.b16 %v3325
        %v3397 = vunpack.c.l.b16 %v3326
        %v3398 = vunpack.c.l.b16 %v3327
        %v3399 = vunpack.c.l.b16 %v3328
        %v3400 = vunpack.c.l.b16 %v3329
        %v3401 = vunpack.c.l.b16 %v3330
        %v3402 = vunpack.c.l.b16 %v3331
        %v3403 = vunpack.c.l.b16 %v3332
        %v3404 = vunpack.c.l.b16 %v3333
        %v3405 = vunpack.c.l.b16 %v3334
        %v3406 = vunpack.c.l.b16 %v3335
        %v3407 = vunpack.c.l.b16 %v3336
        %v3408 = vunpack.c.l.b16 %v3337
        %v3409 = vunpack.c.l.b16 %v3338
        %v3410 = vpack.c.b16 %v3379, %v3378
        %v3411 = vpack.c.b16 %v3381, %v3380
        %v3412 = vpack.c.b16 %v3383, %v3382
        %v3413 = vpack.c.b16 %v3385, %v3384
        %v3414 = vpack.c.b16 %v3387, %v3386
        %v3415 = vpack.c.b16 %v3389, %v3388
        %v3416 = vpack.c.b16 %v3391, %v3390
        %v3417 = vpack.c.b16 %v3393, %v3392
        %v3418 = vpack.c.b16 %v3395, %v3394
        %v3419 = vpack.c.b16 %v3397, %v3396
        %v3420 = vpack.c.b16 %v3399, %v3398
        %v3421 = vpack.c.b16 %v3401, %v3400
        %v3422 = vpack.c.b16 %v3403, %v3402
        %v3423 = vpack.c.b16 %v3405, %v3404
        %v3424 = vpack.c.b16 %v3407, %v3406
        %v3425 = vpack.c.b16 %v3409, %v3408
        %3442 = vmatprep.subr.bf16.mxu0 0
        %3443 = vmatpush1.bf16.msra.mxu0 %v3410
        %3444 = vmatprep.subr.bf16.mxu0 0
        %3445 = vmatpush1.bf16.msra.mxu0 %v3411
        %3446 = vmatprep.subr.bf16.mxu0 0
        %3447 = vmatpush1.bf16.msra.mxu0 %v3412
        %3448 = vmatprep.subr.bf16.mxu0 0
        %3449 = vmatpush1.bf16.msra.mxu0 %v3413
        %3450 = vmatprep.subr.bf16.mxu0 0
        %3451 = vmatpush1.bf16.msra.mxu0 %v3414
        %3452 = vmatprep.subr.bf16.mxu0 0
        %3453 = vmatpush1.bf16.msra.mxu0 %v3415
        %3454 = vmatprep.subr.bf16.mxu0 0
        %3455 = vmatpush1.bf16.msra.mxu0 %v3416
        %3456 = vmatprep.subr.bf16.mxu0 0
        %3457 = vmatpush1.bf16.msra.mxu0 %v3417
        %3458 = vmatprep.subr.bf16.mxu0 0
        %3459 = vmatpush1.bf16.msra.mxu0 %v3418
        %3460 = vmatprep.subr.bf16.mxu0 0
        %3461 = vmatpush1.bf16.msra.mxu0 %v3419
        %3462 = vmatprep.subr.bf16.mxu0 0
        %3463 = vmatpush1.bf16.msra.mxu0 %v3420
        %3464 = vmatprep.subr.bf16.mxu0 0
        %3465 = vmatpush1.bf16.msra.mxu0 %v3421
        %3466 = vmatprep.subr.bf16.mxu0 0
        %3467 = vmatpush1.bf16.msra.mxu0 %v3422
        %3468 = vmatprep.subr.bf16.mxu0 0
        %3469 = vmatpush1.bf16.msra.mxu0 %v3423
        %3470 = vmatprep.subr.bf16.mxu0 0
        %3471 = vmatpush1.bf16.msra.mxu0 %v3424
        %3472 = vmatprep.subr.bf16.mxu0 0
        %3473 = vmatpush1.bf16.msra.mxu0 %v3425
        %3474 = vmatprep.mubr.bf16.mxu0 %v3292
        %3475 = vmatmul.mubr.bf16.gmra.mrb[0].mxu0 %v3291
        %v3476 = vpop.f32.mrb[0].mxu0
        %v3477 = vadd.f32 %v3344, %v3476
        %v3478 = vpop.f32.mrb[0].mxu0
        %v3479 = vpop.f32.mrb[0].mxu0
        %v3480 = vadd.f32 %v3344, %v3479
        %v3481 = vpop.f32.mrb[0].mxu0
        %3482 = vmatprep.mubr.bf16.mxu0 %v3294
        %3483 = vmatmul.mubr.bf16.gmra.mrb[0].mxu0 %v3293
        %v3484 = vpop.f32.mrb[0].mxu0
        %v3485 = vadd.f32 %v3344, %v3484
        %v3486 = vpop.f32.mrb[0].mxu0
        %v3487 = vpop.f32.mrb[0].mxu0
        %v3488 = vadd.f32 %v3344, %v3487
        %v3489 = vpop.f32.mrb[0].mxu0
        %3490 = vmatprep.mubr.bf16.mxu0 %v3296
        %3491 = vmatmul.mubr.bf16.gmra.mrb[0].mxu0 %v3295
        %v3492 = vpop.f32.mrb[0].mxu0
        %v3493 = vadd.f32 %v3344, %v3492
        %v3494 = vpop.f32.mrb[0].mxu0
        %v3495 = vpop.f32.mrb[0].mxu0
        %v3496 = vadd.f32 %v3344, %v3495
        %v3497 = vpop.f32.mrb[0].mxu0
        %3498 = vmatprep.mubr.bf16.mxu0 %v3298
        %3499 = vmatmul.mubr.bf16.gmra.mrb[0].mxu0 %v3297
        %v3500 = vpop.f32.mrb[0].mxu0
        %v3501 = vadd.f32 %v3344, %v3500
        %v3502 = vpop.f32.mrb[0].mxu0
        %v3503 = vpop.f32.mrb[0].mxu0
        %v3504 = vadd.f32 %v3344, %v3503
        %v3505 = vpop.f32.mrb[0].mxu0
        %3506 = vmatprep.mubr.bf16.mxu0 %v3300
        %3507 = vmatmul.mubr.bf16.gmra.mrb[0].mxu0 %v3299
        %v3508 = vpop.f32.mrb[0].mxu0
        %v3509 = vadd.f32 %v3344, %v3508
        %v3510 = vpop.f32.mrb[0].mxu0
        %v3511 = vpop.f32.mrb[0].mxu0
        %v3512 = vadd.f32 %v3344, %v3511
        %v3513 = vpop.f32.mrb[0].mxu0
        %3514 = vmatprep.mubr.bf16.mxu0 %v3302
        %3515 = vmatmul.mubr.bf16.gmra.mrb[0].mxu0 %v3301
        %v3516 = vpop.f32.mrb[0].mxu0
        %v3517 = vadd.f32 %v3344, %v3516
        %v3518 = vpop.f32.mrb[0].mxu0
        %v3519 = vpop.f32.mrb[0].mxu0
        %v3520 = vadd.f32 %v3344, %v3519
        %v3521 = vpop.f32.mrb[0].mxu0
        %3522 = vmatprep.mubr.bf16.mxu0 %v3304
        %3523 = vmatmul.mubr.bf16.gmra.mrb[0].mxu0 %v3303
        %v3524 = vpop.f32.mrb[0].mxu0
        %v3525 = vadd.f32 %v3344, %v3524
        %v3526 = vpop.f32.mrb[0].mxu0
        %v3527 = vpop.f32.mrb[0].mxu0
        %v3528 = vadd.f32 %v3344, %v3527
        %v3529 = vpop.f32.mrb[0].mxu0
        %3530 = vmatprep.mubr.bf16.mxu0 %v3306
        %3531 = vmatmul.mubr.bf16.gmra.mrb[0].mxu0 %v3305
        %v3532 = vpop.f32.mrb[0].mxu0
        %v3533 = vadd.f32 %v3344, %v3532
        %v3534 = vpop.f32.mrb[0].mxu0
        %v3535 = vpop.f32.mrb[0].mxu0
        %v3536 = vadd.f32 %v3344, %v3535
        %v3537 = vpop.f32.mrb[0].mxu0
        %3538 = vdwg.mxu0
        %3539 = vst [vmem:[%s260] sm:$0xff] %v3477
        %3540 = vst [vmem:[%s260 + $0x8] sm:$0xff] %v3480
        %3541 = vst [vmem:[%s260 + $0x10] sm:$0xff] %v3485
        %3542 = vst [vmem:[%s260 + $0x18] sm:$0xff] %v3488
        %3543 = vst [vmem:[%s260 + $0x20] sm:$0xff] %v3493
        %3544 = vst [vmem:[%s260 + $0x28] sm:$0xff] %v3496
        %3545 = vst [vmem:[%s260 + $0x30] sm:$0xff] %v3501
        %3546 = vst [vmem:[%s260 + $0x38] sm:$0xff] %v3504
        %3547 = vst [vmem:[%s260 + $0x40] sm:$0xff] %v3509
        %3548 = vst [vmem:[%s260 + $0x48] sm:$0xff] %v3512
        %3549 = vst [vmem:[%s260 + $0x50] sm:$0xff] %v3517
        %3550 = vst [vmem:[%s260 + $0x58] sm:$0xff] %v3520
        %3551 = vst [vmem:[%s260 + $0x60] sm:$0xff] %v3525
        %3552 = vst [vmem:[%s260 + $0x68] sm:$0xff] %v3528
        %3553 = vst [vmem:[%s260 + $0x70] sm:$0xff] %v3533
        %3554 = vst [vmem:[%s260 + $0x78] sm:$0xff] %v3536
        %s3555 = sand.u32 %s160, 1
        %s3556 = scalar_lea.sflag [#allocation4], %s3555
        %s3557 = sand.u32 %s160, 1
        %s3558 = smul.addr %s3557, 128
        %s3559 = scalar_lea.vmem [#allocation5], %s3558
        // Predicated region
        $region49: #{tpu_custom_call.1} parent=43 // pred_check
          %p3560 = pneg %p170
        $region50: #{tpu_custom_call.1} parent=43 // pred_check_branch
          %3562 = sbr.rel (%p3560) target = $region52
        $region51: #{tpu_custom_call.1} parent=43 // pred_region
          %s3563 = smul.u32 16, %s21
          %s3565 = ssub.s32 2048, 2048
          %3566 = vsyncadd %s3556, %s3565
          %s3567 = smul.addr %s3563, 128
          %s3568 = scalar_lea.hbm %s6, %s3567
          %s3569 = sshll.u32 %s3559, 4
          %s3570 = int_to_ptr.vmem [resolvable:$true] %s3569
          %3575 = dma.vmem_to_hbm [thread:$0]  %s3570, 2048, %s3568, %s3556, 128, 128, 8
        $region52: #{tpu_custom_call.1} parent=43 // pred_fallthru
          _
      $region44: #{tpu_custom_call.1} parent=5 // pred_fallthru
        _
      %p3576 = scmp.le.s32.totalorder 2, %s16
      // Predicated region
      $region53: #{tpu_custom_call.1} parent=5 // pred_check
        %p3577 = pneg %p3576
      $region54: #{tpu_custom_call.1} parent=5 // pred_check_branch
        %3579 = sbr.rel (%p3577) target = $region56
      $region55: #{tpu_custom_call.1} parent=5 // pred_region
        %s3580 = ssub.s32 %s16, 2
        // Predicated region
        $region57: #{tpu_custom_call.1} parent=55 // pred_check
          %p3581 = pneg %p176
        $region58: #{tpu_custom_call.1} parent=55 // pred_check_branch
          %3583 = sbr.rel (%p3581) target = $region60
        $region59: #{tpu_custom_call.1} parent=55 // pred_region
          %s3584 = sand.u32 %s161, 1
          %s3585 = scalar_lea.sflag [#allocation4], %s3584
          %s3586 = sand.u32 %s161, 1
          %s3587 = smul.addr %s3586, 128
          %s3588 = scalar_lea.vmem [#allocation5], %s3587
          %3589 = dma.done %s3585, 2048
        $region60: #{tpu_custom_call.1} parent=55 // pred_fallthru
          _
      $region56: #{tpu_custom_call.1} parent=5 // pred_fallthru
        _
    $region6: #{tpu_custom_call.1} parent=1 // loop_footer
      %s20 = sadd.s32 1, %s16
    $region7: #{tpu_custom_call.1} parent=1 // loop_footer_branch
      %15 = sbr.rel target = $region3
    $region8: #{tpu_custom_call.1} parent=1 // loop_exit
      _
    %3590 = vsyncpa [#allocation3], 1
    %s3591 = scalar_lea.sflag [#allocation3], 1
    %3592 = vsyncpa %s3591, 1
    %3593 = vsyncpa [#allocation4], 1
    %s3594 = scalar_lea.sflag [#allocation4], 1
    %3595 = vsyncpa %s3594, 1

</llo_original>
